<compile_context>
chip_gen: v7x
topology: tpu7x:2x2x1
jax: 0.10.0
libtpu: 0.0.40
codegen_flags: <defaults>
</compile_context>

<pallas_src>
import functools

import jax
import jax.numpy as jnp
import numpy as np
from jax import lax
from jax.experimental import pallas as pl
from jax.experimental.pallas import tpu as pltpu


# ------------------------------ helpers --------------------------------------


def _round_up(x, m):
  return ((x + m - 1) // m) * m


def _vmem_budget_bytes():
  """Per-generation VMEM budget (v7x has 64 MiB physical, v5e/v6e 128 MiB)."""
  try:
    phys = pltpu.get_tpu_info().vmem_capacity_bytes
  except Exception:
    phys = 64 * 1024 * 1024  # v7x-safe fallback
  return max(32 * 1024 * 1024, int(0.70 * phys))


# ----------------------------- Pallas kernel ---------------------------------


def _conv_kernel(x_ref, w_ref, scale_ref, shift_ref, o_ref, *,
                 K, stride, Ho, Wo, apply_relu):
  # x_ref:     (Hp, Wp, Cin_pad)       bf16 spatially padded image (batch squeezed)
  # w_ref:     (K, K, Cin_pad, tn)     bf16 weight tile
  # scale_ref: (1, tn)                 f32 folded BN scale
  # shift_ref: (1, tn)                 f32 folded BN shift (conv bias folded in)
  # o_ref:     (Ho*Wo, tn)             output tile (batch squeezed)
  M = Ho * Wo
  cin = x_ref.shape[-1]

  acc = None
  for kh in range(K):
    for kw in range(K):
      if stride == 1:
        slab = x_ref[kh:kh + Ho, kw:kw + Wo, :]
      else:
        # TODO(synk): strided window path is only lightly exercised
        # (the provided test uses stride == 1).
        slab = x_ref[pl.ds(kh, Ho, stride=stride),
                     pl.ds(kw, Wo, stride=stride), :]
      a = slab.reshape(M, cin)                       # (Ho*Wo, Cin_pad) bf16
      part = jnp.dot(a, w_ref[kh, kw],               # (Cin_pad, tn)    bf16
                     preferred_element_type=jnp.float32)
      acc = part if acc is None else acc + part      # f32, stays in regs/VMEM

  out = acc * scale_ref[...] + shift_ref[...]
  if apply_relu:
    out = jnp.maximum(out, 0.0)
  o_ref[...] = out.astype(o_ref.dtype)


def _conv2d_pallas(xp, w4, scale, shift, *, K, stride, Ho, Wo, apply_relu,
                   out_dtype):
  """xp: (N, Hp, Wp, Cin_pad) bf16; w4: (K, K, Cin_pad, Cout_pad) bf16.

  Returns (N, Ho*Wo, Cout_pad) in out_dtype (caller slices the valid Cout).
  """
  N, Hp, Wp, cin_pad = xp.shape
  cout_pad = w4.shape[-1]
  M = Ho * Wo

  budget = _vmem_budget_bytes()

  # Largest 128-multiple Cout tile that divides Cout_pad, capped at 512,
  # shrunk until the (double-buffered) VMEM estimate fits the budget.
  tn = min(cout_pad, 512)
  while cout_pad % tn:
    tn -= 128

  def _est(t):
    in_b = 2 * Hp * Wp * cin_pad * 2          # image (double-buffered, bf16)
    w_b = 2 * K * K * cin_pad * t * 2         # weight tile
    out_b = 2 * M * t * jnp.dtype(out_dtype).itemsize
    scratch = M * t * 4 + M * cin_pad * 2     # f32 accumulator + slab staging
    return int(1.25 * (in_b + w_b + out_b + scratch))

  while tn > 128 and _est(tn) > budget:
    t = tn - 128
    while cout_pad % t:
      t -= 128
    tn = t
  # TODO(synk): if _est(128) still exceeds the budget (huge Hp*Wp*Cin), add
  #             output-row halo tiling instead of whole-image blocks.

  kernel = functools.partial(_conv_kernel, K=K, stride=stride, Ho=Ho, Wo=Wo,
                             apply_relu=apply_relu)

  return pl.pallas_call(
      kernel,
      out_shape=jax.ShapeDtypeStruct((N, M, cout_pad), out_dtype),
      grid_spec=pltpu.PrefetchScalarGridSpec(
          num_scalar_prefetch=0,
          grid=(N, cout_pad // tn),
          in_specs=[
              # Whole padded image for batch n (block index constant over j,
              # so it is DMA'd once per batch element).
              pl.BlockSpec((None, Hp, Wp, cin_pad), lambda n, j: (n, 0, 0, 0)),
              pl.BlockSpec((K, K, cin_pad, tn), lambda n, j: (0, 0, 0, j)),
              pl.BlockSpec((1, tn), lambda n, j: (0, j)),   # bn scale
              pl.BlockSpec((1, tn), lambda n, j: (0, j)),   # bn shift
          ],
          out_specs=pl.BlockSpec((None, M, tn), lambda n, j: (n, 0, j)),
      ),
      compiler_params=pltpu.CompilerParams(
          dimension_semantics=("parallel", "parallel"),
          vmem_limit_bytes=min(budget, 100 * 1024 * 1024),
      ),
  )(xp, w4, scale, shift)


# ------------------------------- module --------------------------------------


class BaseConvPallas:
  """Mirrors BaseConv.__init__ / forward from models_nonlocal_wofuse.py."""

  def __init__(self, in_channels, out_channels, kernel, stride=1,
               activation=None, use_bn=False, key=None,
               out_dtype=jnp.float32):
    self.in_channels = in_channels
    self.out_channels = out_channels
    self.kernel = kernel
    self.stride = stride
    self.pad = kernel // 2
    self.activation = activation          # None or "relu"
    self.use_bn = use_bn
    # NOTE: set out_dtype=jnp.bfloat16 to halve output writeback if the
    # downstream layer tolerates it; default f32 matches PyTorch semantics.
    self.out_dtype = out_dtype

    key = jax.random.PRNGKey(0) if key is None else key
    # conv.weight.data.normal_(0, 0.01); conv.bias.data.zero_()
    self.w = 0.01 * jax.random.normal(
        key, (out_channels, in_channels, kernel, kernel), dtype=jnp.float32)
    self.b = jnp.zeros((out_channels,), dtype=jnp.float32)
    # bn.weight = 1, bn.bias = 0, running_mean = 0, running_var = 1
    self.bn_gamma = jnp.ones((out_channels,), dtype=jnp.float32)
    self.bn_beta = jnp.zeros((out_channels,), dtype=jnp.float32)
    self.bn_mean = jnp.zeros((out_channels,), dtype=jnp.float32)
    self.bn_var = jnp.ones((out_channels,), dtype=jnp.float32)
    self.bn_eps = 1e-5

    # ---- one-time folding / padding for the kernel (done at init) ----------
    #   conv:  y = W x + b
    #   BN:    (y - mean) * gamma/sqrt(var+eps) + beta
    #        = (W x) * scale + [(b - mean) * scale + beta]
    if use_bn:
      inv_std = 1.0 / jnp.sqrt(self.bn_var + self.bn_eps)
      scale = self.bn_gamma * inv_std
      shift = (self.b - self.bn_mean) * scale + self.bn_beta
    else:
      scale = jnp.ones((out_channels,), jnp.float32)
      shift = self.b

    # Channel padding: lane-dense MXU tiles / unmasked output stores.  For
    # Cin >= 128 only pad to the bf16 sublane quantum so activation traffic
    # stays ~1x.
    self.cin_pad = (_round_up(in_channels, 128) if in_channels < 128
                    else _round_up(in_channels, 16))
    self.cout_pad = _round_up(out_channels, 128)

    # PyTorch weight (Cout, Cin, Kh, Kw) -> (Kh, Kw, Cin, Cout), pad, bf16.
    w4 = jnp.transpose(self.w, (2, 3, 1, 0))
    self.w_kernel = jnp.pad(
        w4, ((0, 0), (0, 0),
             (0, self.cin_pad - in_channels),
             (0, self.cout_pad - out_channels))).astype(jnp.bfloat16)
    self.scale_pad = jnp.pad(
        scale, (0, self.cout_pad - out_channels)).reshape(
            1, self.cout_pad).astype(jnp.float32)
    self.shift_pad = jnp.pad(
        shift, (0, self.cout_pad - out_channels)).reshape(
            1, self.cout_pad).astype(jnp.float32)

  def __call__(self, x_nchw):
    N, Cin, H, W = x_nchw.shape
    Ho = (H + 2 * self.pad - self.kernel) // self.stride + 1
    Wo = (W + 2 * self.pad - self.kernel) // self.stride + 1

    # NCHW -> NHWC in bf16, then ONE combined pad (spatial halo + channel lanes)
    # so every activation intermediate feeding the kernel is half-width.
    x_nhwc = jnp.transpose(x_nchw, (0, 2, 3, 1)).astype(jnp.bfloat16)
    xp = jnp.pad(x_nhwc, ((0, 0),
                          (self.pad, self.pad),
                          (self.pad, self.pad),
                          (0, self.cin_pad - Cin)))

    out = _conv2d_pallas(xp, self.w_kernel, self.scale_pad, self.shift_pad,
                         K=self.kernel, stride=self.stride, Ho=Ho, Wo=Wo,
                         apply_relu=(self.activation == "relu"),
                         out_dtype=self.out_dtype)
    out = out[:, :, :self.out_channels].reshape(N, Ho, Wo, self.out_channels)
    return jnp.transpose(out, (0, 3, 1, 2)).astype(jnp.float32)   # NCHW


# --------------------------- reference (plain JAX) ----------------------------


def _reference(module, x_nchw):
  out = lax.conv_general_dilated(
      x_nchw.astype(jnp.float32), module.w,
      window_strides=(module.stride, module.stride),
      padding=[(module.pad, module.pad), (module.pad, module.pad)],
      dimension_numbers=("NCHW", "OIHW", "NCHW"))
  out = out + module.b[None, :, None, None]
  if module.use_bn:
    inv_std = 1.0 / jnp.sqrt(module.bn_var + module.bn_eps)
    out = (out - module.bn_mean[None, :, None, None]) * \
        (module.bn_gamma * inv_std)[None, :, None, None] + \
        module.bn_beta[None, :, None, None]
  if module.activation == "relu":
    out = jnp.maximum(out, 0.0)
  return out


# --------------------------------- main ---------------------------------------

if __name__ == "__main__":
  key = jax.random.PRNGKey(0)
  kx, kw = jax.random.split(key)

  N, Cin, H, W = 2, 4, 16, 16
  Cout, K, stride = 8, 3, 1

  x = jax.random.normal(kx, (N, Cin, H, W), dtype=jnp.float32)

  module = BaseConvPallas(Cin, Cout, K, stride=stride,
                          activation="relu", use_bn=True, key=kw)

  out = module(x)
  out = jax.block_until_ready(out)

  ref = jax.block_until_ready(_reference(module, x))
  # bf16 MXU operands / activations (f32 accumulation) -> relaxed tolerance.
  np.testing.assert_allclose(np.asarray(out), np.asarray(ref),
                             rtol=5e-2, atol=1e-2)
  print("KERNEL_OK")
</pallas_src>

<mosaic_0001>
module attributes {stable_mosaic.version = 11 : i64} {
  func.func @_conv_kernel(%arg0: i32, %arg1: i32, %arg2: memref<1x18x18x128xbf16, #tpu.memory_space<vmem>>, %arg3: memref<3x3x128x128xbf16, #tpu.memory_space<vmem>>, %arg4: memref<1x128xf32, #tpu.memory_space<vmem>>, %arg5: memref<1x128xf32, #tpu.memory_space<vmem>>, %arg6: memref<1x256x128xf32, #tpu.memory_space<vmem>>) attributes {dimension_semantics = [#tpu.dimension_semantics<parallel>, #tpu.dimension_semantics<parallel>], iteration_bounds = array<i64: 2, 1>, scalar_prefetch = 0 : i64, scratch_operands = 0 : i64, tpu.core_type = #tpu.core_type<tc>, window_params = [{transform_indices = @transform_0, window_bounds = array<i64: 1, 18, 18, 128>}, {transform_indices = @transform_1, window_bounds = array<i64: 3, 3, 128, 128>}, {transform_indices = @transform_2, window_bounds = array<i64: 1, 128>}, {transform_indices = @transform_3, window_bounds = array<i64: 1, 128>}, {transform_indices = @transform_4, window_bounds = array<i64: 1, 256, 128>}]} {
    %c0 = arith.constant 0 : index
    %c0_0 = arith.constant 0 : index
    %c0_1 = arith.constant 0 : index
    %c0_2 = arith.constant 0 : index
    %0 = vector.load %arg2[%c0, %c0_0, %c0_1, %c0_2] : memref<1x18x18x128xbf16, #tpu.memory_space<vmem>>, vector<1x16x16x128xbf16>
    %1 = vector.shape_cast %0 : vector<1x16x16x128xbf16> to vector<16x16x128xbf16>
    %2 = vector.shape_cast %1 : vector<16x16x128xbf16> to vector<256x128xbf16>
    %c0_3 = arith.constant 0 : index
    %c0_4 = arith.constant 0 : index
    %c0_5 = arith.constant 0 : index
    %c0_6 = arith.constant 0 : index
    %3 = vector.load %arg3[%c0_3, %c0_4, %c0_5, %c0_6] : memref<3x3x128x128xbf16, #tpu.memory_space<vmem>>, vector<1x1x128x128xbf16>
    %4 = vector.shape_cast %3 : vector<1x1x128x128xbf16> to vector<128x128xbf16>
    %cst = arith.constant dense<0.000000e+00> : vector<256x128xf32>
    %5 = tpu.matmul %2, %4, %cst {dimension_numbers = #tpu.dot_dimension_numbers<[1], [0], [0], [1], [0, 0, 1, 1], [], []>} : vector<256x128xbf16>, vector<128x128xbf16>, vector<256x128xf32> -> vector<256x128xf32>
    %c0_7 = arith.constant 0 : index
    %c0_8 = arith.constant 0 : index
    %c1 = arith.constant 1 : index
    %c0_9 = arith.constant 0 : index
    %6 = vector.load %arg2[%c0_7, %c0_8, %c1, %c0_9] : memref<1x18x18x128xbf16, #tpu.memory_space<vmem>>, vector<1x16x16x128xbf16>
    %7 = vector.shape_cast %6 : vector<1x16x16x128xbf16> to vector<16x16x128xbf16>
    %8 = vector.shape_cast %7 : vector<16x16x128xbf16> to vector<256x128xbf16>
    %c0_10 = arith.constant 0 : index
    %c1_11 = arith.constant 1 : index
    %c0_12 = arith.constant 0 : index
    %c0_13 = arith.constant 0 : index
    %9 = vector.load %arg3[%c0_10, %c1_11, %c0_12, %c0_13] : memref<3x3x128x128xbf16, #tpu.memory_space<vmem>>, vector<1x1x128x128xbf16>
    %10 = vector.shape_cast %9 : vector<1x1x128x128xbf16> to vector<128x128xbf16>
    %cst_14 = arith.constant dense<0.000000e+00> : vector<256x128xf32>
    %11 = tpu.matmul %8, %10, %cst_14 {dimension_numbers = #tpu.dot_dimension_numbers<[1], [0], [0], [1], [0, 0, 1, 1], [], []>} : vector<256x128xbf16>, vector<128x128xbf16>, vector<256x128xf32> -> vector<256x128xf32>
    %12 = arith.addf %5, %11 : vector<256x128xf32>
    %c0_15 = arith.constant 0 : index
    %c0_16 = arith.constant 0 : index
    %c2 = arith.constant 2 : index
    %c0_17 = arith.constant 0 : index
    %13 = vector.load %arg2[%c0_15, %c0_16, %c2, %c0_17] : memref<1x18x18x128xbf16, #tpu.memory_space<vmem>>, vector<1x16x16x128xbf16>
    %14 = vector.shape_cast %13 : vector<1x16x16x128xbf16> to vector<16x16x128xbf16>
    %15 = vector.shape_cast %14 : vector<16x16x128xbf16> to vector<256x128xbf16>
    %c0_18 = arith.constant 0 : index
    %c2_19 = arith.constant 2 : index
    %c0_20 = arith.constant 0 : index
    %c0_21 = arith.constant 0 : index
    %16 = vector.load %arg3[%c0_18, %c2_19, %c0_20, %c0_21] : memref<3x3x128x128xbf16, #tpu.memory_space<vmem>>, vector<1x1x128x128xbf16>
    %17 = vector.shape_cast %16 : vector<1x1x128x128xbf16> to vector<128x128xbf16>
    %cst_22 = arith.constant dense<0.000000e+00> : vector<256x128xf32>
    %18 = tpu.matmul %15, %17, %cst_22 {dimension_numbers = #tpu.dot_dimension_numbers<[1], [0], [0], [1], [0, 0, 1, 1], [], []>} : vector<256x128xbf16>, vector<128x128xbf16>, vector<256x128xf32> -> vector<256x128xf32>
    %19 = arith.addf %12, %18 : vector<256x128xf32>
    %c0_23 = arith.constant 0 : index
    %c1_24 = arith.constant 1 : index
    %c0_25 = arith.constant 0 : index
    %c0_26 = arith.constant 0 : index
    %20 = vector.load %arg2[%c0_23, %c1_24, %c0_25, %c0_26] : memref<1x18x18x128xbf16, #tpu.memory_space<vmem>>, vector<1x16x16x128xbf16>
    %21 = vector.shape_cast %20 : vector<1x16x16x128xbf16> to vector<16x16x128xbf16>
    %22 = vector.shape_cast %21 : vector<16x16x128xbf16> to vector<256x128xbf16>
    %c1_27 = arith.constant 1 : index
    %c0_28 = arith.constant 0 : index
    %c0_29 = arith.constant 0 : index
    %c0_30 = arith.constant 0 : index
    %23 = vector.load %arg3[%c1_27, %c0_28, %c0_29, %c0_30] : memref<3x3x128x128xbf16, #tpu.memory_space<vmem>>, vector<1x1x128x128xbf16>
    %24 = vector.shape_cast %23 : vector<1x1x128x128xbf16> to vector<128x128xbf16>
    %cst_31 = arith.constant dense<0.000000e+00> : vector<256x128xf32>
    %25 = tpu.matmul %22, %24, %cst_31 {dimension_numbers = #tpu.dot_dimension_numbers<[1], [0], [0], [1], [0, 0, 1, 1], [], []>} : vector<256x128xbf16>, vector<128x128xbf16>, vector<256x128xf32> -> vector<256x128xf32>
    %26 = arith.addf %19, %25 : vector<256x128xf32>
    %c0_32 = arith.constant 0 : index
    %c1_33 = arith.constant 1 : index
    %c1_34 = arith.constant 1 : index
    %c0_35 = arith.constant 0 : index
    %27 = vector.load %arg2[%c0_32, %c1_33, %c1_34, %c0_35] : memref<1x18x18x128xbf16, #tpu.memory_space<vmem>>, vector<1x16x16x128xbf16>
    %28 = vector.shape_cast %27 : vector<1x16x16x128xbf16> to vector<16x16x128xbf16>
    %29 = vector.shape_cast %28 : vector<16x16x128xbf16> to vector<256x128xbf16>
    %c1_36 = arith.constant 1 : index
    %c1_37 = arith.constant 1 : index
    %c0_38 = arith.constant 0 : index
    %c0_39 = arith.constant 0 : index
    %30 = vector.load %arg3[%c1_36, %c1_37, %c0_38, %c0_39] : memref<3x3x128x128xbf16, #tpu.memory_space<vmem>>, vector<1x1x128x128xbf16>
    %31 = vector.shape_cast %30 : vector<1x1x128x128xbf16> to vector<128x128xbf16>
    %cst_40 = arith.constant dense<0.000000e+00> : vector<256x128xf32>
    %32 = tpu.matmul %29, %31, %cst_40 {dimension_numbers = #tpu.dot_dimension_numbers<[1], [0], [0], [1], [0, 0, 1, 1], [], []>} : vector<256x128xbf16>, vector<128x128xbf16>, vector<256x128xf32> -> vector<256x128xf32>
    %33 = arith.addf %26, %32 : vector<256x128xf32>
    %c0_41 = arith.constant 0 : index
    %c1_42 = arith.constant 1 : index
    %c2_43 = arith.constant 2 : index
    %c0_44 = arith.constant 0 : index
    %34 = vector.load %arg2[%c0_41, %c1_42, %c2_43, %c0_44] : memref<1x18x18x128xbf16, #tpu.memory_space<vmem>>, vector<1x16x16x128xbf16>
    %35 = vector.shape_cast %34 : vector<1x16x16x128xbf16> to vector<16x16x128xbf16>
    %36 = vector.shape_cast %35 : vector<16x16x128xbf16> to vector<256x128xbf16>
    %c1_45 = arith.constant 1 : index
    %c2_46 = arith.constant 2 : index
    %c0_47 = arith.constant 0 : index
    %c0_48 = arith.constant 0 : index
    %37 = vector.load %arg3[%c1_45, %c2_46, %c0_47, %c0_48] : memref<3x3x128x128xbf16, #tpu.memory_space<vmem>>, vector<1x1x128x128xbf16>
    %38 = vector.shape_cast %37 : vector<1x1x128x128xbf16> to vector<128x128xbf16>
    %cst_49 = arith.constant dense<0.000000e+00> : vector<256x128xf32>
    %39 = tpu.matmul %36, %38, %cst_49 {dimension_numbers = #tpu.dot_dimension_numbers<[1], [0], [0], [1], [0, 0, 1, 1], [], []>} : vector<256x128xbf16>, vector<128x128xbf16>, vector<256x128xf32> -> vector<256x128xf32>
    %40 = arith.addf %33, %39 : vector<256x128xf32>
    %c0_50 = arith.constant 0 : index
    %c2_51 = arith.constant 2 : index
    %c0_52 = arith.constant 0 : index
    %c0_53 = arith.constant 0 : index
    %41 = vector.load %arg2[%c0_50, %c2_51, %c0_52, %c0_53] : memref<1x18x18x128xbf16, #tpu.memory_space<vmem>>, vector<1x16x16x128xbf16>
    %42 = vector.shape_cast %41 : vector<1x16x16x128xbf16> to vector<16x16x128xbf16>
    %43 = vector.shape_cast %42 : vector<16x16x128xbf16> to vector<256x128xbf16>
    %c2_54 = arith.constant 2 : index
    %c0_55 = arith.constant 0 : index
    %c0_56 = arith.constant 0 : index
    %c0_57 = arith.constant 0 : index
    %44 = vector.load %arg3[%c2_54, %c0_55, %c0_56, %c0_57] : memref<3x3x128x128xbf16, #tpu.memory_space<vmem>>, vector<1x1x128x128xbf16>
    %45 = vector.shape_cast %44 : vector<1x1x128x128xbf16> to vector<128x128xbf16>
    %cst_58 = arith.constant dense<0.000000e+00> : vector<256x128xf32>
    %46 = tpu.matmul %43, %45, %cst_58 {dimension_numbers = #tpu.dot_dimension_numbers<[1], [0], [0], [1], [0, 0, 1, 1], [], []>} : vector<256x128xbf16>, vector<128x128xbf16>, vector<256x128xf32> -> vector<256x128xf32>
    %47 = arith.addf %40, %46 : vector<256x128xf32>
    %c0_59 = arith.constant 0 : index
    %c2_60 = arith.constant 2 : index
    %c1_61 = arith.constant 1 : index
    %c0_62 = arith.constant 0 : index
    %48 = vector.load %arg2[%c0_59, %c2_60, %c1_61, %c0_62] : memref<1x18x18x128xbf16, #tpu.memory_space<vmem>>, vector<1x16x16x128xbf16>
    %49 = vector.shape_cast %48 : vector<1x16x16x128xbf16> to vector<16x16x128xbf16>
    %50 = vector.shape_cast %49 : vector<16x16x128xbf16> to vector<256x128xbf16>
    %c2_63 = arith.constant 2 : index
    %c1_64 = arith.constant 1 : index
    %c0_65 = arith.constant 0 : index
    %c0_66 = arith.constant 0 : index
    %51 = vector.load %arg3[%c2_63, %c1_64, %c0_65, %c0_66] : memref<3x3x128x128xbf16, #tpu.memory_space<vmem>>, vector<1x1x128x128xbf16>
    %52 = vector.shape_cast %51 : vector<1x1x128x128xbf16> to vector<128x128xbf16>
    %cst_67 = arith.constant dense<0.000000e+00> : vector<256x128xf32>
    %53 = tpu.matmul %50, %52, %cst_67 {dimension_numbers = #tpu.dot_dimension_numbers<[1], [0], [0], [1], [0, 0, 1, 1], [], []>} : vector<256x128xbf16>, vector<128x128xbf16>, vector<256x128xf32> -> vector<256x128xf32>
    %54 = arith.addf %47, %53 : vector<256x128xf32>
    %c0_68 = arith.constant 0 : index
    %c2_69 = arith.constant 2 : index
    %c2_70 = arith.constant 2 : index
    %c0_71 = arith.constant 0 : index
    %55 = vector.load %arg2[%c0_68, %c2_69, %c2_70, %c0_71] : memref<1x18x18x128xbf16, #tpu.memory_space<vmem>>, vector<1x16x16x128xbf16>
    %56 = vector.shape_cast %55 : vector<1x16x16x128xbf16> to vector<16x16x128xbf16>
    %57 = vector.shape_cast %56 : vector<16x16x128xbf16> to vector<256x128xbf16>
    %c2_72 = arith.constant 2 : index
    %c2_73 = arith.constant 2 : index
    %c0_74 = arith.constant 0 : index
    %c0_75 = arith.constant 0 : index
    %58 = vector.load %arg3[%c2_72, %c2_73, %c0_74, %c0_75] : memref<3x3x128x128xbf16, #tpu.memory_space<vmem>>, vector<1x1x128x128xbf16>
    %59 = vector.shape_cast %58 : vector<1x1x128x128xbf16> to vector<128x128xbf16>
    %cst_76 = arith.constant dense<0.000000e+00> : vector<256x128xf32>
    %60 = tpu.matmul %57, %59, %cst_76 {dimension_numbers = #tpu.dot_dimension_numbers<[1], [0], [0], [1], [0, 0, 1, 1], [], []>} : vector<256x128xbf16>, vector<128x128xbf16>, vector<256x128xf32> -> vector<256x128xf32>
    %61 = arith.addf %54, %60 : vector<256x128xf32>
    %c0_77 = arith.constant 0 : index
    %c0_78 = arith.constant 0 : index
    %62 = vector.load %arg4[%c0_77, %c0_78] : memref<1x128xf32, #tpu.memory_space<vmem>>, vector<1x128xf32>
    %63 = vector.broadcast %62 : vector<1x128xf32> to vector<256x128xf32>
    %64 = arith.mulf %61, %63 : vector<256x128xf32>
    %c0_79 = arith.constant 0 : index
    %c0_80 = arith.constant 0 : index
    %65 = vector.load %arg5[%c0_79, %c0_80] : memref<1x128xf32, #tpu.memory_space<vmem>>, vector<1x128xf32>
    %66 = vector.broadcast %65 : vector<1x128xf32> to vector<256x128xf32>
    %67 = arith.addf %64, %66 : vector<256x128xf32>
    %cst_81 = arith.constant 0.000000e+00 : f32
    %68 = vector.broadcast %cst_81 : f32 to vector<256x128xf32>
    %69 = arith.maximumf %67, %68 : vector<256x128xf32>
    %c0_82 = arith.constant 0 : index
    %c0_83 = arith.constant 0 : index
    %c0_84 = arith.constant 0 : index
    %70 = vector.load %arg6[%c0_82, %c0_83, %c0_84] : memref<1x256x128xf32, #tpu.memory_space<vmem>>, vector<1x256x128xf32>
    %71 = vector.shape_cast %70 : vector<1x256x128xf32> to vector<256x128xf32>
    %72 = vector.shape_cast %69 : vector<256x128xf32> to vector<1x256x128xf32>
    tpu.vector_store %arg6[%c0_82, %c0_83, %c0_84], %72 {strides = array<i32>} : memref<1x256x128xf32, #tpu.memory_space<vmem>>, vector<1x256x128xf32>,
    return
  }
  func.func @transform_0(%arg0: i32, %arg1: i32) -> (i32, i32, i32, i32) {
    %c0_i32 = arith.constant 0 : i32
    %c0_i32_0 = arith.constant 0 : i32
    %c0_i32_1 = arith.constant 0 : i32
    %c0_i32_2 = arith.constant 0 : i32
    return %arg0, %c0_i32, %c0_i32_0, %c0_i32_1 : i32, i32, i32, i32
  }
  func.func @transform_1(%arg0: i32, %arg1: i32) -> (i32, i32, i32, i32) {
    %c0_i32 = arith.constant 0 : i32
    %c0_i32_0 = arith.constant 0 : i32
    %c0_i32_1 = arith.constant 0 : i32
    %c0_i32_2 = arith.constant 0 : i32
    return %c0_i32, %c0_i32_0, %c0_i32_1, %arg1 : i32, i32, i32, i32
  }
  func.func @transform_2(%arg0: i32, %arg1: i32) -> (i32, i32) {
    %c0_i32 = arith.constant 0 : i32
    %c0_i32_0 = arith.constant 0 : i32
    return %c0_i32, %arg1 : i32, i32
  }
  func.func @transform_3(%arg0: i32, %arg1: i32) -> (i32, i32) {
    %c0_i32 = arith.constant 0 : i32
    %c0_i32_0 = arith.constant 0 : i32
    return %c0_i32, %arg1 : i32, i32
  }
  func.func @transform_4(%arg0: i32, %arg1: i32) -> (i32, i32, i32) {
    %c0_i32 = arith.constant 0 : i32
    %c0_i32_0 = arith.constant 0 : i32
    return %arg0, %c0_i32, %arg1 : i32, i32, i32
  }
}

</mosaic_0001>

<llo_original>
// kernel: tpu_custom_call.1
$region0: #{tpu_custom_call.1}
  #allocation0 [shape = 'u32[]', space=smem, size = 0x4, offset = 0x4, fixed_abs, tag = 'smem constant byte address 0x4 - core index']
  #allocation1 [shape = 'u32[144,128]{1,0:T(1,128)}', space=vmem, size = 0x12000, scoped, tag = 'internal scratch']
  %s0 = inlined_call_operand.vmem [shape: bf16[2,18,18,128], index: 0, kind: input, shape index: {}]
  %s1 = inlined_call_operand.vmem [shape: bf16[3,3,128,128], index: 1, kind: input, shape index: {}]
  %s2 = inlined_call_operand.vmem [shape: f32[1,128], index: 2, kind: input, shape index: {}]
  %s3 = inlined_call_operand.vmem [shape: f32[1,128], index: 3, kind: input, shape index: {}]
  %s4 = inlined_call_operand.hbm [shape: f32[2,256,128], index: 4, kind: output, shape index: {}]
  %s5 = sld [smem:[#allocation0]]
  $region49: #{tpu_custom_call.1} parent=0
    _
  %s7 = ssub.s32 1, %s5
  %s8 = scalar_select 0, %s7, %s5
  $region1: #{tpu_custom_call.1} parent=0
    #allocation2 [shape = 'u8[262144]{0}', space=vmem, size = 0x40000, scoped, tag = 'output window, operand 0']
    #allocation3 [shape = 's32[2]{0}', space=sflag, size = 0x8, scoped, tag = 'scoped memory for tpu_custom_call.1']
    %9 = vsyncpa [#allocation3], 0
    %s10 = scalar_lea.sflag [#allocation3], 1
    %11 = vsyncpa %s10, 0
    loop: start=0, step=1, limit=4
    $region2: #{tpu_custom_call.1} parent=1 // loop_pre_header
      _
    $region3: #{tpu_custom_call.1} parent=1 // loop_header
      %s13 = sphi 0, %s17
      %p14 = scmp.ge.s32.totalorder %s13, 4
      %s20 = sphi 0, %s32
      %s21 = sphi 0, %s28
      %s22 = sphi 0, %s20
      %s23 = sphi 0, %s21
      %s24 = sphi 0, %s22
      %s25 = sphi 0, %s23
      %s35 = sphi 0, %s37
      %s38 = sphi 0, %s35
      %s39 = sphi 0, %s38
      %s55 = sphi 0, %s39
      %s61 = sphi 0, %s63
      %s64 = sphi 0, %s61
      %s65 = sphi 0, %s64
      %s81 = sphi 0, %s65
      %s87 = sphi 0, %s89
      %s90 = sphi 0, %s87
      %s91 = sphi 0, %s90
      %s107 = sphi 0, %s91
      %s113 = sphi 0, %s115
      %s116 = sphi 0, %s113
      %s117 = sphi 0, %s116
      %s133 = sphi 0, %s117
      %s141 = sphi 0, %s143
      %s144 = sphi 0, %s141
      %s145 = sphi 0, %s144
      %s161 = sphi 0, %s145
    $region4: #{tpu_custom_call.1} parent=1 // loop_header_branch
      %16 = sbr.rel (%p14) target = $region8
    $region5: #{tpu_custom_call.1} parent=1 // loop_body
      %s18 = ssub.s32 %s13, 1
      %s19 = ssub.s32 %s13, 2
      %s26 = sadd.s32 1, %s21
      %p27 = scmp.ge.s32.totalorder %s26, 1
      %s28 = scalar_select %p27, 0, %s26
      %s29 = sadd.s32 1, %s20
      %s30 = scalar_select %p27, %s29, %s20
      %p31 = scmp.ge.s32.totalorder %s30, 2
      %s32 = scalar_select %p31, 0, %s30
      %s33 = ssub.s32 %s20, %s32
      %p34 = scmp.eq.s32.totalorder %s33, 0
      %s36 = sadd.s32 %s35, 1
      %s37 = scalar_select %p34, %s35, %s36
      %p40 = pneg %p34
      %p41 = scmp.eq.s32.totalorder %s13, 1
      %p42 = por %p40, %p41
      %p43 = scmp.ne.s32.totalorder %s35, %s38
      %p44 = scmp.eq.s32.totalorder %s13, 0
      %p45 = por %p43, %p44
      %p46 = scmp.ne.s32.totalorder %s35, %s38
      %p47 = scmp.eq.s32.totalorder %s18, 1
      %p48 = por %p46, %p47
      %p49 = scmp.ne.s32.totalorder %s38, %s39
      %p50 = scmp.eq.s32.totalorder %s18, 0
      %p51 = por %p49, %p50
      %p52 = scmp.ne.s32.totalorder %s38, %s39
      %p53 = scmp.eq.s32.totalorder %s19, 1
      %p54 = por %p52, %p53
      %p56 = scmp.ne.s32.totalorder %s39, %s55
      %p57 = scmp.eq.s32.totalorder %s19, 0
      %p58 = por %p56, %p57
      %s59 = ssub.s32 %s21, %s28
      %p60 = scmp.eq.s32.totalorder %s59, 0
      %s62 = sadd.s32 %s61, 1
      %s63 = scalar_select %p60, %s61, %s62
      %p66 = pneg %p60
      %p67 = scmp.eq.s32.totalorder %s13, 1
      %p68 = por %p66, %p67
      %p69 = scmp.ne.s32.totalorder %s61, %s64
      %p70 = scmp.eq.s32.totalorder %s13, 0
      %p71 = por %p69, %p70
      %p72 = scmp.ne.s32.totalorder %s61, %s64
      %p73 = scmp.eq.s32.totalorder %s18, 1
      %p74 = por %p72, %p73
      %p75 = scmp.ne.s32.totalorder %s64, %s65
      %p76 = scmp.eq.s32.totalorder %s18, 0
      %p77 = por %p75, %p76
      %p78 = scmp.ne.s32.totalorder %s64, %s65
      %p79 = scmp.eq.s32.totalorder %s19, 1
      %p80 = por %p78, %p79
      %p82 = scmp.ne.s32.totalorder %s65, %s81
      %p83 = scmp.eq.s32.totalorder %s19, 0
      %p84 = por %p82, %p83
      %s85 = ssub.s32 %s21, %s28
      %p86 = scmp.eq.s32.totalorder %s85, 0
      %s88 = sadd.s32 %s87, 1
      %s89 = scalar_select %p86, %s87, %s88
      %p92 = pneg %p86
      %p93 = scmp.eq.s32.totalorder %s13, 1
      %p94 = por %p92, %p93
      %p95 = scmp.ne.s32.totalorder %s87, %s90
      %p96 = scmp.eq.s32.totalorder %s13, 0
      %p97 = por %p95, %p96
      %p98 = scmp.ne.s32.totalorder %s87, %s90
      %p99 = scmp.eq.s32.totalorder %s18, 1
      %p100 = por %p98, %p99
      %p101 = scmp.ne.s32.totalorder %s90, %s91
      %p102 = scmp.eq.s32.totalorder %s18, 0
      %p103 = por %p101, %p102
      %p104 = scmp.ne.s32.totalorder %s90, %s91
      %p105 = scmp.eq.s32.totalorder %s19, 1
      %p106 = por %p104, %p105
      %p108 = scmp.ne.s32.totalorder %s91, %s107
      %p109 = scmp.eq.s32.totalorder %s19, 0
      %p110 = por %p108, %p109
      %s111 = ssub.s32 %s21, %s28
      %p112 = scmp.eq.s32.totalorder %s111, 0
      %s114 = sadd.s32 %s113, 1
      %s115 = scalar_select %p112, %s113, %s114
      %p118 = pneg %p112
      %p119 = scmp.eq.s32.totalorder %s13, 1
      %p120 = por %p118, %p119
      %p121 = scmp.ne.s32.totalorder %s113, %s116
      %p122 = scmp.eq.s32.totalorder %s13, 0
      %p123 = por %p121, %p122
      %p124 = scmp.ne.s32.totalorder %s113, %s116
      %p125 = scmp.eq.s32.totalorder %s18, 1
      %p126 = por %p124, %p125
      %p127 = scmp.ne.s32.totalorder %s116, %s117
      %p128 = scmp.eq.s32.totalorder %s18, 0
      %p129 = por %p127, %p128
      %p130 = scmp.ne.s32.totalorder %s116, %s117
      %p131 = scmp.eq.s32.totalorder %s19, 1
      %p132 = por %p130, %p131
      %p134 = scmp.ne.s32.totalorder %s117, %s133
      %p135 = scmp.eq.s32.totalorder %s19, 0
      %p136 = por %p134, %p135
      %s137 = ssub.s32 %s20, %s32
      %s138 = ssub.s32 %s21, %s28
      %s139 = sor.u32 %s137, %s138
      %p140 = scmp.eq.s32.totalorder %s139, 0
      %s142 = sadd.s32 %s141, 1
      %s143 = scalar_select %p140, %s141, %s142
      %p146 = pneg %p140
      %p147 = scmp.eq.s32.totalorder %s13, 1
      %p148 = por %p146, %p147
      %p149 = scmp.ne.s32.totalorder %s141, %s144
      %p150 = scmp.eq.s32.totalorder %s13, 0
      %p151 = por %p149, %p150
      %p152 = scmp.ne.s32.totalorder %s141, %s144
      %p153 = scmp.eq.s32.totalorder %s18, 1
      %p154 = por %p152, %p153
      %p155 = scmp.ne.s32.totalorder %s144, %s145
      %p156 = scmp.eq.s32.totalorder %s18, 0
      %p157 = por %p155, %p156
      %p158 = scmp.ne.s32.totalorder %s144, %s145
      %p159 = scmp.eq.s32.totalorder %s19, 1
      %p160 = por %p158, %p159
      %p162 = scmp.ne.s32.totalorder %s145, %s161
      %p163 = scmp.eq.s32.totalorder %s19, 0
      %p164 = por %p162, %p163
      %p165 = scmp.le.s32.totalorder 1, %s13
      %p166 = scmp.lt.s32.totalorder %s13, 3
      %p167 = pnand %p165, %p166
      %p168 = pneg %p167
      // Predicated region
      $region9: #{tpu_custom_call.1} parent=5 // pred_check
        _
      $region10: #{tpu_custom_call.1} parent=5 // pred_check_branch
        %170 = sbr.rel (%p167) target = $region12
      $region11: #{tpu_custom_call.1} parent=5 // pred_region
        %s171 = ssub.s32 %s13, 1
        // Predicated region
        $region13: #{tpu_custom_call.1} parent=11 // pred_check
          %p172 = pneg %p77
        $region14: #{tpu_custom_call.1} parent=11 // pred_check_branch
          %174 = sbr.rel (%p172) target = $region16
        $region15: #{tpu_custom_call.1} parent=11 // pred_region
          %p175 = scmp.lt.s32.totalorder %s23, 0
          %s176 = scalar_select %p175, %s23, 0
          %s177 = smul.addr %s176, 4
          %s178 = scalar_lea.vmem %s1, %s177
        $region16: #{tpu_custom_call.1} parent=11 // pred_fallthru
          _
        // Predicated region
        $region17: #{tpu_custom_call.1} parent=11 // pred_check
          %p179 = pneg %p103
        $region18: #{tpu_custom_call.1} parent=11 // pred_check_branch
          %181 = sbr.rel (%p179) target = $region20
        $region19: #{tpu_custom_call.1} parent=11 // pred_region
          %p182 = scmp.lt.s32.totalorder %s23, 0
          %s183 = scalar_select %p182, %s23, 0
          %s184 = scalar_lea.vmem %s2, %s183
        $region20: #{tpu_custom_call.1} parent=11 // pred_fallthru
          _
        // Predicated region
        $region21: #{tpu_custom_call.1} parent=11 // pred_check
          %p185 = pneg %p129
        $region22: #{tpu_custom_call.1} parent=11 // pred_check_branch
          %187 = sbr.rel (%p185) target = $region24
        $region23: #{tpu_custom_call.1} parent=11 // pred_region
          %p188 = scmp.lt.s32.totalorder %s23, 0
          %s189 = scalar_select %p188, %s23, 0
          %s190 = scalar_lea.vmem %s3, %s189
        $region24: #{tpu_custom_call.1} parent=11 // pred_fallthru
          _
      $region12: #{tpu_custom_call.1} parent=5 // pred_fallthru
        _
      %p191 = scmp.lt.s32.totalorder %s13, 2
      // Predicated region
      $region25: #{tpu_custom_call.1} parent=5 // pred_check
        %p192 = pneg %p191
      $region26: #{tpu_custom_call.1} parent=5 // pred_check_branch
        %194 = sbr.rel (%p192) target = $region28
      $region27: #{tpu_custom_call.1} parent=5 // pred_region
        // Predicated region
        $region29: #{tpu_custom_call.1} parent=27 // pred_check
          %p195 = pneg %p45
        $region30: #{tpu_custom_call.1} parent=27 // pred_check_branch
          %197 = sbr.rel (%p195) target = $region32
        $region31: #{tpu_custom_call.1} parent=27 // pred_region
          %p198 = scmp.lt.s32.totalorder %s20, 1
          %s199 = scalar_select %p198, %s20, 1
          %s200 = smul.addr %s199, 54
          %s201 = smul.addr %s200, 4
          %s202 = scalar_lea.vmem %s0, %s201
        $region32: #{tpu_custom_call.1} parent=27 // pred_fallthru
          _
      $region28: #{tpu_custom_call.1} parent=5 // pred_fallthru
        _
      %p203 = scmp.le.s32.totalorder 1, %s13
      %p204 = scmp.lt.s32.totalorder %s13, 3
      %p205 = pnand %p203, %p204
      %p206 = pneg %p205
      // Predicated region
      $region33: #{tpu_custom_call.1} parent=5 // pred_check
        _
      $region34: #{tpu_custom_call.1} parent=5 // pred_check_branch
        %208 = sbr.rel (%p205) target = $region36
      $region35: #{tpu_custom_call.1} parent=5 // pred_region
        %s209 = ssub.s32 %s13, 1
        %p210 = scmp.lt.s32.totalorder %s22, 1
        %s211 = scalar_select %p210, %s22, 1
        %s212 = smul.addr %s211, 54
        %s213 = smul.addr %s212, 4
        %s214 = scalar_lea.vmem %s0, %s213
        %p215 = pneg %p51
        %p216 = pneg %p48
        %p217 = scmp.lt.s32.totalorder %s23, 0
        %s218 = scalar_select %p217, %s23, 0
        %s219 = smul.addr %s218, 4
        %s220 = scalar_lea.vmem %s1, %s219
        %p221 = pneg %p77
        %p222 = pneg %p74
        %p223 = scmp.lt.s32.totalorder %s23, 0
        %s224 = scalar_select %p223, %s23, 0
        %s225 = scalar_lea.vmem %s2, %s224
        %p226 = pneg %p103
        %p227 = pneg %p100
        %p228 = scmp.lt.s32.totalorder %s23, 0
        %s229 = scalar_select %p228, %s23, 0
        %s230 = scalar_lea.vmem %s3, %s229
        %p231 = pneg %p129
        %p232 = pneg %p126
        %p233 = pneg %p157
        %p234 = pneg %p154
        %s235 = sand.u32 %s144, 1
        %s236 = scalar_lea.sflag [#allocation3], %s235
        %s237 = sand.u32 %s144, 1
        %s238 = smul.addr %s237, 256
        %s239 = scalar_lea.vmem [#allocation2], %s238
        %p240 = scmp.lt.s32.totalorder %s22, 1
        %s241 = scalar_select %p240, %s22, 1
        %s242 = smul.addr %s241, 54
        %s243 = smul.addr %s242, 4
        %s244 = scalar_lea.vmem %s0, %s243
        %p245 = scmp.lt.s32.totalorder %s23, 0
        %s246 = scalar_select %p245, %s23, 0
        %s247 = smul.addr %s246, 4
        %s248 = scalar_lea.vmem %s1, %s247
        %p249 = scmp.lt.s32.totalorder %s23, 0
        %s250 = scalar_select %p249, %s23, 0
        %s251 = scalar_lea.vmem %s2, %s250
        %p252 = scmp.lt.s32.totalorder %s23, 0
        %s253 = scalar_select %p252, %s23, 0
        %s254 = scalar_lea.vmem %s3, %s253
        %v256 = vld [vmem:[%s244] sm:$0xf]
        %v257 = vld [vmem:[%s244 + $0x4] sm:$0xf]
        %v258 = vld [vmem:[%s244 + $0xc] sm:$0xf]
        %v259 = vld [vmem:[%s244 + $0x10] sm:$0xf]
        %v260 = vld [vmem:[%s244 + $0x18] sm:$0xf]
        %v261 = vld [vmem:[%s244 + $0x1c] sm:$0xf]
        %v262 = vld [vmem:[%s244 + $0x24] sm:$0xf]
        %v263 = vld [vmem:[%s244 + $0x28] sm:$0xf]
        %v264 = vld [vmem:[%s244 + $0x30] sm:$0xf]
        %v265 = vld [vmem:[%s244 + $0x34] sm:$0xf]
        %v266 = vld [vmem:[%s244 + $0x3c] sm:$0xf]
        %v267 = vld [vmem:[%s244 + $0x40] sm:$0xf]
        %v268 = vld [vmem:[%s244 + $0x48] sm:$0xf]
        %v269 = vld [vmem:[%s244 + $0x4c] sm:$0xf]
        %v270 = vld [vmem:[%s244 + $0x54] sm:$0xf]
        %v271 = vld [vmem:[%s244 + $0x58] sm:$0xf]
        %v272 = vld [vmem:[%s244 + $0x60] sm:$0xf]
        %v273 = vld [vmem:[%s244 + $0x64] sm:$0xf]
        %v274 = vld [vmem:[%s244 + $0x6c] sm:$0xf]
        %v275 = vld [vmem:[%s244 + $0x70] sm:$0xf]
        %v276 = vld [vmem:[%s244 + $0x78] sm:$0xf]
        %v277 = vld [vmem:[%s244 + $0x7c] sm:$0xf]
        %v278 = vld [vmem:[%s244 + $0x84] sm:$0xf]
        %v279 = vld [vmem:[%s244 + $0x88] sm:$0xf]
        %v280 = vld [vmem:[%s244 + $0x90] sm:$0xf]
        %v281 = vld [vmem:[%s244 + $0x94] sm:$0xf]
        %v282 = vld [vmem:[%s244 + $0x9c] sm:$0xf]
        %v283 = vld [vmem:[%s244 + $0xa0] sm:$0xf]
        %v284 = vld [vmem:[%s244 + $0xa8] sm:$0xf]
        %v285 = vld [vmem:[%s244 + $0xac] sm:$0xf]
        %v286 = vld [vmem:[%s244 + $0xb4] sm:$0xf]
        %v287 = vld [vmem:[%s244 + $0xb8] sm:$0xf]
        %v288 = vld [vmem:[%s248] sm:$0xf]
        %v289 = vld [vmem:[%s248 + $0x4] sm:$0xf]
        %v290 = vld [vmem:[%s248 + $0x8] sm:$0xf]
        %v291 = vld [vmem:[%s248 + $0xc] sm:$0xf]
        %v292 = vld [vmem:[%s248 + $0x10] sm:$0xf]
        %v293 = vld [vmem:[%s248 + $0x14] sm:$0xf]
        %v294 = vld [vmem:[%s248 + $0x18] sm:$0xf]
        %v295 = vld [vmem:[%s248 + $0x1c] sm:$0xf]
        %v296 = vld [vmem:[%s248 + $0x20] sm:$0xf]
        %v297 = vld [vmem:[%s248 + $0x24] sm:$0xf]
        %v298 = vld [vmem:[%s248 + $0x28] sm:$0xf]
        %v299 = vld [vmem:[%s248 + $0x2c] sm:$0xf]
        %v300 = vld [vmem:[%s248 + $0x30] sm:$0xf]
        %v301 = vld [vmem:[%s248 + $0x34] sm:$0xf]
        %v302 = vld [vmem:[%s248 + $0x38] sm:$0xf]
        %v303 = vld [vmem:[%s248 + $0x3c] sm:$0xf]
        %v304 = vld [vmem:[%s244 + $0x8] sm:$0x1]
        %v305 = vld [vmem:[%s244 + $0x14] sm:$0x1]
        %v306 = vld [vmem:[%s244 + $0x20] sm:$0x1]
        %v307 = vld [vmem:[%s244 + $0x2c] sm:$0x1]
        %v308 = vld [vmem:[%s244 + $0x38] sm:$0x1]
        %v309 = vld [vmem:[%s244 + $0x44] sm:$0x1]
        %v310 = vld [vmem:[%s244 + $0x50] sm:$0x1]
        %v311 = vld [vmem:[%s244 + $0x5c] sm:$0x1]
        %v312 = vld [vmem:[%s244 + $0x68] sm:$0x1]
        %v313 = vld [vmem:[%s244 + $0x74] sm:$0x1]
        %v314 = vld [vmem:[%s244 + $0x80] sm:$0x1]
        %v315 = vld [vmem:[%s244 + $0x8c] sm:$0x1]
        %v316 = vld [vmem:[%s244 + $0x98] sm:$0x1]
        %v317 = vld [vmem:[%s244 + $0xa4] sm:$0x1]
        %v318 = vld [vmem:[%s244 + $0xb0] sm:$0x1]
        %v319 = vld [vmem:[%s244 + $0xbc] sm:$0x1]
        %vm320 = vsmask.f32 3328
        %vm321 = vsmask.f32 7440
        %vm322 = vmor %vm320, %vm321
        %v324 = vshrl.u32 %v256, 16
        %v326 = vrot.slane %v324, 4
        %v327 = vshll.u32 %v256, 16
        %v329 = vrot.slane %v327, 5
        %v330 = vor.u32 %v326, %v329
        %v331 = vrot.slane %v330, 4
        %v333 = vshll.u32 %v257, 16
        %v335 = vrot.slane %v333, 5
        %v336 = vsel %vm322, %v331, %v335
        %v337 = vshrl.u32 %v257, 16
        %v339 = vrot.slane %v337, 4
        %v340 = vor.u32 %v339, %v335
        %v341 = vrot.slane %v340, 4
        %v343 = vshll.u32 %v304, 16
        %v345 = vrot.slane %v343, 5
        %v346 = vsel %vm322, %v341, %v345
        %v348 = vshrl.u32 %v258, 16
        %v350 = vrot.slane %v348, 4
        %v351 = vshll.u32 %v258, 16
        %v353 = vrot.slane %v351, 5
        %v354 = vor.u32 %v350, %v353
        %v355 = vrot.slane %v354, 4
        %v357 = vshll.u32 %v259, 16
        %v359 = vrot.slane %v357, 5
        %v360 = vsel %vm322, %v355, %v359
        %v361 = vshrl.u32 %v259, 16
        %v363 = vrot.slane %v361, 4
        %v364 = vor.u32 %v363, %v359
        %v365 = vrot.slane %v364, 4
        %v367 = vshll.u32 %v305, 16
        %v369 = vrot.slane %v367, 5
        %v370 = vsel %vm322, %v365, %v369
        %v372 = vshrl.u32 %v260, 16
        %v374 = vrot.slane %v372, 4
        %v375 = vshll.u32 %v260, 16
        %v377 = vrot.slane %v375, 5
        %v378 = vor.u32 %v374, %v377
        %v379 = vrot.slane %v378, 4
        %v381 = vshll.u32 %v261, 16
        %v383 = vrot.slane %v381, 5
        %v384 = vsel %vm322, %v379, %v383
        %v385 = vshrl.u32 %v261, 16
        %v387 = vrot.slane %v385, 4
        %v388 = vor.u32 %v387, %v383
        %v389 = vrot.slane %v388, 4
        %v391 = vshll.u32 %v306, 16
        %v393 = vrot.slane %v391, 5
        %v394 = vsel %vm322, %v389, %v393
        %v396 = vshrl.u32 %v262, 16
        %v398 = vrot.slane %v396, 4
        %v399 = vshll.u32 %v262, 16
        %v401 = vrot.slane %v399, 5
        %v402 = vor.u32 %v398, %v401
        %v403 = vrot.slane %v402, 4
        %v405 = vshll.u32 %v263, 16
        %v407 = vrot.slane %v405, 5
        %v408 = vsel %vm322, %v403, %v407
        %v409 = vshrl.u32 %v263, 16
        %v411 = vrot.slane %v409, 4
        %v412 = vor.u32 %v411, %v407
        %v413 = vrot.slane %v412, 4
        %v415 = vshll.u32 %v307, 16
        %v417 = vrot.slane %v415, 5
        %v418 = vsel %vm322, %v413, %v417
        %v420 = vshrl.u32 %v264, 16
        %v422 = vrot.slane %v420, 4
        %v423 = vshll.u32 %v264, 16
        %v425 = vrot.slane %v423, 5
        %v426 = vor.u32 %v422, %v425
        %v427 = vrot.slane %v426, 4
        %v429 = vshll.u32 %v265, 16
        %v431 = vrot.slane %v429, 5
        %v432 = vsel %vm322, %v427, %v431
        %v433 = vshrl.u32 %v265, 16
        %v435 = vrot.slane %v433, 4
        %v436 = vor.u32 %v435, %v431
        %v437 = vrot.slane %v436, 4
        %v439 = vshll.u32 %v308, 16
        %v441 = vrot.slane %v439, 5
        %v442 = vsel %vm322, %v437, %v441
        %v444 = vshrl.u32 %v266, 16
        %v446 = vrot.slane %v444, 4
        %v447 = vshll.u32 %v266, 16
        %v449 = vrot.slane %v447, 5
        %v450 = vor.u32 %v446, %v449
        %v451 = vrot.slane %v450, 4
        %v453 = vshll.u32 %v267, 16
        %v455 = vrot.slane %v453, 5
        %v456 = vsel %vm322, %v451, %v455
        %v457 = vshrl.u32 %v267, 16
        %v459 = vrot.slane %v457, 4
        %v460 = vor.u32 %v459, %v455
        %v461 = vrot.slane %v460, 4
        %v463 = vshll.u32 %v309, 16
        %v465 = vrot.slane %v463, 5
        %v466 = vsel %vm322, %v461, %v465
        %v468 = vshrl.u32 %v268, 16
        %v470 = vrot.slane %v468, 4
        %v471 = vshll.u32 %v268, 16
        %v473 = vrot.slane %v471, 5
        %v474 = vor.u32 %v470, %v473
        %v475 = vrot.slane %v474, 4
        %v477 = vshll.u32 %v269, 16
        %v479 = vrot.slane %v477, 5
        %v480 = vsel %vm322, %v475, %v479
        %v481 = vshrl.u32 %v269, 16
        %v483 = vrot.slane %v481, 4
        %v484 = vor.u32 %v483, %v479
        %v485 = vrot.slane %v484, 4
        %v487 = vshll.u32 %v310, 16
        %v489 = vrot.slane %v487, 5
        %v490 = vsel %vm322, %v485, %v489
        %v492 = vshrl.u32 %v270, 16
        %v494 = vrot.slane %v492, 4
        %v495 = vshll.u32 %v270, 16
        %v497 = vrot.slane %v495, 5
        %v498 = vor.u32 %v494, %v497
        %v499 = vrot.slane %v498, 4
        %v501 = vshll.u32 %v271, 16
        %v503 = vrot.slane %v501, 5
        %v504 = vsel %vm322, %v499, %v503
        %v505 = vshrl.u32 %v271, 16
        %v507 = vrot.slane %v505, 4
        %v508 = vor.u32 %v507, %v503
        %v509 = vrot.slane %v508, 4
        %v511 = vshll.u32 %v311, 16
        %v513 = vrot.slane %v511, 5
        %v514 = vsel %vm322, %v509, %v513
        %v516 = vshrl.u32 %v272, 16
        %v518 = vrot.slane %v516, 4
        %v519 = vshll.u32 %v272, 16
        %v521 = vrot.slane %v519, 5
        %v522 = vor.u32 %v518, %v521
        %v523 = vrot.slane %v522, 4
        %v525 = vshll.u32 %v273, 16
        %v527 = vrot.slane %v525, 5
        %v528 = vsel %vm322, %v523, %v527
        %v529 = vshrl.u32 %v273, 16
        %v531 = vrot.slane %v529, 4
        %v532 = vor.u32 %v531, %v527
        %v533 = vrot.slane %v532, 4
        %v535 = vshll.u32 %v312, 16
        %v537 = vrot.slane %v535, 5
        %v538 = vsel %vm322, %v533, %v537
        %v540 = vshrl.u32 %v274, 16
        %v542 = vrot.slane %v540, 4
        %v543 = vshll.u32 %v274, 16
        %v545 = vrot.slane %v543, 5
        %v546 = vor.u32 %v542, %v545
        %v547 = vrot.slane %v546, 4
        %v549 = vshll.u32 %v275, 16
        %v551 = vrot.slane %v549, 5
        %v552 = vsel %vm322, %v547, %v551
        %v553 = vshrl.u32 %v275, 16
        %v555 = vrot.slane %v553, 4
        %v556 = vor.u32 %v555, %v551
        %v557 = vrot.slane %v556, 4
        %v559 = vshll.u32 %v313, 16
        %v561 = vrot.slane %v559, 5
        %v562 = vsel %vm322, %v557, %v561
        %v564 = vshrl.u32 %v276, 16
        %v566 = vrot.slane %v564, 4
        %v567 = vshll.u32 %v276, 16
        %v569 = vrot.slane %v567, 5
        %v570 = vor.u32 %v566, %v569
        %v571 = vrot.slane %v570, 4
        %v573 = vshll.u32 %v277, 16
        %v575 = vrot.slane %v573, 5
        %v576 = vsel %vm322, %v571, %v575
        %v577 = vshrl.u32 %v277, 16
        %v579 = vrot.slane %v577, 4
        %v580 = vor.u32 %v579, %v575
        %v581 = vrot.slane %v580, 4
        %v583 = vshll.u32 %v314, 16
        %v585 = vrot.slane %v583, 5
        %v586 = vsel %vm322, %v581, %v585
        %v588 = vshrl.u32 %v278, 16
        %v590 = vrot.slane %v588, 4
        %v591 = vshll.u32 %v278, 16
        %v593 = vrot.slane %v591, 5
        %v594 = vor.u32 %v590, %v593
        %v595 = vrot.slane %v594, 4
        %v597 = vshll.u32 %v279, 16
        %v599 = vrot.slane %v597, 5
        %v600 = vsel %vm322, %v595, %v599
        %v601 = vshrl.u32 %v279, 16
        %v603 = vrot.slane %v601, 4
        %v604 = vor.u32 %v603, %v599
        %v605 = vrot.slane %v604, 4
        %v607 = vshll.u32 %v315, 16
        %v609 = vrot.slane %v607, 5
        %v610 = vsel %vm322, %v605, %v609
        %v612 = vshrl.u32 %v280, 16
        %v614 = vrot.slane %v612, 4
        %v615 = vshll.u32 %v280, 16
        %v617 = vrot.slane %v615, 5
        %v618 = vor.u32 %v614, %v617
        %v619 = vrot.slane %v618, 4
        %v621 = vshll.u32 %v281, 16
        %v623 = vrot.slane %v621, 5
        %v624 = vsel %vm322, %v619, %v623
        %v625 = vshrl.u32 %v281, 16
        %v627 = vrot.slane %v625, 4
        %v628 = vor.u32 %v627, %v623
        %v629 = vrot.slane %v628, 4
        %v631 = vshll.u32 %v316, 16
        %v633 = vrot.slane %v631, 5
        %v634 = vsel %vm322, %v629, %v633
        %v636 = vshrl.u32 %v282, 16
        %v638 = vrot.slane %v636, 4
        %v639 = vshll.u32 %v282, 16
        %v641 = vrot.slane %v639, 5
        %v642 = vor.u32 %v638, %v641
        %v643 = vrot.slane %v642, 4
        %v645 = vshll.u32 %v283, 16
        %v647 = vrot.slane %v645, 5
        %v648 = vsel %vm322, %v643, %v647
        %v649 = vshrl.u32 %v283, 16
        %v651 = vrot.slane %v649, 4
        %v652 = vor.u32 %v651, %v647
        %v653 = vrot.slane %v652, 4
        %v655 = vshll.u32 %v317, 16
        %v657 = vrot.slane %v655, 5
        %v658 = vsel %vm322, %v653, %v657
        %v660 = vshrl.u32 %v284, 16
        %v662 = vrot.slane %v660, 4
        %v663 = vshll.u32 %v284, 16
        %v665 = vrot.slane %v663, 5
        %v666 = vor.u32 %v662, %v665
        %v667 = vrot.slane %v666, 4
        %v669 = vshll.u32 %v285, 16
        %v671 = vrot.slane %v669, 5
        %v672 = vsel %vm322, %v667, %v671
        %v673 = vshrl.u32 %v285, 16
        %v675 = vrot.slane %v673, 4
        %v676 = vor.u32 %v675, %v671
        %v677 = vrot.slane %v676, 4
        %v679 = vshll.u32 %v318, 16
        %v681 = vrot.slane %v679, 5
        %v682 = vsel %vm322, %v677, %v681
        %v684 = vshrl.u32 %v286, 16
        %v686 = vrot.slane %v684, 4
        %v687 = vshll.u32 %v286, 16
        %v689 = vrot.slane %v687, 5
        %v690 = vor.u32 %v686, %v689
        %v691 = vrot.slane %v690, 4
        %v693 = vshll.u32 %v287, 16
        %v695 = vrot.slane %v693, 5
        %v696 = vsel %vm322, %v691, %v695
        %v697 = vshrl.u32 %v287, 16
        %v699 = vrot.slane %v697, 4
        %v700 = vor.u32 %v699, %v695
        %v701 = vrot.slane %v700, 4
        %v703 = vshll.u32 %v319, 16
        %v705 = vrot.slane %v703, 5
        %v706 = vsel %vm322, %v701, %v705
        %s707 = scalar_lea.vmem %s248, 64
        %v708 = vld [vmem:[%s707] sm:$0xf]
        %v709 = vld [vmem:[%s707 + $0x4] sm:$0xf]
        %v710 = vld [vmem:[%s707 + $0x8] sm:$0xf]
        %v711 = vld [vmem:[%s707 + $0xc] sm:$0xf]
        %v712 = vld [vmem:[%s707 + $0x10] sm:$0xf]
        %v713 = vld [vmem:[%s707 + $0x14] sm:$0xf]
        %v714 = vld [vmem:[%s707 + $0x18] sm:$0xf]
        %v715 = vld [vmem:[%s707 + $0x1c] sm:$0xf]
        %v716 = vld [vmem:[%s707 + $0x20] sm:$0xf]
        %v717 = vld [vmem:[%s707 + $0x24] sm:$0xf]
        %v718 = vld [vmem:[%s707 + $0x28] sm:$0xf]
        %v719 = vld [vmem:[%s707 + $0x2c] sm:$0xf]
        %v720 = vld [vmem:[%s707 + $0x30] sm:$0xf]
        %v721 = vld [vmem:[%s707 + $0x34] sm:$0xf]
        %v722 = vld [vmem:[%s707 + $0x38] sm:$0xf]
        %v723 = vld [vmem:[%s707 + $0x3c] sm:$0xf]
        %v724 = vunpack.c.l.b16 %v336
        %v725 = vunpack.c.l.b16 %v346
        %v726 = vunpack.c.l.b16 %v360
        %v727 = vunpack.c.l.b16 %v370
        %v728 = vunpack.c.l.b16 %v384
        %v729 = vunpack.c.l.b16 %v394
        %v730 = vunpack.c.l.b16 %v408
        %v731 = vunpack.c.l.b16 %v418
        %v732 = vunpack.c.l.b16 %v432
        %v733 = vunpack.c.l.b16 %v442
        %v734 = vunpack.c.l.b16 %v456
        %v735 = vunpack.c.l.b16 %v466
        %v736 = vunpack.c.l.b16 %v480
        %v737 = vunpack.c.l.b16 %v490
        %v738 = vunpack.c.l.b16 %v504
        %v739 = vunpack.c.l.b16 %v514
        %v740 = vunpack.c.l.b16 %v528
        %v741 = vunpack.c.l.b16 %v538
        %v742 = vunpack.c.l.b16 %v552
        %v743 = vunpack.c.l.b16 %v562
        %v744 = vunpack.c.l.b16 %v576
        %v745 = vunpack.c.l.b16 %v586
        %v746 = vunpack.c.l.b16 %v600
        %v747 = vunpack.c.l.b16 %v610
        %v748 = vunpack.c.l.b16 %v624
        %v749 = vunpack.c.l.b16 %v634
        %v750 = vunpack.c.l.b16 %v648
        %v751 = vunpack.c.l.b16 %v658
        %v752 = vunpack.c.l.b16 %v672
        %v753 = vunpack.c.l.b16 %v682
        %v754 = vunpack.c.l.b16 %v696
        %v755 = vunpack.c.l.b16 %v706
        %v756 = vpack.c.b16 %v725, %v724
        %v757 = vpack.c.b16 %v727, %v726
        %v758 = vpack.c.b16 %v729, %v728
        %v759 = vpack.c.b16 %v731, %v730
        %v760 = vpack.c.b16 %v733, %v732
        %v761 = vpack.c.b16 %v735, %v734
        %v762 = vpack.c.b16 %v737, %v736
        %v763 = vpack.c.b16 %v739, %v738
        %v764 = vpack.c.b16 %v741, %v740
        %v765 = vpack.c.b16 %v743, %v742
        %v766 = vpack.c.b16 %v745, %v744
        %v767 = vpack.c.b16 %v747, %v746
        %v768 = vpack.c.b16 %v749, %v748
        %v769 = vpack.c.b16 %v751, %v750
        %v770 = vpack.c.b16 %v753, %v752
        %v771 = vpack.c.b16 %v755, %v754
        %v804 = vunpack.c.l.b16 %v708
        %v805 = vunpack.c.l.b16 %v709
        %v806 = vunpack.c.l.b16 %v710
        %v807 = vunpack.c.l.b16 %v711
        %v808 = vunpack.c.l.b16 %v712
        %v809 = vunpack.c.l.b16 %v713
        %v810 = vunpack.c.l.b16 %v714
        %v811 = vunpack.c.l.b16 %v715
        %v812 = vunpack.c.l.b16 %v716
        %v813 = vunpack.c.l.b16 %v717
        %v814 = vunpack.c.l.b16 %v718
        %v815 = vunpack.c.l.b16 %v719
        %v816 = vunpack.c.l.b16 %v720
        %v817 = vunpack.c.l.b16 %v721
        %v818 = vunpack.c.l.b16 %v722
        %v819 = vunpack.c.l.b16 %v723
        %v820 = vpack.c.b16 %v805, %v804
        %v821 = vpack.c.b16 %v807, %v806
        %v822 = vpack.c.b16 %v809, %v808
        %v823 = vpack.c.b16 %v811, %v810
        %v824 = vpack.c.b16 %v813, %v812
        %v825 = vpack.c.b16 %v815, %v814
        %v826 = vpack.c.b16 %v817, %v816
        %v827 = vpack.c.b16 %v819, %v818
        %836 = vmatprep.subr.bf16.mxu0 0
        %837 = vmatpush1.bf16.msra.mxu0 %v820
        %838 = vmatprep.subr.bf16.mxu0 0
        %839 = vmatpush1.bf16.msra.mxu0 %v821
        %840 = vmatprep.subr.bf16.mxu0 0
        %841 = vmatpush1.bf16.msra.mxu0 %v822
        %842 = vmatprep.subr.bf16.mxu0 0
        %843 = vmatpush1.bf16.msra.mxu0 %v823
        %844 = vmatprep.subr.bf16.mxu0 0
        %845 = vmatpush1.bf16.msra.mxu0 %v824
        %846 = vmatprep.subr.bf16.mxu0 0
        %847 = vmatpush1.bf16.msra.mxu0 %v825
        %848 = vmatprep.subr.bf16.mxu0 0
        %849 = vmatpush1.bf16.msra.mxu0 %v826
        %850 = vmatprep.subr.bf16.mxu0 0
        %851 = vmatpush1.bf16.msra.mxu0 %v827
        %852 = vmatprep.subr.bf16.mxu0 0
        %853 = vmatpush1.bf16.msra.mxu0 0
        %854 = vmatprep.subr.bf16.mxu0 0
        %855 = vmatpush1.bf16.msra.mxu0 0
        %856 = vmatprep.subr.bf16.mxu0 0
        %857 = vmatpush1.bf16.msra.mxu0 0
        %858 = vmatprep.subr.bf16.mxu0 0
        %859 = vmatpush1.bf16.msra.mxu0 0
        %860 = vmatprep.subr.bf16.mxu0 0
        %861 = vmatpush1.bf16.msra.mxu0 0
        %862 = vmatprep.subr.bf16.mxu0 0
        %863 = vmatpush1.bf16.msra.mxu0 0
        %864 = vmatprep.subr.bf16.mxu0 0
        %865 = vmatpush1.bf16.msra.mxu0 0
        %866 = vmatprep.subr.bf16.mxu0 0
        %867 = vmatpush1.bf16.msra.mxu0 0
        %868 = vmatprep.mubr.bf16.mxu0 0
        %869 = vmatmul.mubr.bf16.gmra.mrb[0].mxu0 %v756
        %v870 = vpop.f32.mrb[0].mxu0
        %v871 = vadd.f32 0.0, %v870
        %v872 = vpop.f32.mrb[0].mxu0
        %v873 = vpop.f32.mrb[0].mxu0
        %v874 = vadd.f32 0.0, %v873
        %v875 = vpop.f32.mrb[0].mxu0
        %876 = vmatprep.mubr.bf16.mxu0 0
        %877 = vmatmul.mubr.bf16.gmra.mrb[0].mxu0 %v757
        %v878 = vpop.f32.mrb[0].mxu0
        %v879 = vadd.f32 0.0, %v878
        %v880 = vpop.f32.mrb[0].mxu0
        %v881 = vpop.f32.mrb[0].mxu0
        %v882 = vadd.f32 0.0, %v881
        %v883 = vpop.f32.mrb[0].mxu0
        %884 = vmatprep.mubr.bf16.mxu0 0
        %885 = vmatmul.mubr.bf16.gmra.mrb[0].mxu0 %v758
        %v886 = vpop.f32.mrb[0].mxu0
        %v887 = vadd.f32 0.0, %v886
        %v888 = vpop.f32.mrb[0].mxu0
        %v889 = vpop.f32.mrb[0].mxu0
        %v890 = vadd.f32 0.0, %v889
        %v891 = vpop.f32.mrb[0].mxu0
        %892 = vmatprep.mubr.bf16.mxu0 0
        %893 = vmatmul.mubr.bf16.gmra.mrb[0].mxu0 %v759
        %v894 = vpop.f32.mrb[0].mxu0
        %v895 = vadd.f32 0.0, %v894
        %v896 = vpop.f32.mrb[0].mxu0
        %v897 = vpop.f32.mrb[0].mxu0
        %v898 = vadd.f32 0.0, %v897
        %v899 = vpop.f32.mrb[0].mxu0
        %900 = vmatprep.mubr.bf16.mxu0 0
        %901 = vmatmul.mubr.bf16.gmra.mrb[0].mxu0 %v760
        %v902 = vpop.f32.mrb[0].mxu0
        %v903 = vadd.f32 0.0, %v902
        %v904 = vpop.f32.mrb[0].mxu0
        %v905 = vpop.f32.mrb[0].mxu0
        %v906 = vadd.f32 0.0, %v905
        %v907 = vpop.f32.mrb[0].mxu0
        %908 = vmatprep.mubr.bf16.mxu0 0
        %909 = vmatmul.mubr.bf16.gmra.mrb[0].mxu0 %v761
        %v910 = vpop.f32.mrb[0].mxu0
        %v911 = vadd.f32 0.0, %v910
        %v912 = vpop.f32.mrb[0].mxu0
        %v913 = vpop.f32.mrb[0].mxu0
        %v914 = vadd.f32 0.0, %v913
        %v915 = vpop.f32.mrb[0].mxu0
        %916 = vmatprep.mubr.bf16.mxu0 0
        %917 = vmatmul.mubr.bf16.gmra.mrb[0].mxu0 %v762
        %v918 = vpop.f32.mrb[0].mxu0
        %v919 = vadd.f32 0.0, %v918
        %v920 = vpop.f32.mrb[0].mxu0
        %v921 = vpop.f32.mrb[0].mxu0
        %v922 = vadd.f32 0.0, %v921
        %v923 = vpop.f32.mrb[0].mxu0
        %924 = vmatprep.mubr.bf16.mxu0 0
        %925 = vmatmul.mubr.bf16.gmra.mrb[0].mxu0 %v763
        %v926 = vpop.f32.mrb[0].mxu0
        %v927 = vadd.f32 0.0, %v926
        %v928 = vpop.f32.mrb[0].mxu0
        %v929 = vpop.f32.mrb[0].mxu0
        %v930 = vadd.f32 0.0, %v929
        %v931 = vpop.f32.mrb[0].mxu0
        %932 = vmatprep.mubr.bf16.mxu0 0
        %933 = vmatmul.mubr.bf16.gmra.mrb[0].mxu0 %v764
        %v934 = vpop.f32.mrb[0].mxu0
        %v935 = vadd.f32 0.0, %v934
        %v936 = vpop.f32.mrb[0].mxu0
        %v937 = vpop.f32.mrb[0].mxu0
        %v938 = vadd.f32 0.0, %v937
        %v939 = vpop.f32.mrb[0].mxu0
        %940 = vmatprep.mubr.bf16.mxu0 0
        %941 = vmatmul.mubr.bf16.gmra.mrb[0].mxu0 %v765
        %v942 = vpop.f32.mrb[0].mxu0
        %v943 = vadd.f32 0.0, %v942
        %v944 = vpop.f32.mrb[0].mxu0
        %v945 = vpop.f32.mrb[0].mxu0
        %v946 = vadd.f32 0.0, %v945
        %v947 = vpop.f32.mrb[0].mxu0
        %948 = vmatprep.mubr.bf16.mxu0 0
        %949 = vmatmul.mubr.bf16.gmra.mrb[0].mxu0 %v766
        %v950 = vpop.f32.mrb[0].mxu0
        %v951 = vadd.f32 0.0, %v950
        %v952 = vpop.f32.mrb[0].mxu0
        %v953 = vpop.f32.mrb[0].mxu0
        %v954 = vadd.f32 0.0, %v953
        %v955 = vpop.f32.mrb[0].mxu0
        %956 = vmatprep.mubr.bf16.mxu0 0
        %957 = vmatmul.mubr.bf16.gmra.mrb[0].mxu0 %v767
        %v958 = vpop.f32.mrb[0].mxu0
        %v959 = vadd.f32 0.0, %v958
        %v960 = vpop.f32.mrb[0].mxu0
        %v961 = vpop.f32.mrb[0].mxu0
        %v962 = vadd.f32 0.0, %v961
        %v963 = vpop.f32.mrb[0].mxu0
        %964 = vmatprep.mubr.bf16.mxu0 0
        %965 = vmatmul.mubr.bf16.gmra.mrb[0].mxu0 %v768
        %v966 = vpop.f32.mrb[0].mxu0
        %v967 = vadd.f32 0.0, %v966
        %v968 = vpop.f32.mrb[0].mxu0
        %v969 = vpop.f32.mrb[0].mxu0
        %v970 = vadd.f32 0.0, %v969
        %v971 = vpop.f32.mrb[0].mxu0
        %972 = vmatprep.mubr.bf16.mxu0 0
        %973 = vmatmul.mubr.bf16.gmra.mrb[0].mxu0 %v769
        %v974 = vpop.f32.mrb[0].mxu0
        %v975 = vadd.f32 0.0, %v974
        %v976 = vpop.f32.mrb[0].mxu0
        %v977 = vpop.f32.mrb[0].mxu0
        %v978 = vadd.f32 0.0, %v977
        %v979 = vpop.f32.mrb[0].mxu0
        %980 = vmatprep.mubr.bf16.mxu0 0
        %981 = vmatmul.mubr.bf16.gmra.mrb[0].mxu0 %v770
        %v982 = vpop.f32.mrb[0].mxu0
        %v983 = vadd.f32 0.0, %v982
        %v984 = vpop.f32.mrb[0].mxu0
        %v985 = vpop.f32.mrb[0].mxu0
        %v986 = vadd.f32 0.0, %v985
        %v987 = vpop.f32.mrb[0].mxu0
        %988 = vmatprep.mubr.bf16.mxu0 0
        %989 = vmatmul.mubr.bf16.gmra.mrb[0].mxu0 %v771
        %v990 = vpop.f32.mrb[0].mxu0
        %v991 = vadd.f32 0.0, %v990
        %v992 = vpop.f32.mrb[0].mxu0
        %v993 = vpop.f32.mrb[0].mxu0
        %v994 = vadd.f32 0.0, %v993
        %v995 = vpop.f32.mrb[0].mxu0
        %996 = vdwg.mxu0
        %v1029 = vunpack.c.l.b16 %v256
        %v1030 = vunpack.c.l.b16 %v257
        %v1031 = vunpack.c.l.b16 %v258
        %v1032 = vunpack.c.l.b16 %v259
        %v1033 = vunpack.c.l.b16 %v260
        %v1034 = vunpack.c.l.b16 %v261
        %v1035 = vunpack.c.l.b16 %v262
        %v1036 = vunpack.c.l.b16 %v263
        %v1037 = vunpack.c.l.b16 %v264
        %v1038 = vunpack.c.l.b16 %v265
        %v1039 = vunpack.c.l.b16 %v266
        %v1040 = vunpack.c.l.b16 %v267
        %v1041 = vunpack.c.l.b16 %v268
        %v1042 = vunpack.c.l.b16 %v269
        %v1043 = vunpack.c.l.b16 %v270
        %v1044 = vunpack.c.l.b16 %v271
        %v1045 = vunpack.c.l.b16 %v272
        %v1046 = vunpack.c.l.b16 %v273
        %v1047 = vunpack.c.l.b16 %v274
        %v1048 = vunpack.c.l.b16 %v275
        %v1049 = vunpack.c.l.b16 %v276
        %v1050 = vunpack.c.l.b16 %v277
        %v1051 = vunpack.c.l.b16 %v278
        %v1052 = vunpack.c.l.b16 %v279
        %v1053 = vunpack.c.l.b16 %v280
        %v1054 = vunpack.c.l.b16 %v281
        %v1055 = vunpack.c.l.b16 %v282
        %v1056 = vunpack.c.l.b16 %v283
        %v1057 = vunpack.c.l.b16 %v284
        %v1058 = vunpack.c.l.b16 %v285
        %v1059 = vunpack.c.l.b16 %v286
        %v1060 = vunpack.c.l.b16 %v287
        %v1061 = vpack.c.b16 %v1030, %v1029
        %v1062 = vpack.c.b16 %v1032, %v1031
        %v1063 = vpack.c.b16 %v1034, %v1033
        %v1064 = vpack.c.b16 %v1036, %v1035
        %v1065 = vpack.c.b16 %v1038, %v1037
        %v1066 = vpack.c.b16 %v1040, %v1039
        %v1067 = vpack.c.b16 %v1042, %v1041
        %v1068 = vpack.c.b16 %v1044, %v1043
        %v1069 = vpack.c.b16 %v1046, %v1045
        %v1070 = vpack.c.b16 %v1048, %v1047
        %v1071 = vpack.c.b16 %v1050, %v1049
        %v1072 = vpack.c.b16 %v1052, %v1051
        %v1073 = vpack.c.b16 %v1054, %v1053
        %v1074 = vpack.c.b16 %v1056, %v1055
        %v1075 = vpack.c.b16 %v1058, %v1057
        %v1076 = vpack.c.b16 %v1060, %v1059
        %v1109 = vunpack.c.l.b16 %v288
        %v1110 = vunpack.c.l.b16 %v289
        %v1111 = vunpack.c.l.b16 %v290
        %v1112 = vunpack.c.l.b16 %v291
        %v1113 = vunpack.c.l.b16 %v292
        %v1114 = vunpack.c.l.b16 %v293
        %v1115 = vunpack.c.l.b16 %v294
        %v1116 = vunpack.c.l.b16 %v295
        %v1117 = vunpack.c.l.b16 %v296
        %v1118 = vunpack.c.l.b16 %v297
        %v1119 = vunpack.c.l.b16 %v298
        %v1120 = vunpack.c.l.b16 %v299
        %v1121 = vunpack.c.l.b16 %v300
        %v1122 = vunpack.c.l.b16 %v301
        %v1123 = vunpack.c.l.b16 %v302
        %v1124 = vunpack.c.l.b16 %v303
        %v1125 = vpack.c.b16 %v1110, %v1109
        %v1126 = vpack.c.b16 %v1112, %v1111
        %v1127 = vpack.c.b16 %v1114, %v1113
        %v1128 = vpack.c.b16 %v1116, %v1115
        %v1129 = vpack.c.b16 %v1118, %v1117
        %v1130 = vpack.c.b16 %v1120, %v1119
        %v1131 = vpack.c.b16 %v1122, %v1121
        %v1132 = vpack.c.b16 %v1124, %v1123
        %1141 = vmatprep.subr.bf16.mxu0 0
        %1142 = vmatpush1.bf16.msra.mxu0 %v1125
        %1143 = vmatprep.subr.bf16.mxu0 0
        %1144 = vmatpush1.bf16.msra.mxu0 %v1126
        %1145 = vmatprep.subr.bf16.mxu0 0
        %1146 = vmatpush1.bf16.msra.mxu0 %v1127
        %1147 = vmatprep.subr.bf16.mxu0 0
        %1148 = vmatpush1.bf16.msra.mxu0 %v1128
        %1149 = vmatprep.subr.bf16.mxu0 0
        %1150 = vmatpush1.bf16.msra.mxu0 %v1129
        %1151 = vmatprep.subr.bf16.mxu0 0
        %1152 = vmatpush1.bf16.msra.mxu0 %v1130
        %1153 = vmatprep.subr.bf16.mxu0 0
        %1154 = vmatpush1.bf16.msra.mxu0 %v1131
        %1155 = vmatprep.subr.bf16.mxu0 0
        %1156 = vmatpush1.bf16.msra.mxu0 %v1132
        %1157 = vmatprep.subr.bf16.mxu0 0
        %1158 = vmatpush1.bf16.msra.mxu0 0
        %1159 = vmatprep.subr.bf16.mxu0 0
        %1160 = vmatpush1.bf16.msra.mxu0 0
        %1161 = vmatprep.subr.bf16.mxu0 0
        %1162 = vmatpush1.bf16.msra.mxu0 0
        %1163 = vmatprep.subr.bf16.mxu0 0
        %1164 = vmatpush1.bf16.msra.mxu0 0
        %1165 = vmatprep.subr.bf16.mxu0 0
        %1166 = vmatpush1.bf16.msra.mxu0 0
        %1167 = vmatprep.subr.bf16.mxu0 0
        %1168 = vmatpush1.bf16.msra.mxu0 0
        %1169 = vmatprep.subr.bf16.mxu0 0
        %1170 = vmatpush1.bf16.msra.mxu0 0
        %1171 = vmatprep.subr.bf16.mxu0 0
        %1172 = vmatpush1.bf16.msra.mxu0 0
        %1173 = vmatprep.mubr.bf16.mxu0 0
        %1174 = vmatmul.mubr.bf16.gmra.mrb[0].mxu0 %v1061
        %v1175 = vpop.f32.mrb[0].mxu0
        %v1176 = vadd.f32 %v871, %v1175
        %v1177 = vpop.f32.mrb[0].mxu0
        %v1178 = vpop.f32.mrb[0].mxu0
        %v1179 = vadd.f32 %v874, %v1178
        %v1180 = vpop.f32.mrb[0].mxu0
        %1181 = vmatprep.mubr.bf16.mxu0 0
        %1182 = vmatmul.mubr.bf16.gmra.mrb[0].mxu0 %v1062
        %v1183 = vpop.f32.mrb[0].mxu0
        %v1184 = vadd.f32 %v879, %v1183
        %v1185 = vpop.f32.mrb[0].mxu0
        %v1186 = vpop.f32.mrb[0].mxu0
        %v1187 = vadd.f32 %v882, %v1186
        %v1188 = vpop.f32.mrb[0].mxu0
        %1189 = vmatprep.mubr.bf16.mxu0 0
        %1190 = vmatmul.mubr.bf16.gmra.mrb[0].mxu0 %v1063
        %v1191 = vpop.f32.mrb[0].mxu0
        %v1192 = vadd.f32 %v887, %v1191
        %v1193 = vpop.f32.mrb[0].mxu0
        %v1194 = vpop.f32.mrb[0].mxu0
        %v1195 = vadd.f32 %v890, %v1194
        %v1196 = vpop.f32.mrb[0].mxu0
        %1197 = vmatprep.mubr.bf16.mxu0 0
        %1198 = vmatmul.mubr.bf16.gmra.mrb[0].mxu0 %v1064
        %v1199 = vpop.f32.mrb[0].mxu0
        %v1200 = vadd.f32 %v895, %v1199
        %v1201 = vpop.f32.mrb[0].mxu0
        %v1202 = vpop.f32.mrb[0].mxu0
        %v1203 = vadd.f32 %v898, %v1202
        %v1204 = vpop.f32.mrb[0].mxu0
        %1205 = vmatprep.mubr.bf16.mxu0 0
        %1206 = vmatmul.mubr.bf16.gmra.mrb[0].mxu0 %v1065
        %v1207 = vpop.f32.mrb[0].mxu0
        %v1208 = vadd.f32 %v903, %v1207
        %v1209 = vpop.f32.mrb[0].mxu0
        %v1210 = vpop.f32.mrb[0].mxu0
        %v1211 = vadd.f32 %v906, %v1210
        %v1212 = vpop.f32.mrb[0].mxu0
        %1213 = vmatprep.mubr.bf16.mxu0 0
        %1214 = vmatmul.mubr.bf16.gmra.mrb[0].mxu0 %v1066
        %v1215 = vpop.f32.mrb[0].mxu0
        %v1216 = vadd.f32 %v911, %v1215
        %v1217 = vpop.f32.mrb[0].mxu0
        %v1218 = vpop.f32.mrb[0].mxu0
        %v1219 = vadd.f32 %v914, %v1218
        %v1220 = vpop.f32.mrb[0].mxu0
        %1221 = vmatprep.mubr.bf16.mxu0 0
        %1222 = vmatmul.mubr.bf16.gmra.mrb[0].mxu0 %v1067
        %v1223 = vpop.f32.mrb[0].mxu0
        %v1224 = vadd.f32 %v919, %v1223
        %v1225 = vpop.f32.mrb[0].mxu0
        %v1226 = vpop.f32.mrb[0].mxu0
        %v1227 = vadd.f32 %v922, %v1226
        %v1228 = vpop.f32.mrb[0].mxu0
        %1229 = vmatprep.mubr.bf16.mxu0 0
        %1230 = vmatmul.mubr.bf16.gmra.mrb[0].mxu0 %v1068
        %v1231 = vpop.f32.mrb[0].mxu0
        %v1232 = vadd.f32 %v927, %v1231
        %v1233 = vpop.f32.mrb[0].mxu0
        %v1234 = vpop.f32.mrb[0].mxu0
        %v1235 = vadd.f32 %v930, %v1234
        %v1236 = vpop.f32.mrb[0].mxu0
        %1237 = vmatprep.mubr.bf16.mxu0 0
        %1238 = vmatmul.mubr.bf16.gmra.mrb[0].mxu0 %v1069
        %v1239 = vpop.f32.mrb[0].mxu0
        %v1240 = vadd.f32 %v935, %v1239
        %v1241 = vpop.f32.mrb[0].mxu0
        %v1242 = vpop.f32.mrb[0].mxu0
        %v1243 = vadd.f32 %v938, %v1242
        %v1244 = vpop.f32.mrb[0].mxu0
        %1245 = vmatprep.mubr.bf16.mxu0 0
        %1246 = vmatmul.mubr.bf16.gmra.mrb[0].mxu0 %v1070
        %v1247 = vpop.f32.mrb[0].mxu0
        %v1248 = vadd.f32 %v943, %v1247
        %v1249 = vpop.f32.mrb[0].mxu0
        %v1250 = vpop.f32.mrb[0].mxu0
        %v1251 = vadd.f32 %v946, %v1250
        %v1252 = vpop.f32.mrb[0].mxu0
        %1253 = vmatprep.mubr.bf16.mxu0 0
        %1254 = vmatmul.mubr.bf16.gmra.mrb[0].mxu0 %v1071
        %v1255 = vpop.f32.mrb[0].mxu0
        %v1256 = vadd.f32 %v951, %v1255
        %v1257 = vpop.f32.mrb[0].mxu0
        %v1258 = vpop.f32.mrb[0].mxu0
        %v1259 = vadd.f32 %v954, %v1258
        %v1260 = vpop.f32.mrb[0].mxu0
        %1261 = vmatprep.mubr.bf16.mxu0 0
        %1262 = vmatmul.mubr.bf16.gmra.mrb[0].mxu0 %v1072
        %v1263 = vpop.f32.mrb[0].mxu0
        %v1264 = vadd.f32 %v959, %v1263
        %v1265 = vpop.f32.mrb[0].mxu0
        %v1266 = vpop.f32.mrb[0].mxu0
        %v1267 = vadd.f32 %v962, %v1266
        %v1268 = vpop.f32.mrb[0].mxu0
        %1269 = vmatprep.mubr.bf16.mxu0 0
        %1270 = vmatmul.mubr.bf16.gmra.mrb[0].mxu0 %v1073
        %v1271 = vpop.f32.mrb[0].mxu0
        %v1272 = vadd.f32 %v967, %v1271
        %v1273 = vpop.f32.mrb[0].mxu0
        %v1274 = vpop.f32.mrb[0].mxu0
        %v1275 = vadd.f32 %v970, %v1274
        %v1276 = vpop.f32.mrb[0].mxu0
        %1277 = vmatprep.mubr.bf16.mxu0 0
        %1278 = vmatmul.mubr.bf16.gmra.mrb[0].mxu0 %v1074
        %v1279 = vpop.f32.mrb[0].mxu0
        %v1280 = vadd.f32 %v975, %v1279
        %v1281 = vpop.f32.mrb[0].mxu0
        %v1282 = vpop.f32.mrb[0].mxu0
        %v1283 = vadd.f32 %v978, %v1282
        %v1284 = vpop.f32.mrb[0].mxu0
        %1285 = vmatprep.mubr.bf16.mxu0 0
        %1286 = vmatmul.mubr.bf16.gmra.mrb[0].mxu0 %v1075
        %v1287 = vpop.f32.mrb[0].mxu0
        %v1288 = vadd.f32 %v983, %v1287
        %v1289 = vpop.f32.mrb[0].mxu0
        %v1290 = vpop.f32.mrb[0].mxu0
        %v1291 = vadd.f32 %v986, %v1290
        %v1292 = vpop.f32.mrb[0].mxu0
        %1293 = vmatprep.mubr.bf16.mxu0 0
        %1294 = vmatmul.mubr.bf16.gmra.mrb[0].mxu0 %v1076
        %v1295 = vpop.f32.mrb[0].mxu0
        %v1296 = vadd.f32 %v991, %v1295
        %v1297 = vpop.f32.mrb[0].mxu0
        %v1298 = vpop.f32.mrb[0].mxu0
        %v1299 = vadd.f32 %v994, %v1298
        %v1300 = vpop.f32.mrb[0].mxu0
        %1301 = vdwg.mxu0
        %v1302 = vld [vmem:[%s244] sm:$0xe]
        %v1303 = vld [vmem:[%s244 + $0xc] sm:$0xe]
        %v1304 = vld [vmem:[%s244 + $0x18] sm:$0xe]
        %v1305 = vld [vmem:[%s244 + $0x24] sm:$0xe]
        %v1306 = vld [vmem:[%s244 + $0x30] sm:$0xe]
        %v1307 = vld [vmem:[%s244 + $0x3c] sm:$0xe]
        %v1308 = vld [vmem:[%s244 + $0x48] sm:$0xe]
        %v1309 = vld [vmem:[%s244 + $0x54] sm:$0xe]
        %v1310 = vld [vmem:[%s244 + $0x60] sm:$0xe]
        %v1311 = vld [vmem:[%s244 + $0x6c] sm:$0xe]
        %v1312 = vld [vmem:[%s244 + $0x78] sm:$0xe]
        %v1313 = vld [vmem:[%s244 + $0x84] sm:$0xe]
        %v1314 = vld [vmem:[%s244 + $0x90] sm:$0xe]
        %v1315 = vld [vmem:[%s244 + $0x9c] sm:$0xe]
        %v1316 = vld [vmem:[%s244 + $0xa8] sm:$0xe]
        %v1317 = vld [vmem:[%s244 + $0xb4] sm:$0xe]
        %vm1350 = vcmask 1042432
        %vm1351 = vcmask 1046532
        %vm1352 = vmor %vm1350, %vm1351
        %v1353 = vrot.slane %v1302, 5
        %v1354 = vrot.slane %v1353, 4
        %v1355 = vrot.slane %v257, 5
        %v1356 = vsel %vm1352, %v1354, %v1355
        %v1357 = vrot.slane %v1355, 4
        %v1358 = vrot.slane %v304, 5
        %v1359 = vsel %vm1352, %v1357, %v1358
        %v1360 = vrot.slane %v1303, 5
        %v1361 = vrot.slane %v1360, 4
        %v1362 = vrot.slane %v259, 5
        %v1363 = vsel %vm1352, %v1361, %v1362
        %v1364 = vrot.slane %v1362, 4
        %v1365 = vrot.slane %v305, 5
        %v1366 = vsel %vm1352, %v1364, %v1365
        %v1367 = vrot.slane %v1304, 5
        %v1368 = vrot.slane %v1367, 4
        %v1369 = vrot.slane %v261, 5
        %v1370 = vsel %vm1352, %v1368, %v1369
        %v1371 = vrot.slane %v1369, 4
        %v1372 = vrot.slane %v306, 5
        %v1373 = vsel %vm1352, %v1371, %v1372
        %v1374 = vrot.slane %v1305, 5
        %v1375 = vrot.slane %v1374, 4
        %v1376 = vrot.slane %v263, 5
        %v1377 = vsel %vm1352, %v1375, %v1376
        %v1378 = vrot.slane %v1376, 4
        %v1379 = vrot.slane %v307, 5
        %v1380 = vsel %vm1352, %v1378, %v1379
        %v1381 = vrot.slane %v1306, 5
        %v1382 = vrot.slane %v1381, 4
        %v1383 = vrot.slane %v265, 5
        %v1384 = vsel %vm1352, %v1382, %v1383
        %v1385 = vrot.slane %v1383, 4
        %v1386 = vrot.slane %v308, 5
        %v1387 = vsel %vm1352, %v1385, %v1386
        %v1388 = vrot.slane %v1307, 5
        %v1389 = vrot.slane %v1388, 4
        %v1390 = vrot.slane %v267, 5
        %v1391 = vsel %vm1352, %v1389, %v1390
        %v1392 = vrot.slane %v1390, 4
        %v1393 = vrot.slane %v309, 5
        %v1394 = vsel %vm1352, %v1392, %v1393
        %v1395 = vrot.slane %v1308, 5
        %v1396 = vrot.slane %v1395, 4
        %v1397 = vrot.slane %v269, 5
        %v1398 = vsel %vm1352, %v1396, %v1397
        %v1399 = vrot.slane %v1397, 4
        %v1400 = vrot.slane %v310, 5
        %v1401 = vsel %vm1352, %v1399, %v1400
        %v1402 = vrot.slane %v1309, 5
        %v1403 = vrot.slane %v1402, 4
        %v1404 = vrot.slane %v271, 5
        %v1405 = vsel %vm1352, %v1403, %v1404
        %v1406 = vrot.slane %v1404, 4
        %v1407 = vrot.slane %v311, 5
        %v1408 = vsel %vm1352, %v1406, %v1407
        %v1409 = vrot.slane %v1310, 5
        %v1410 = vrot.slane %v1409, 4
        %v1411 = vrot.slane %v273, 5
        %v1412 = vsel %vm1352, %v1410, %v1411
        %v1413 = vrot.slane %v1411, 4
        %v1414 = vrot.slane %v312, 5
        %v1415 = vsel %vm1352, %v1413, %v1414
        %v1416 = vrot.slane %v1311, 5
        %v1417 = vrot.slane %v1416, 4
        %v1418 = vrot.slane %v275, 5
        %v1419 = vsel %vm1352, %v1417, %v1418
        %v1420 = vrot.slane %v1418, 4
        %v1421 = vrot.slane %v313, 5
        %v1422 = vsel %vm1352, %v1420, %v1421
        %v1423 = vrot.slane %v1312, 5
        %v1424 = vrot.slane %v1423, 4
        %v1425 = vrot.slane %v277, 5
        %v1426 = vsel %vm1352, %v1424, %v1425
        %v1427 = vrot.slane %v1425, 4
        %v1428 = vrot.slane %v314, 5
        %v1429 = vsel %vm1352, %v1427, %v1428
        %v1430 = vrot.slane %v1313, 5
        %v1431 = vrot.slane %v1430, 4
        %v1432 = vrot.slane %v279, 5
        %v1433 = vsel %vm1352, %v1431, %v1432
        %v1434 = vrot.slane %v1432, 4
        %v1435 = vrot.slane %v315, 5
        %v1436 = vsel %vm1352, %v1434, %v1435
        %v1437 = vrot.slane %v1314, 5
        %v1438 = vrot.slane %v1437, 4
        %v1439 = vrot.slane %v281, 5
        %v1440 = vsel %vm1352, %v1438, %v1439
        %v1441 = vrot.slane %v1439, 4
        %v1442 = vrot.slane %v316, 5
        %v1443 = vsel %vm1352, %v1441, %v1442
        %v1444 = vrot.slane %v1315, 5
        %v1445 = vrot.slane %v1444, 4
        %v1446 = vrot.slane %v283, 5
        %v1447 = vsel %vm1352, %v1445, %v1446
        %v1448 = vrot.slane %v1446, 4
        %v1449 = vrot.slane %v317, 5
        %v1450 = vsel %vm1352, %v1448, %v1449
        %v1451 = vrot.slane %v1316, 5
        %v1452 = vrot.slane %v1451, 4
        %v1453 = vrot.slane %v285, 5
        %v1454 = vsel %vm1352, %v1452, %v1453
        %v1455 = vrot.slane %v1453, 4
        %v1456 = vrot.slane %v318, 5
        %v1457 = vsel %vm1352, %v1455, %v1456
        %v1458 = vrot.slane %v1317, 5
        %v1459 = vrot.slane %v1458, 4
        %v1460 = vrot.slane %v287, 5
        %v1461 = vsel %vm1352, %v1459, %v1460
        %v1462 = vrot.slane %v1460, 4
        %v1463 = vrot.slane %v319, 5
        %v1464 = vsel %vm1352, %v1462, %v1463
        %s1465 = scalar_lea.vmem %s248, 128
        %v1466 = vld [vmem:[%s1465] sm:$0xf]
        %v1467 = vld [vmem:[%s1465 + $0x4] sm:$0xf]
        %v1468 = vld [vmem:[%s1465 + $0x8] sm:$0xf]
        %v1469 = vld [vmem:[%s1465 + $0xc] sm:$0xf]
        %v1470 = vld [vmem:[%s1465 + $0x10] sm:$0xf]
        %v1471 = vld [vmem:[%s1465 + $0x14] sm:$0xf]
        %v1472 = vld [vmem:[%s1465 + $0x18] sm:$0xf]
        %v1473 = vld [vmem:[%s1465 + $0x1c] sm:$0xf]
        %v1474 = vld [vmem:[%s1465 + $0x20] sm:$0xf]
        %v1475 = vld [vmem:[%s1465 + $0x24] sm:$0xf]
        %v1476 = vld [vmem:[%s1465 + $0x28] sm:$0xf]
        %v1477 = vld [vmem:[%s1465 + $0x2c] sm:$0xf]
        %v1478 = vld [vmem:[%s1465 + $0x30] sm:$0xf]
        %v1479 = vld [vmem:[%s1465 + $0x34] sm:$0xf]
        %v1480 = vld [vmem:[%s1465 + $0x38] sm:$0xf]
        %v1481 = vld [vmem:[%s1465 + $0x3c] sm:$0xf]
        %v1482 = vunpack.c.l.b16 %v1356
        %v1483 = vunpack.c.l.b16 %v1359
        %v1484 = vunpack.c.l.b16 %v1363
        %v1485 = vunpack.c.l.b16 %v1366
        %v1486 = vunpack.c.l.b16 %v1370
        %v1487 = vunpack.c.l.b16 %v1373
        %v1488 = vunpack.c.l.b16 %v1377
        %v1489 = vunpack.c.l.b16 %v1380
        %v1490 = vunpack.c.l.b16 %v1384
        %v1491 = vunpack.c.l.b16 %v1387
        %v1492 = vunpack.c.l.b16 %v1391
        %v1493 = vunpack.c.l.b16 %v1394
        %v1494 = vunpack.c.l.b16 %v1398
        %v1495 = vunpack.c.l.b16 %v1401
        %v1496 = vunpack.c.l.b16 %v1405
        %v1497 = vunpack.c.l.b16 %v1408
        %v1498 = vunpack.c.l.b16 %v1412
        %v1499 = vunpack.c.l.b16 %v1415
        %v1500 = vunpack.c.l.b16 %v1419
        %v1501 = vunpack.c.l.b16 %v1422
        %v1502 = vunpack.c.l.b16 %v1426
        %v1503 = vunpack.c.l.b16 %v1429
        %v1504 = vunpack.c.l.b16 %v1433
        %v1505 = vunpack.c.l.b16 %v1436
        %v1506 = vunpack.c.l.b16 %v1440
        %v1507 = vunpack.c.l.b16 %v1443
        %v1508 = vunpack.c.l.b16 %v1447
        %v1509 = vunpack.c.l.b16 %v1450
        %v1510 = vunpack.c.l.b16 %v1454
        %v1511 = vunpack.c.l.b16 %v1457
        %v1512 = vunpack.c.l.b16 %v1461
        %v1513 = vunpack.c.l.b16 %v1464
        %v1514 = vpack.c.b16 %v1483, %v1482
        %v1515 = vpack.c.b16 %v1485, %v1484
        %v1516 = vpack.c.b16 %v1487, %v1486
        %v1517 = vpack.c.b16 %v1489, %v1488
        %v1518 = vpack.c.b16 %v1491, %v1490
        %v1519 = vpack.c.b16 %v1493, %v1492
        %v1520 = vpack.c.b16 %v1495, %v1494
        %v1521 = vpack.c.b16 %v1497, %v1496
        %v1522 = vpack.c.b16 %v1499, %v1498
        %v1523 = vpack.c.b16 %v1501, %v1500
        %v1524 = vpack.c.b16 %v1503, %v1502
        %v1525 = vpack.c.b16 %v1505, %v1504
        %v1526 = vpack.c.b16 %v1507, %v1506
        %v1527 = vpack.c.b16 %v1509, %v1508
        %v1528 = vpack.c.b16 %v1511, %v1510
        %v1529 = vpack.c.b16 %v1513, %v1512
        %v1562 = vunpack.c.l.b16 %v1466
        %v1563 = vunpack.c.l.b16 %v1467
        %v1564 = vunpack.c.l.b16 %v1468
        %v1565 = vunpack.c.l.b16 %v1469
        %v1566 = vunpack.c.l.b16 %v1470
        %v1567 = vunpack.c.l.b16 %v1471
        %v1568 = vunpack.c.l.b16 %v1472
        %v1569 = vunpack.c.l.b16 %v1473
        %v1570 = vunpack.c.l.b16 %v1474
        %v1571 = vunpack.c.l.b16 %v1475
        %v1572 = vunpack.c.l.b16 %v1476
        %v1573 = vunpack.c.l.b16 %v1477
        %v1574 = vunpack.c.l.b16 %v1478
        %v1575 = vunpack.c.l.b16 %v1479
        %v1576 = vunpack.c.l.b16 %v1480
        %v1577 = vunpack.c.l.b16 %v1481
        %v1578 = vpack.c.b16 %v1563, %v1562
        %v1579 = vpack.c.b16 %v1565, %v1564
        %v1580 = vpack.c.b16 %v1567, %v1566
        %v1581 = vpack.c.b16 %v1569, %v1568
        %v1582 = vpack.c.b16 %v1571, %v1570
        %v1583 = vpack.c.b16 %v1573, %v1572
        %v1584 = vpack.c.b16 %v1575, %v1574
        %v1585 = vpack.c.b16 %v1577, %v1576
        %1594 = vmatprep.subr.bf16.mxu0 0
        %1595 = vmatpush1.bf16.msra.mxu0 %v1578
        %1596 = vmatprep.subr.bf16.mxu0 0
        %1597 = vmatpush1.bf16.msra.mxu0 %v1579
        %1598 = vmatprep.subr.bf16.mxu0 0
        %1599 = vmatpush1.bf16.msra.mxu0 %v1580
        %1600 = vmatprep.subr.bf16.mxu0 0
        %1601 = vmatpush1.bf16.msra.mxu0 %v1581
        %1602 = vmatprep.subr.bf16.mxu0 0
        %1603 = vmatpush1.bf16.msra.mxu0 %v1582
        %1604 = vmatprep.subr.bf16.mxu0 0
        %1605 = vmatpush1.bf16.msra.mxu0 %v1583
        %1606 = vmatprep.subr.bf16.mxu0 0
        %1607 = vmatpush1.bf16.msra.mxu0 %v1584
        %1608 = vmatprep.subr.bf16.mxu0 0
        %1609 = vmatpush1.bf16.msra.mxu0 %v1585
        %1610 = vmatprep.subr.bf16.mxu0 0
        %1611 = vmatpush1.bf16.msra.mxu0 0
        %1612 = vmatprep.subr.bf16.mxu0 0
        %1613 = vmatpush1.bf16.msra.mxu0 0
        %1614 = vmatprep.subr.bf16.mxu0 0
        %1615 = vmatpush1.bf16.msra.mxu0 0
        %1616 = vmatprep.subr.bf16.mxu0 0
        %1617 = vmatpush1.bf16.msra.mxu0 0
        %1618 = vmatprep.subr.bf16.mxu0 0
        %1619 = vmatpush1.bf16.msra.mxu0 0
        %1620 = vmatprep.subr.bf16.mxu0 0
        %1621 = vmatpush1.bf16.msra.mxu0 0
        %1622 = vmatprep.subr.bf16.mxu0 0
        %1623 = vmatpush1.bf16.msra.mxu0 0
        %1624 = vmatprep.subr.bf16.mxu0 0
        %1625 = vmatpush1.bf16.msra.mxu0 0
        %1626 = vmatprep.mubr.bf16.mxu0 0
        %1627 = vmatmul.mubr.bf16.gmra.mrb[0].mxu0 %v1514
        %v1628 = vpop.f32.mrb[0].mxu0
        %v1629 = vadd.f32 0.0, %v1628
        %v1630 = vpop.f32.mrb[0].mxu0
        %v1631 = vpop.f32.mrb[0].mxu0
        %v1632 = vadd.f32 0.0, %v1631
        %v1633 = vpop.f32.mrb[0].mxu0
        %1634 = vmatprep.mubr.bf16.mxu0 0
        %1635 = vmatmul.mubr.bf16.gmra.mrb[0].mxu0 %v1515
        %v1636 = vpop.f32.mrb[0].mxu0
        %v1637 = vadd.f32 0.0, %v1636
        %v1638 = vpop.f32.mrb[0].mxu0
        %v1639 = vpop.f32.mrb[0].mxu0
        %v1640 = vadd.f32 0.0, %v1639
        %v1641 = vpop.f32.mrb[0].mxu0
        %1642 = vmatprep.mubr.bf16.mxu0 0
        %1643 = vmatmul.mubr.bf16.gmra.mrb[0].mxu0 %v1516
        %v1644 = vpop.f32.mrb[0].mxu0
        %v1645 = vadd.f32 0.0, %v1644
        %v1646 = vpop.f32.mrb[0].mxu0
        %v1647 = vpop.f32.mrb[0].mxu0
        %v1648 = vadd.f32 0.0, %v1647
        %v1649 = vpop.f32.mrb[0].mxu0
        %1650 = vmatprep.mubr.bf16.mxu0 0
        %1651 = vmatmul.mubr.bf16.gmra.mrb[0].mxu0 %v1517
        %v1652 = vpop.f32.mrb[0].mxu0
        %v1653 = vadd.f32 0.0, %v1652
        %v1654 = vpop.f32.mrb[0].mxu0
        %v1655 = vpop.f32.mrb[0].mxu0
        %v1656 = vadd.f32 0.0, %v1655
        %v1657 = vpop.f32.mrb[0].mxu0
        %1658 = vmatprep.mubr.bf16.mxu0 0
        %1659 = vmatmul.mubr.bf16.gmra.mrb[0].mxu0 %v1518
        %v1660 = vpop.f32.mrb[0].mxu0
        %v1661 = vadd.f32 0.0, %v1660
        %v1662 = vpop.f32.mrb[0].mxu0
        %v1663 = vpop.f32.mrb[0].mxu0
        %v1664 = vadd.f32 0.0, %v1663
        %v1665 = vpop.f32.mrb[0].mxu0
        %1666 = vmatprep.mubr.bf16.mxu0 0
        %1667 = vmatmul.mubr.bf16.gmra.mrb[0].mxu0 %v1519
        %v1668 = vpop.f32.mrb[0].mxu0
        %v1669 = vadd.f32 0.0, %v1668
        %v1670 = vpop.f32.mrb[0].mxu0
        %v1671 = vpop.f32.mrb[0].mxu0
        %v1672 = vadd.f32 0.0, %v1671
        %v1673 = vpop.f32.mrb[0].mxu0
        %1674 = vmatprep.mubr.bf16.mxu0 0
        %1675 = vmatmul.mubr.bf16.gmra.mrb[0].mxu0 %v1520
        %v1676 = vpop.f32.mrb[0].mxu0
        %v1677 = vadd.f32 0.0, %v1676
        %v1678 = vpop.f32.mrb[0].mxu0
        %v1679 = vpop.f32.mrb[0].mxu0
        %v1680 = vadd.f32 0.0, %v1679
        %v1681 = vpop.f32.mrb[0].mxu0
        %1682 = vmatprep.mubr.bf16.mxu0 0
        %1683 = vmatmul.mubr.bf16.gmra.mrb[0].mxu0 %v1521
        %v1684 = vpop.f32.mrb[0].mxu0
        %v1685 = vadd.f32 0.0, %v1684
        %v1686 = vpop.f32.mrb[0].mxu0
        %v1687 = vpop.f32.mrb[0].mxu0
        %v1688 = vadd.f32 0.0, %v1687
        %v1689 = vpop.f32.mrb[0].mxu0
        %1690 = vmatprep.mubr.bf16.mxu0 0
        %1691 = vmatmul.mubr.bf16.gmra.mrb[0].mxu0 %v1522
        %v1692 = vpop.f32.mrb[0].mxu0
        %v1693 = vadd.f32 0.0, %v1692
        %v1694 = vpop.f32.mrb[0].mxu0
        %v1695 = vpop.f32.mrb[0].mxu0
        %v1696 = vadd.f32 0.0, %v1695
        %v1697 = vpop.f32.mrb[0].mxu0
        %1698 = vmatprep.mubr.bf16.mxu0 0
        %1699 = vmatmul.mubr.bf16.gmra.mrb[0].mxu0 %v1523
        %v1700 = vpop.f32.mrb[0].mxu0
        %v1701 = vadd.f32 0.0, %v1700
        %v1702 = vpop.f32.mrb[0].mxu0
        %v1703 = vpop.f32.mrb[0].mxu0
        %v1704 = vadd.f32 0.0, %v1703
        %v1705 = vpop.f32.mrb[0].mxu0
        %1706 = vmatprep.mubr.bf16.mxu0 0
        %1707 = vmatmul.mubr.bf16.gmra.mrb[0].mxu0 %v1524
        %v1708 = vpop.f32.mrb[0].mxu0
        %v1709 = vadd.f32 0.0, %v1708
        %v1710 = vpop.f32.mrb[0].mxu0
        %v1711 = vpop.f32.mrb[0].mxu0
        %v1712 = vadd.f32 0.0, %v1711
        %v1713 = vpop.f32.mrb[0].mxu0
        %1714 = vmatprep.mubr.bf16.mxu0 0
        %1715 = vmatmul.mubr.bf16.gmra.mrb[0].mxu0 %v1525
        %v1716 = vpop.f32.mrb[0].mxu0
        %v1717 = vadd.f32 0.0, %v1716
        %v1718 = vpop.f32.mrb[0].mxu0
        %v1719 = vpop.f32.mrb[0].mxu0
        %v1720 = vadd.f32 0.0, %v1719
        %v1721 = vpop.f32.mrb[0].mxu0
        %1722 = vmatprep.mubr.bf16.mxu0 0
        %1723 = vmatmul.mubr.bf16.gmra.mrb[0].mxu0 %v1526
        %v1724 = vpop.f32.mrb[0].mxu0
        %v1725 = vadd.f32 0.0, %v1724
        %v1726 = vpop.f32.mrb[0].mxu0
        %v1727 = vpop.f32.mrb[0].mxu0
        %v1728 = vadd.f32 0.0, %v1727
        %v1729 = vpop.f32.mrb[0].mxu0
        %1730 = vmatprep.mubr.bf16.mxu0 0
        %1731 = vmatmul.mubr.bf16.gmra.mrb[0].mxu0 %v1527
        %v1732 = vpop.f32.mrb[0].mxu0
        %v1733 = vadd.f32 0.0, %v1732
        %v1734 = vpop.f32.mrb[0].mxu0
        %v1735 = vpop.f32.mrb[0].mxu0
        %v1736 = vadd.f32 0.0, %v1735
        %v1737 = vpop.f32.mrb[0].mxu0
        %1738 = vmatprep.mubr.bf16.mxu0 0
        %1739 = vmatmul.mubr.bf16.gmra.mrb[0].mxu0 %v1528
        %v1740 = vpop.f32.mrb[0].mxu0
        %v1741 = vadd.f32 0.0, %v1740
        %v1742 = vpop.f32.mrb[0].mxu0
        %v1743 = vpop.f32.mrb[0].mxu0
        %v1744 = vadd.f32 0.0, %v1743
        %v1745 = vpop.f32.mrb[0].mxu0
        %1746 = vmatprep.mubr.bf16.mxu0 0
        %1747 = vmatmul.mubr.bf16.gmra.mrb[0].mxu0 %v1529
        %v1748 = vpop.f32.mrb[0].mxu0
        %v1749 = vadd.f32 0.0, %v1748
        %v1750 = vpop.f32.mrb[0].mxu0
        %v1751 = vpop.f32.mrb[0].mxu0
        %v1752 = vadd.f32 0.0, %v1751
        %v1753 = vpop.f32.mrb[0].mxu0
        %1754 = vdwg.mxu0
        %v1755 = vadd.f32 %v1176, %v1629
        %v1756 = vadd.f32 %v1179, %v1632
        %v1757 = vadd.f32 %v1184, %v1637
        %v1758 = vadd.f32 %v1187, %v1640
        %v1759 = vadd.f32 %v1192, %v1645
        %v1760 = vadd.f32 %v1195, %v1648
        %v1761 = vadd.f32 %v1200, %v1653
        %v1762 = vadd.f32 %v1203, %v1656
        %v1763 = vadd.f32 %v1208, %v1661
        %v1764 = vadd.f32 %v1211, %v1664
        %v1765 = vadd.f32 %v1216, %v1669
        %v1766 = vadd.f32 %v1219, %v1672
        %v1767 = vadd.f32 %v1224, %v1677
        %v1768 = vadd.f32 %v1227, %v1680
        %v1769 = vadd.f32 %v1232, %v1685
        %v1770 = vadd.f32 %v1235, %v1688
        %v1771 = vadd.f32 %v1240, %v1693
        %v1772 = vadd.f32 %v1243, %v1696
        %v1773 = vadd.f32 %v1248, %v1701
        %v1774 = vadd.f32 %v1251, %v1704
        %v1775 = vadd.f32 %v1256, %v1709
        %v1776 = vadd.f32 %v1259, %v1712
        %v1777 = vadd.f32 %v1264, %v1717
        %v1778 = vadd.f32 %v1267, %v1720
        %v1779 = vadd.f32 %v1272, %v1725
        %v1780 = vadd.f32 %v1275, %v1728
        %v1781 = vadd.f32 %v1280, %v1733
        %v1782 = vadd.f32 %v1283, %v1736
        %v1783 = vadd.f32 %v1288, %v1741
        %v1784 = vadd.f32 %v1291, %v1744
        %v1785 = vadd.f32 %v1296, %v1749
        %v1786 = vadd.f32 %v1299, %v1752
        %s1787 = scalar_lea.vmem %s244, 12
        %v1788 = vld [vmem:[%s1787] sm:$0xf]
        %v1789 = vld [vmem:[%s1787 + $0x4] sm:$0xf]
        %v1790 = vld [vmem:[%s1787 + $0xc] sm:$0xf]
        %v1791 = vld [vmem:[%s1787 + $0x10] sm:$0xf]
        %v1792 = vld [vmem:[%s1787 + $0x18] sm:$0xf]
        %v1793 = vld [vmem:[%s1787 + $0x1c] sm:$0xf]
        %v1794 = vld [vmem:[%s1787 + $0x24] sm:$0xf]
        %v1795 = vld [vmem:[%s1787 + $0x28] sm:$0xf]
        %v1796 = vld [vmem:[%s1787 + $0x30] sm:$0xf]
        %v1797 = vld [vmem:[%s1787 + $0x34] sm:$0xf]
        %v1798 = vld [vmem:[%s1787 + $0x3c] sm:$0xf]
        %v1799 = vld [vmem:[%s1787 + $0x40] sm:$0xf]
        %v1800 = vld [vmem:[%s1787 + $0x48] sm:$0xf]
        %v1801 = vld [vmem:[%s1787 + $0x4c] sm:$0xf]
        %v1802 = vld [vmem:[%s1787 + $0x54] sm:$0xf]
        %v1803 = vld [vmem:[%s1787 + $0x58] sm:$0xf]
        %v1804 = vld [vmem:[%s1787 + $0x60] sm:$0xf]
        %v1805 = vld [vmem:[%s1787 + $0x64] sm:$0xf]
        %v1806 = vld [vmem:[%s1787 + $0x6c] sm:$0xf]
        %v1807 = vld [vmem:[%s1787 + $0x70] sm:$0xf]
        %v1808 = vld [vmem:[%s1787 + $0x78] sm:$0xf]
        %v1809 = vld [vmem:[%s1787 + $0x7c] sm:$0xf]
        %v1810 = vld [vmem:[%s1787 + $0x84] sm:$0xf]
        %v1811 = vld [vmem:[%s1787 + $0x88] sm:$0xf]
        %v1812 = vld [vmem:[%s1787 + $0x90] sm:$0xf]
        %v1813 = vld [vmem:[%s1787 + $0x94] sm:$0xf]
        %v1814 = vld [vmem:[%s1787 + $0x9c] sm:$0xf]
        %v1815 = vld [vmem:[%s1787 + $0xa0] sm:$0xf]
        %v1816 = vld [vmem:[%s1787 + $0xa8] sm:$0xf]
        %v1817 = vld [vmem:[%s1787 + $0xac] sm:$0xf]
        %v1818 = vld [vmem:[%s1787 + $0xb4] sm:$0xf]
        %v1819 = vld [vmem:[%s1787 + $0xb8] sm:$0xf]
        %s1820 = scalar_lea.vmem %s248, 192
        %v1821 = vld [vmem:[%s1820] sm:$0xf]
        %v1822 = vld [vmem:[%s1820 + $0x4] sm:$0xf]
        %v1823 = vld [vmem:[%s1820 + $0x8] sm:$0xf]
        %v1824 = vld [vmem:[%s1820 + $0xc] sm:$0xf]
        %v1825 = vld [vmem:[%s1820 + $0x10] sm:$0xf]
        %v1826 = vld [vmem:[%s1820 + $0x14] sm:$0xf]
        %v1827 = vld [vmem:[%s1820 + $0x18] sm:$0xf]
        %v1828 = vld [vmem:[%s1820 + $0x1c] sm:$0xf]
        %v1829 = vld [vmem:[%s1820 + $0x20] sm:$0xf]
        %v1830 = vld [vmem:[%s1820 + $0x24] sm:$0xf]
        %v1831 = vld [vmem:[%s1820 + $0x28] sm:$0xf]
        %v1832 = vld [vmem:[%s1820 + $0x2c] sm:$0xf]
        %v1833 = vld [vmem:[%s1820 + $0x30] sm:$0xf]
        %v1834 = vld [vmem:[%s1820 + $0x34] sm:$0xf]
        %v1835 = vld [vmem:[%s1820 + $0x38] sm:$0xf]
        %v1836 = vld [vmem:[%s1820 + $0x3c] sm:$0xf]
        %v1869 = vunpack.c.l.b16 %v1788
        %v1870 = vunpack.c.l.b16 %v1789
        %v1871 = vunpack.c.l.b16 %v1790
        %v1872 = vunpack.c.l.b16 %v1791
        %v1873 = vunpack.c.l.b16 %v1792
        %v1874 = vunpack.c.l.b16 %v1793
        %v1875 = vunpack.c.l.b16 %v1794
        %v1876 = vunpack.c.l.b16 %v1795
        %v1877 = vunpack.c.l.b16 %v1796
        %v1878 = vunpack.c.l.b16 %v1797
        %v1879 = vunpack.c.l.b16 %v1798
        %v1880 = vunpack.c.l.b16 %v1799
        %v1881 = vunpack.c.l.b16 %v1800
        %v1882 = vunpack.c.l.b16 %v1801
        %v1883 = vunpack.c.l.b16 %v1802
        %v1884 = vunpack.c.l.b16 %v1803
        %v1885 = vunpack.c.l.b16 %v1804
        %v1886 = vunpack.c.l.b16 %v1805
        %v1887 = vunpack.c.l.b16 %v1806
        %v1888 = vunpack.c.l.b16 %v1807
        %v1889 = vunpack.c.l.b16 %v1808
        %v1890 = vunpack.c.l.b16 %v1809
        %v1891 = vunpack.c.l.b16 %v1810
        %v1892 = vunpack.c.l.b16 %v1811
        %v1893 = vunpack.c.l.b16 %v1812
        %v1894 = vunpack.c.l.b16 %v1813
        %v1895 = vunpack.c.l.b16 %v1814
        %v1896 = vunpack.c.l.b16 %v1815
        %v1897 = vunpack.c.l.b16 %v1816
        %v1898 = vunpack.c.l.b16 %v1817
        %v1899 = vunpack.c.l.b16 %v1818
        %v1900 = vunpack.c.l.b16 %v1819
        %v1901 = vpack.c.b16 %v1870, %v1869
        %v1902 = vpack.c.b16 %v1872, %v1871
        %v1903 = vpack.c.b16 %v1874, %v1873
        %v1904 = vpack.c.b16 %v1876, %v1875
        %v1905 = vpack.c.b16 %v1878, %v1877
        %v1906 = vpack.c.b16 %v1880, %v1879
        %v1907 = vpack.c.b16 %v1882, %v1881
        %v1908 = vpack.c.b16 %v1884, %v1883
        %v1909 = vpack.c.b16 %v1886, %v1885
        %v1910 = vpack.c.b16 %v1888, %v1887
        %v1911 = vpack.c.b16 %v1890, %v1889
        %v1912 = vpack.c.b16 %v1892, %v1891
        %v1913 = vpack.c.b16 %v1894, %v1893
        %v1914 = vpack.c.b16 %v1896, %v1895
        %v1915 = vpack.c.b16 %v1898, %v1897
        %v1916 = vpack.c.b16 %v1900, %v1899
        %v1949 = vunpack.c.l.b16 %v1821
        %v1950 = vunpack.c.l.b16 %v1822
        %v1951 = vunpack.c.l.b16 %v1823
        %v1952 = vunpack.c.l.b16 %v1824
        %v1953 = vunpack.c.l.b16 %v1825
        %v1954 = vunpack.c.l.b16 %v1826
        %v1955 = vunpack.c.l.b16 %v1827
        %v1956 = vunpack.c.l.b16 %v1828
        %v1957 = vunpack.c.l.b16 %v1829
        %v1958 = vunpack.c.l.b16 %v1830
        %v1959 = vunpack.c.l.b16 %v1831
        %v1960 = vunpack.c.l.b16 %v1832
        %v1961 = vunpack.c.l.b16 %v1833
        %v1962 = vunpack.c.l.b16 %v1834
        %v1963 = vunpack.c.l.b16 %v1835
        %v1964 = vunpack.c.l.b16 %v1836
        %v1965 = vpack.c.b16 %v1950, %v1949
        %v1966 = vpack.c.b16 %v1952, %v1951
        %v1967 = vpack.c.b16 %v1954, %v1953
        %v1968 = vpack.c.b16 %v1956, %v1955
        %v1969 = vpack.c.b16 %v1958, %v1957
        %v1970 = vpack.c.b16 %v1960, %v1959
        %v1971 = vpack.c.b16 %v1962, %v1961
        %v1972 = vpack.c.b16 %v1964, %v1963
        %1981 = vmatprep.subr.bf16.mxu0 0
        %1982 = vmatpush1.bf16.msra.mxu0 %v1965
        %1983 = vmatprep.subr.bf16.mxu0 0
        %1984 = vmatpush1.bf16.msra.mxu0 %v1966
        %1985 = vmatprep.subr.bf16.mxu0 0
        %1986 = vmatpush1.bf16.msra.mxu0 %v1967
        %1987 = vmatprep.subr.bf16.mxu0 0
        %1988 = vmatpush1.bf16.msra.mxu0 %v1968
        %1989 = vmatprep.subr.bf16.mxu0 0
        %1990 = vmatpush1.bf16.msra.mxu0 %v1969
        %1991 = vmatprep.subr.bf16.mxu0 0
        %1992 = vmatpush1.bf16.msra.mxu0 %v1970
        %1993 = vmatprep.subr.bf16.mxu0 0
        %1994 = vmatpush1.bf16.msra.mxu0 %v1971
        %1995 = vmatprep.subr.bf16.mxu0 0
        %1996 = vmatpush1.bf16.msra.mxu0 %v1972
        %1997 = vmatprep.subr.bf16.mxu0 0
        %1998 = vmatpush1.bf16.msra.mxu0 0
        %1999 = vmatprep.subr.bf16.mxu0 0
        %2000 = vmatpush1.bf16.msra.mxu0 0
        %2001 = vmatprep.subr.bf16.mxu0 0
        %2002 = vmatpush1.bf16.msra.mxu0 0
        %2003 = vmatprep.subr.bf16.mxu0 0
        %2004 = vmatpush1.bf16.msra.mxu0 0
        %2005 = vmatprep.subr.bf16.mxu0 0
        %2006 = vmatpush1.bf16.msra.mxu0 0
        %2007 = vmatprep.subr.bf16.mxu0 0
        %2008 = vmatpush1.bf16.msra.mxu0 0
        %2009 = vmatprep.subr.bf16.mxu0 0
        %2010 = vmatpush1.bf16.msra.mxu0 0
        %2011 = vmatprep.subr.bf16.mxu0 0
        %2012 = vmatpush1.bf16.msra.mxu0 0
        %2013 = vmatprep.mubr.bf16.mxu0 0
        %2014 = vmatmul.mubr.bf16.gmra.mrb[0].mxu0 %v1901
        %v2015 = vpop.f32.mrb[0].mxu0
        %v2016 = vadd.f32 0.0, %v2015
        %v2017 = vpop.f32.mrb[0].mxu0
        %v2018 = vpop.f32.mrb[0].mxu0
        %v2019 = vadd.f32 0.0, %v2018
        %v2020 = vpop.f32.mrb[0].mxu0
        %2021 = vmatprep.mubr.bf16.mxu0 0
        %2022 = vmatmul.mubr.bf16.gmra.mrb[0].mxu0 %v1902
        %v2023 = vpop.f32.mrb[0].mxu0
        %v2024 = vadd.f32 0.0, %v2023
        %v2025 = vpop.f32.mrb[0].mxu0
        %v2026 = vpop.f32.mrb[0].mxu0
        %v2027 = vadd.f32 0.0, %v2026
        %v2028 = vpop.f32.mrb[0].mxu0
        %2029 = vmatprep.mubr.bf16.mxu0 0
        %2030 = vmatmul.mubr.bf16.gmra.mrb[0].mxu0 %v1903
        %v2031 = vpop.f32.mrb[0].mxu0
        %v2032 = vadd.f32 0.0, %v2031
        %v2033 = vpop.f32.mrb[0].mxu0
        %v2034 = vpop.f32.mrb[0].mxu0
        %v2035 = vadd.f32 0.0, %v2034
        %v2036 = vpop.f32.mrb[0].mxu0
        %2037 = vmatprep.mubr.bf16.mxu0 0
        %2038 = vmatmul.mubr.bf16.gmra.mrb[0].mxu0 %v1904
        %v2039 = vpop.f32.mrb[0].mxu0
        %v2040 = vadd.f32 0.0, %v2039
        %v2041 = vpop.f32.mrb[0].mxu0
        %v2042 = vpop.f32.mrb[0].mxu0
        %v2043 = vadd.f32 0.0, %v2042
        %v2044 = vpop.f32.mrb[0].mxu0
        %2045 = vmatprep.mubr.bf16.mxu0 0
        %2046 = vmatmul.mubr.bf16.gmra.mrb[0].mxu0 %v1905
        %v2047 = vpop.f32.mrb[0].mxu0
        %v2048 = vadd.f32 0.0, %v2047
        %v2049 = vpop.f32.mrb[0].mxu0
        %v2050 = vpop.f32.mrb[0].mxu0
        %v2051 = vadd.f32 0.0, %v2050
        %v2052 = vpop.f32.mrb[0].mxu0
        %2053 = vmatprep.mubr.bf16.mxu0 0
        %2054 = vmatmul.mubr.bf16.gmra.mrb[0].mxu0 %v1906
        %v2055 = vpop.f32.mrb[0].mxu0
        %v2056 = vadd.f32 0.0, %v2055
        %v2057 = vpop.f32.mrb[0].mxu0
        %v2058 = vpop.f32.mrb[0].mxu0
        %v2059 = vadd.f32 0.0, %v2058
        %v2060 = vpop.f32.mrb[0].mxu0
        %2061 = vmatprep.mubr.bf16.mxu0 0
        %2062 = vmatmul.mubr.bf16.gmra.mrb[0].mxu0 %v1907
        %v2063 = vpop.f32.mrb[0].mxu0
        %v2064 = vadd.f32 0.0, %v2063
        %v2065 = vpop.f32.mrb[0].mxu0
        %v2066 = vpop.f32.mrb[0].mxu0
        %v2067 = vadd.f32 0.0, %v2066
        %v2068 = vpop.f32.mrb[0].mxu0
        %2069 = vmatprep.mubr.bf16.mxu0 0
        %2070 = vmatmul.mubr.bf16.gmra.mrb[0].mxu0 %v1908
        %v2071 = vpop.f32.mrb[0].mxu0
        %v2072 = vadd.f32 0.0, %v2071
        %v2073 = vpop.f32.mrb[0].mxu0
        %v2074 = vpop.f32.mrb[0].mxu0
        %v2075 = vadd.f32 0.0, %v2074
        %v2076 = vpop.f32.mrb[0].mxu0
        %2077 = vmatprep.mubr.bf16.mxu0 0
        %2078 = vmatmul.mubr.bf16.gmra.mrb[0].mxu0 %v1909
        %v2079 = vpop.f32.mrb[0].mxu0
        %v2080 = vadd.f32 0.0, %v2079
        %v2081 = vpop.f32.mrb[0].mxu0
        %v2082 = vpop.f32.mrb[0].mxu0
        %v2083 = vadd.f32 0.0, %v2082
        %v2084 = vpop.f32.mrb[0].mxu0
        %2085 = vmatprep.mubr.bf16.mxu0 0
        %2086 = vmatmul.mubr.bf16.gmra.mrb[0].mxu0 %v1910
        %v2087 = vpop.f32.mrb[0].mxu0
        %v2088 = vadd.f32 0.0, %v2087
        %v2089 = vpop.f32.mrb[0].mxu0
        %v2090 = vpop.f32.mrb[0].mxu0
        %v2091 = vadd.f32 0.0, %v2090
        %v2092 = vpop.f32.mrb[0].mxu0
        %2093 = vmatprep.mubr.bf16.mxu0 0
        %2094 = vmatmul.mubr.bf16.gmra.mrb[0].mxu0 %v1911
        %v2095 = vpop.f32.mrb[0].mxu0
        %v2096 = vadd.f32 0.0, %v2095
        %v2097 = vpop.f32.mrb[0].mxu0
        %v2098 = vpop.f32.mrb[0].mxu0
        %v2099 = vadd.f32 0.0, %v2098
        %v2100 = vpop.f32.mrb[0].mxu0
        %2101 = vmatprep.mubr.bf16.mxu0 0
        %2102 = vmatmul.mubr.bf16.gmra.mrb[0].mxu0 %v1912
        %v2103 = vpop.f32.mrb[0].mxu0
        %v2104 = vadd.f32 0.0, %v2103
        %v2105 = vpop.f32.mrb[0].mxu0
        %v2106 = vpop.f32.mrb[0].mxu0
        %v2107 = vadd.f32 0.0, %v2106
        %v2108 = vpop.f32.mrb[0].mxu0
        %2109 = vmatprep.mubr.bf16.mxu0 0
        %2110 = vmatmul.mubr.bf16.gmra.mrb[0].mxu0 %v1913
        %v2111 = vpop.f32.mrb[0].mxu0
        %v2112 = vadd.f32 0.0, %v2111
        %v2113 = vpop.f32.mrb[0].mxu0
        %v2114 = vpop.f32.mrb[0].mxu0
        %v2115 = vadd.f32 0.0, %v2114
        %v2116 = vpop.f32.mrb[0].mxu0
        %2117 = vmatprep.mubr.bf16.mxu0 0
        %2118 = vmatmul.mubr.bf16.gmra.mrb[0].mxu0 %v1914
        %v2119 = vpop.f32.mrb[0].mxu0
        %v2120 = vadd.f32 0.0, %v2119
        %v2121 = vpop.f32.mrb[0].mxu0
        %v2122 = vpop.f32.mrb[0].mxu0
        %v2123 = vadd.f32 0.0, %v2122
        %v2124 = vpop.f32.mrb[0].mxu0
        %2125 = vmatprep.mubr.bf16.mxu0 0
        %2126 = vmatmul.mubr.bf16.gmra.mrb[0].mxu0 %v1915
        %v2127 = vpop.f32.mrb[0].mxu0
        %v2128 = vadd.f32 0.0, %v2127
        %v2129 = vpop.f32.mrb[0].mxu0
        %v2130 = vpop.f32.mrb[0].mxu0
        %v2131 = vadd.f32 0.0, %v2130
        %v2132 = vpop.f32.mrb[0].mxu0
        %2133 = vmatprep.mubr.bf16.mxu0 0
        %2134 = vmatmul.mubr.bf16.gmra.mrb[0].mxu0 %v1916
        %v2135 = vpop.f32.mrb[0].mxu0
        %v2136 = vadd.f32 0.0, %v2135
        %v2137 = vpop.f32.mrb[0].mxu0
        %v2138 = vpop.f32.mrb[0].mxu0
        %v2139 = vadd.f32 0.0, %v2138
        %v2140 = vpop.f32.mrb[0].mxu0
        %2141 = vdwg.mxu0
        %v2142 = vadd.f32 %v1755, %v2016
        %v2143 = vadd.f32 %v1756, %v2019
        %v2144 = vadd.f32 %v1757, %v2024
        %v2145 = vadd.f32 %v1758, %v2027
        %v2146 = vadd.f32 %v1759, %v2032
        %v2147 = vadd.f32 %v1760, %v2035
        %v2148 = vadd.f32 %v1761, %v2040
        %v2149 = vadd.f32 %v1762, %v2043
        %v2150 = vadd.f32 %v1763, %v2048
        %v2151 = vadd.f32 %v1764, %v2051
        %v2152 = vadd.f32 %v1765, %v2056
        %v2153 = vadd.f32 %v1766, %v2059
        %v2154 = vadd.f32 %v1767, %v2064
        %v2155 = vadd.f32 %v1768, %v2067
        %v2156 = vadd.f32 %v1769, %v2072
        %v2157 = vadd.f32 %v1770, %v2075
        %v2158 = vadd.f32 %v1771, %v2080
        %v2159 = vadd.f32 %v1772, %v2083
        %v2160 = vadd.f32 %v1773, %v2088
        %v2161 = vadd.f32 %v1774, %v2091
        %v2162 = vadd.f32 %v1775, %v2096
        %v2163 = vadd.f32 %v1776, %v2099
        %v2164 = vadd.f32 %v1777, %v2104
        %v2165 = vadd.f32 %v1778, %v2107
        %v2166 = vadd.f32 %v1779, %v2112
        %v2167 = vadd.f32 %v1780, %v2115
        %v2168 = vadd.f32 %v1781, %v2120
        %v2169 = vadd.f32 %v1782, %v2123
        %v2170 = vadd.f32 %v1783, %v2128
        %v2171 = vadd.f32 %v1784, %v2131
        %v2172 = vadd.f32 %v1785, %v2136
        %v2173 = vadd.f32 %v1786, %v2139
        %v2174 = vld [vmem:[%s1787] sm:$0xf]
        %v2175 = vld [vmem:[%s1787 + $0x4] sm:$0xf]
        %v2176 = vld [vmem:[%s1787 + $0x8] sm:$0x1]
        %v2177 = vld [vmem:[%s1787 + $0xc] sm:$0xf]
        %v2178 = vld [vmem:[%s1787 + $0x10] sm:$0xf]
        %v2179 = vld [vmem:[%s1787 + $0x14] sm:$0x1]
        %v2180 = vld [vmem:[%s1787 + $0x18] sm:$0xf]
        %v2181 = vld [vmem:[%s1787 + $0x1c] sm:$0xf]
        %v2182 = vld [vmem:[%s1787 + $0x20] sm:$0x1]
        %v2183 = vld [vmem:[%s1787 + $0x24] sm:$0xf]
        %v2184 = vld [vmem:[%s1787 + $0x28] sm:$0xf]
        %v2185 = vld [vmem:[%s1787 + $0x2c] sm:$0x1]
        %v2186 = vld [vmem:[%s1787 + $0x30] sm:$0xf]
        %v2187 = vld [vmem:[%s1787 + $0x34] sm:$0xf]
        %v2188 = vld [vmem:[%s1787 + $0x38] sm:$0x1]
        %v2189 = vld [vmem:[%s1787 + $0x3c] sm:$0xf]
        %v2190 = vld [vmem:[%s1787 + $0x40] sm:$0xf]
        %v2191 = vld [vmem:[%s1787 + $0x44] sm:$0x1]
        %v2192 = vld [vmem:[%s1787 + $0x48] sm:$0xf]
        %v2193 = vld [vmem:[%s1787 + $0x4c] sm:$0xf]
        %v2194 = vld [vmem:[%s1787 + $0x50] sm:$0x1]
        %v2195 = vld [vmem:[%s1787 + $0x54] sm:$0xf]
        %v2196 = vld [vmem:[%s1787 + $0x58] sm:$0xf]
        %v2197 = vld [vmem:[%s1787 + $0x5c] sm:$0x1]
        %v2198 = vld [vmem:[%s1787 + $0x60] sm:$0xf]
        %v2199 = vld [vmem:[%s1787 + $0x64] sm:$0xf]
        %v2200 = vld [vmem:[%s1787 + $0x68] sm:$0x1]
        %v2201 = vld [vmem:[%s1787 + $0x6c] sm:$0xf]
        %v2202 = vld [vmem:[%s1787 + $0x70] sm:$0xf]
        %v2203 = vld [vmem:[%s1787 + $0x74] sm:$0x1]
        %v2204 = vld [vmem:[%s1787 + $0x78] sm:$0xf]
        %v2205 = vld [vmem:[%s1787 + $0x7c] sm:$0xf]
        %v2206 = vld [vmem:[%s1787 + $0x80] sm:$0x1]
        %v2207 = vld [vmem:[%s1787 + $0x84] sm:$0xf]
        %v2208 = vld [vmem:[%s1787 + $0x88] sm:$0xf]
        %v2209 = vld [vmem:[%s1787 + $0x8c] sm:$0x1]
        %v2210 = vld [vmem:[%s1787 + $0x90] sm:$0xf]
        %v2211 = vld [vmem:[%s1787 + $0x94] sm:$0xf]
        %v2212 = vld [vmem:[%s1787 + $0x98] sm:$0x1]
        %v2213 = vld [vmem:[%s1787 + $0x9c] sm:$0xf]
        %v2214 = vld [vmem:[%s1787 + $0xa0] sm:$0xf]
        %v2215 = vld [vmem:[%s1787 + $0xa4] sm:$0x1]
        %v2216 = vld [vmem:[%s1787 + $0xa8] sm:$0xf]
        %v2217 = vld [vmem:[%s1787 + $0xac] sm:$0xf]
        %v2218 = vld [vmem:[%s1787 + $0xb0] sm:$0x1]
        %v2219 = vld [vmem:[%s1787 + $0xb4] sm:$0xf]
        %v2220 = vld [vmem:[%s1787 + $0xb8] sm:$0xf]
        %v2221 = vld [vmem:[%s1787 + $0xbc] sm:$0x1]
        %v2223 = vshrl.u32 %v2174, 16
        %v2225 = vrot.slane %v2223, 4
        %v2226 = vshll.u32 %v2174, 16
        %v2228 = vrot.slane %v2226, 5
        %v2229 = vor.u32 %v2225, %v2228
        %v2230 = vrot.slane %v2229, 4
        %v2232 = vshll.u32 %v2175, 16
        %v2234 = vrot.slane %v2232, 5
        %v2235 = vsel %vm322, %v2230, %v2234
        %v2236 = vshrl.u32 %v2175, 16
        %v2238 = vrot.slane %v2236, 4
        %v2239 = vor.u32 %v2238, %v2234
        %v2240 = vrot.slane %v2239, 4
        %v2242 = vshll.u32 %v2176, 16
        %v2244 = vrot.slane %v2242, 5
        %v2245 = vsel %vm322, %v2240, %v2244
        %v2247 = vshrl.u32 %v2177, 16
        %v2249 = vrot.slane %v2247, 4
        %v2250 = vshll.u32 %v2177, 16
        %v2252 = vrot.slane %v2250, 5
        %v2253 = vor.u32 %v2249, %v2252
        %v2254 = vrot.slane %v2253, 4
        %v2256 = vshll.u32 %v2178, 16
        %v2258 = vrot.slane %v2256, 5
        %v2259 = vsel %vm322, %v2254, %v2258
        %v2260 = vshrl.u32 %v2178, 16
        %v2262 = vrot.slane %v2260, 4
        %v2263 = vor.u32 %v2262, %v2258
        %v2264 = vrot.slane %v2263, 4
        %v2266 = vshll.u32 %v2179, 16
        %v2268 = vrot.slane %v2266, 5
        %v2269 = vsel %vm322, %v2264, %v2268
        %v2271 = vshrl.u32 %v2180, 16
        %v2273 = vrot.slane %v2271, 4
        %v2274 = vshll.u32 %v2180, 16
        %v2276 = vrot.slane %v2274, 5
        %v2277 = vor.u32 %v2273, %v2276
        %v2278 = vrot.slane %v2277, 4
        %v2280 = vshll.u32 %v2181, 16
        %v2282 = vrot.slane %v2280, 5
        %v2283 = vsel %vm322, %v2278, %v2282
        %v2284 = vshrl.u32 %v2181, 16
        %v2286 = vrot.slane %v2284, 4
        %v2287 = vor.u32 %v2286, %v2282
        %v2288 = vrot.slane %v2287, 4
        %v2290 = vshll.u32 %v2182, 16
        %v2292 = vrot.slane %v2290, 5
        %v2293 = vsel %vm322, %v2288, %v2292
        %v2295 = vshrl.u32 %v2183, 16
        %v2297 = vrot.slane %v2295, 4
        %v2298 = vshll.u32 %v2183, 16
        %v2300 = vrot.slane %v2298, 5
        %v2301 = vor.u32 %v2297, %v2300
        %v2302 = vrot.slane %v2301, 4
        %v2304 = vshll.u32 %v2184, 16
        %v2306 = vrot.slane %v2304, 5
        %v2307 = vsel %vm322, %v2302, %v2306
        %v2308 = vshrl.u32 %v2184, 16
        %v2310 = vrot.slane %v2308, 4
        %v2311 = vor.u32 %v2310, %v2306
        %v2312 = vrot.slane %v2311, 4
        %v2314 = vshll.u32 %v2185, 16
        %v2316 = vrot.slane %v2314, 5
        %v2317 = vsel %vm322, %v2312, %v2316
        %v2319 = vshrl.u32 %v2186, 16
        %v2321 = vrot.slane %v2319, 4
        %v2322 = vshll.u32 %v2186, 16
        %v2324 = vrot.slane %v2322, 5
        %v2325 = vor.u32 %v2321, %v2324
        %v2326 = vrot.slane %v2325, 4
        %v2328 = vshll.u32 %v2187, 16
        %v2330 = vrot.slane %v2328, 5
        %v2331 = vsel %vm322, %v2326, %v2330
        %v2332 = vshrl.u32 %v2187, 16
        %v2334 = vrot.slane %v2332, 4
        %v2335 = vor.u32 %v2334, %v2330
        %v2336 = vrot.slane %v2335, 4
        %v2338 = vshll.u32 %v2188, 16
        %v2340 = vrot.slane %v2338, 5
        %v2341 = vsel %vm322, %v2336, %v2340
        %v2343 = vshrl.u32 %v2189, 16
        %v2345 = vrot.slane %v2343, 4
        %v2346 = vshll.u32 %v2189, 16
        %v2348 = vrot.slane %v2346, 5
        %v2349 = vor.u32 %v2345, %v2348
        %v2350 = vrot.slane %v2349, 4
        %v2352 = vshll.u32 %v2190, 16
        %v2354 = vrot.slane %v2352, 5
        %v2355 = vsel %vm322, %v2350, %v2354
        %v2356 = vshrl.u32 %v2190, 16
        %v2358 = vrot.slane %v2356, 4
        %v2359 = vor.u32 %v2358, %v2354
        %v2360 = vrot.slane %v2359, 4
        %v2362 = vshll.u32 %v2191, 16
        %v2364 = vrot.slane %v2362, 5
        %v2365 = vsel %vm322, %v2360, %v2364
        %v2367 = vshrl.u32 %v2192, 16
        %v2369 = vrot.slane %v2367, 4
        %v2370 = vshll.u32 %v2192, 16
        %v2372 = vrot.slane %v2370, 5
        %v2373 = vor.u32 %v2369, %v2372
        %v2374 = vrot.slane %v2373, 4
        %v2376 = vshll.u32 %v2193, 16
        %v2378 = vrot.slane %v2376, 5
        %v2379 = vsel %vm322, %v2374, %v2378
        %v2380 = vshrl.u32 %v2193, 16
        %v2382 = vrot.slane %v2380, 4
        %v2383 = vor.u32 %v2382, %v2378
        %v2384 = vrot.slane %v2383, 4
        %v2386 = vshll.u32 %v2194, 16
        %v2388 = vrot.slane %v2386, 5
        %v2389 = vsel %vm322, %v2384, %v2388
        %v2391 = vshrl.u32 %v2195, 16
        %v2393 = vrot.slane %v2391, 4
        %v2394 = vshll.u32 %v2195, 16
        %v2396 = vrot.slane %v2394, 5
        %v2397 = vor.u32 %v2393, %v2396
        %v2398 = vrot.slane %v2397, 4
        %v2400 = vshll.u32 %v2196, 16
        %v2402 = vrot.slane %v2400, 5
        %v2403 = vsel %vm322, %v2398, %v2402
        %v2404 = vshrl.u32 %v2196, 16
        %v2406 = vrot.slane %v2404, 4
        %v2407 = vor.u32 %v2406, %v2402
        %v2408 = vrot.slane %v2407, 4
        %v2410 = vshll.u32 %v2197, 16
        %v2412 = vrot.slane %v2410, 5
        %v2413 = vsel %vm322, %v2408, %v2412
        %v2415 = vshrl.u32 %v2198, 16
        %v2417 = vrot.slane %v2415, 4
        %v2418 = vshll.u32 %v2198, 16
        %v2420 = vrot.slane %v2418, 5
        %v2421 = vor.u32 %v2417, %v2420
        %v2422 = vrot.slane %v2421, 4
        %v2424 = vshll.u32 %v2199, 16
        %v2426 = vrot.slane %v2424, 5
        %v2427 = vsel %vm322, %v2422, %v2426
        %v2428 = vshrl.u32 %v2199, 16
        %v2430 = vrot.slane %v2428, 4
        %v2431 = vor.u32 %v2430, %v2426
        %v2432 = vrot.slane %v2431, 4
        %v2434 = vshll.u32 %v2200, 16
        %v2436 = vrot.slane %v2434, 5
        %v2437 = vsel %vm322, %v2432, %v2436
        %v2439 = vshrl.u32 %v2201, 16
        %v2441 = vrot.slane %v2439, 4
        %v2442 = vshll.u32 %v2201, 16
        %v2444 = vrot.slane %v2442, 5
        %v2445 = vor.u32 %v2441, %v2444
        %v2446 = vrot.slane %v2445, 4
        %v2448 = vshll.u32 %v2202, 16
        %v2450 = vrot.slane %v2448, 5
        %v2451 = vsel %vm322, %v2446, %v2450
        %v2452 = vshrl.u32 %v2202, 16
        %v2454 = vrot.slane %v2452, 4
        %v2455 = vor.u32 %v2454, %v2450
        %v2456 = vrot.slane %v2455, 4
        %v2458 = vshll.u32 %v2203, 16
        %v2460 = vrot.slane %v2458, 5
        %v2461 = vsel %vm322, %v2456, %v2460
        %v2463 = vshrl.u32 %v2204, 16
        %v2465 = vrot.slane %v2463, 4
        %v2466 = vshll.u32 %v2204, 16
        %v2468 = vrot.slane %v2466, 5
        %v2469 = vor.u32 %v2465, %v2468
        %v2470 = vrot.slane %v2469, 4
        %v2472 = vshll.u32 %v2205, 16
        %v2474 = vrot.slane %v2472, 5
        %v2475 = vsel %vm322, %v2470, %v2474
        %v2476 = vshrl.u32 %v2205, 16
        %v2478 = vrot.slane %v2476, 4
        %v2479 = vor.u32 %v2478, %v2474
        %v2480 = vrot.slane %v2479, 4
        %v2482 = vshll.u32 %v2206, 16
        %v2484 = vrot.slane %v2482, 5
        %v2485 = vsel %vm322, %v2480, %v2484
        %v2487 = vshrl.u32 %v2207, 16
        %v2489 = vrot.slane %v2487, 4
        %v2490 = vshll.u32 %v2207, 16
        %v2492 = vrot.slane %v2490, 5
        %v2493 = vor.u32 %v2489, %v2492
        %v2494 = vrot.slane %v2493, 4
        %v2496 = vshll.u32 %v2208, 16
        %v2498 = vrot.slane %v2496, 5
        %v2499 = vsel %vm322, %v2494, %v2498
        %v2500 = vshrl.u32 %v2208, 16
        %v2502 = vrot.slane %v2500, 4
        %v2503 = vor.u32 %v2502, %v2498
        %v2504 = vrot.slane %v2503, 4
        %v2506 = vshll.u32 %v2209, 16
        %v2508 = vrot.slane %v2506, 5
        %v2509 = vsel %vm322, %v2504, %v2508
        %v2511 = vshrl.u32 %v2210, 16
        %v2513 = vrot.slane %v2511, 4
        %v2514 = vshll.u32 %v2210, 16
        %v2516 = vrot.slane %v2514, 5
        %v2517 = vor.u32 %v2513, %v2516
        %v2518 = vrot.slane %v2517, 4
        %v2520 = vshll.u32 %v2211, 16
        %v2522 = vrot.slane %v2520, 5
        %v2523 = vsel %vm322, %v2518, %v2522
        %v2524 = vshrl.u32 %v2211, 16
        %v2526 = vrot.slane %v2524, 4
        %v2527 = vor.u32 %v2526, %v2522
        %v2528 = vrot.slane %v2527, 4
        %v2530 = vshll.u32 %v2212, 16
        %v2532 = vrot.slane %v2530, 5
        %v2533 = vsel %vm322, %v2528, %v2532
        %v2535 = vshrl.u32 %v2213, 16
        %v2537 = vrot.slane %v2535, 4
        %v2538 = vshll.u32 %v2213, 16
        %v2540 = vrot.slane %v2538, 5
        %v2541 = vor.u32 %v2537, %v2540
        %v2542 = vrot.slane %v2541, 4
        %v2544 = vshll.u32 %v2214, 16
        %v2546 = vrot.slane %v2544, 5
        %v2547 = vsel %vm322, %v2542, %v2546
        %v2548 = vshrl.u32 %v2214, 16
        %v2550 = vrot.slane %v2548, 4
        %v2551 = vor.u32 %v2550, %v2546
        %v2552 = vrot.slane %v2551, 4
        %v2554 = vshll.u32 %v2215, 16
        %v2556 = vrot.slane %v2554, 5
        %v2557 = vsel %vm322, %v2552, %v2556
        %v2559 = vshrl.u32 %v2216, 16
        %v2561 = vrot.slane %v2559, 4
        %v2562 = vshll.u32 %v2216, 16
        %v2564 = vrot.slane %v2562, 5
        %v2565 = vor.u32 %v2561, %v2564
        %v2566 = vrot.slane %v2565, 4
        %v2568 = vshll.u32 %v2217, 16
        %v2570 = vrot.slane %v2568, 5
        %v2571 = vsel %vm322, %v2566, %v2570
        %v2572 = vshrl.u32 %v2217, 16
        %v2574 = vrot.slane %v2572, 4
        %v2575 = vor.u32 %v2574, %v2570
        %v2576 = vrot.slane %v2575, 4
        %v2578 = vshll.u32 %v2218, 16
        %v2580 = vrot.slane %v2578, 5
        %v2581 = vsel %vm322, %v2576, %v2580
        %v2583 = vshrl.u32 %v2219, 16
        %v2585 = vrot.slane %v2583, 4
        %v2586 = vshll.u32 %v2219, 16
        %v2588 = vrot.slane %v2586, 5
        %v2589 = vor.u32 %v2585, %v2588
        %v2590 = vrot.slane %v2589, 4
        %v2592 = vshll.u32 %v2220, 16
        %v2594 = vrot.slane %v2592, 5
        %v2595 = vsel %vm322, %v2590, %v2594
        %v2596 = vshrl.u32 %v2220, 16
        %v2598 = vrot.slane %v2596, 4
        %v2599 = vor.u32 %v2598, %v2594
        %v2600 = vrot.slane %v2599, 4
        %v2602 = vshll.u32 %v2221, 16
        %v2604 = vrot.slane %v2602, 5
        %v2605 = vsel %vm322, %v2600, %v2604
        %s2606 = scalar_lea.vmem %s248, 256
        %v2607 = vld [vmem:[%s2606] sm:$0xf]
        %v2608 = vld [vmem:[%s2606 + $0x4] sm:$0xf]
        %v2609 = vld [vmem:[%s2606 + $0x8] sm:$0xf]
        %v2610 = vld [vmem:[%s2606 + $0xc] sm:$0xf]
        %v2611 = vld [vmem:[%s2606 + $0x10] sm:$0xf]
        %v2612 = vld [vmem:[%s2606 + $0x14] sm:$0xf]
        %v2613 = vld [vmem:[%s2606 + $0x18] sm:$0xf]
        %v2614 = vld [vmem:[%s2606 + $0x1c] sm:$0xf]
        %v2615 = vld [vmem:[%s2606 + $0x20] sm:$0xf]
        %v2616 = vld [vmem:[%s2606 + $0x24] sm:$0xf]
        %v2617 = vld [vmem:[%s2606 + $0x28] sm:$0xf]
        %v2618 = vld [vmem:[%s2606 + $0x2c] sm:$0xf]
        %v2619 = vld [vmem:[%s2606 + $0x30] sm:$0xf]
        %v2620 = vld [vmem:[%s2606 + $0x34] sm:$0xf]
        %v2621 = vld [vmem:[%s2606 + $0x38] sm:$0xf]
        %v2622 = vld [vmem:[%s2606 + $0x3c] sm:$0xf]
        %v2623 = vunpack.c.l.b16 %v2235
        %v2624 = vunpack.c.l.b16 %v2245
        %v2625 = vunpack.c.l.b16 %v2259
        %v2626 = vunpack.c.l.b16 %v2269
        %v2627 = vunpack.c.l.b16 %v2283
        %v2628 = vunpack.c.l.b16 %v2293
        %v2629 = vunpack.c.l.b16 %v2307
        %v2630 = vunpack.c.l.b16 %v2317
        %v2631 = vunpack.c.l.b16 %v2331
        %v2632 = vunpack.c.l.b16 %v2341
        %v2633 = vunpack.c.l.b16 %v2355
        %v2634 = vunpack.c.l.b16 %v2365
        %v2635 = vunpack.c.l.b16 %v2379
        %v2636 = vunpack.c.l.b16 %v2389
        %v2637 = vunpack.c.l.b16 %v2403
        %v2638 = vunpack.c.l.b16 %v2413
        %v2639 = vunpack.c.l.b16 %v2427
        %v2640 = vunpack.c.l.b16 %v2437
        %v2641 = vunpack.c.l.b16 %v2451
        %v2642 = vunpack.c.l.b16 %v2461
        %v2643 = vunpack.c.l.b16 %v2475
        %v2644 = vunpack.c.l.b16 %v2485
        %v2645 = vunpack.c.l.b16 %v2499
        %v2646 = vunpack.c.l.b16 %v2509
        %v2647 = vunpack.c.l.b16 %v2523
        %v2648 = vunpack.c.l.b16 %v2533
        %v2649 = vunpack.c.l.b16 %v2547
        %v2650 = vunpack.c.l.b16 %v2557
        %v2651 = vunpack.c.l.b16 %v2571
        %v2652 = vunpack.c.l.b16 %v2581
        %v2653 = vunpack.c.l.b16 %v2595
        %v2654 = vunpack.c.l.b16 %v2605
        %v2655 = vpack.c.b16 %v2624, %v2623
        %v2656 = vpack.c.b16 %v2626, %v2625
        %v2657 = vpack.c.b16 %v2628, %v2627
        %v2658 = vpack.c.b16 %v2630, %v2629
        %v2659 = vpack.c.b16 %v2632, %v2631
        %v2660 = vpack.c.b16 %v2634, %v2633
        %v2661 = vpack.c.b16 %v2636, %v2635
        %v2662 = vpack.c.b16 %v2638, %v2637
        %v2663 = vpack.c.b16 %v2640, %v2639
        %v2664 = vpack.c.b16 %v2642, %v2641
        %v2665 = vpack.c.b16 %v2644, %v2643
        %v2666 = vpack.c.b16 %v2646, %v2645
        %v2667 = vpack.c.b16 %v2648, %v2647
        %v2668 = vpack.c.b16 %v2650, %v2649
        %v2669 = vpack.c.b16 %v2652, %v2651
        %v2670 = vpack.c.b16 %v2654, %v2653
        %v2703 = vunpack.c.l.b16 %v2607
        %v2704 = vunpack.c.l.b16 %v2608
        %v2705 = vunpack.c.l.b16 %v2609
        %v2706 = vunpack.c.l.b16 %v2610
        %v2707 = vunpack.c.l.b16 %v2611
        %v2708 = vunpack.c.l.b16 %v2612
        %v2709 = vunpack.c.l.b16 %v2613
        %v2710 = vunpack.c.l.b16 %v2614
        %v2711 = vunpack.c.l.b16 %v2615
        %v2712 = vunpack.c.l.b16 %v2616
        %v2713 = vunpack.c.l.b16 %v2617
        %v2714 = vunpack.c.l.b16 %v2618
        %v2715 = vunpack.c.l.b16 %v2619
        %v2716 = vunpack.c.l.b16 %v2620
        %v2717 = vunpack.c.l.b16 %v2621
        %v2718 = vunpack.c.l.b16 %v2622
        %v2719 = vpack.c.b16 %v2704, %v2703
        %v2720 = vpack.c.b16 %v2706, %v2705
        %v2721 = vpack.c.b16 %v2708, %v2707
        %v2722 = vpack.c.b16 %v2710, %v2709
        %v2723 = vpack.c.b16 %v2712, %v2711
        %v2724 = vpack.c.b16 %v2714, %v2713
        %v2725 = vpack.c.b16 %v2716, %v2715
        %v2726 = vpack.c.b16 %v2718, %v2717
        %2735 = vmatprep.subr.bf16.mxu0 0
        %2736 = vmatpush1.bf16.msra.mxu0 %v2719
        %2737 = vmatprep.subr.bf16.mxu0 0
        %2738 = vmatpush1.bf16.msra.mxu0 %v2720
        %2739 = vmatprep.subr.bf16.mxu0 0
        %2740 = vmatpush1.bf16.msra.mxu0 %v2721
        %2741 = vmatprep.subr.bf16.mxu0 0
        %2742 = vmatpush1.bf16.msra.mxu0 %v2722
        %2743 = vmatprep.subr.bf16.mxu0 0
        %2744 = vmatpush1.bf16.msra.mxu0 %v2723
        %2745 = vmatprep.subr.bf16.mxu0 0
        %2746 = vmatpush1.bf16.msra.mxu0 %v2724
        %2747 = vmatprep.subr.bf16.mxu0 0
        %2748 = vmatpush1.bf16.msra.mxu0 %v2725
        %2749 = vmatprep.subr.bf16.mxu0 0
        %2750 = vmatpush1.bf16.msra.mxu0 %v2726
        %2751 = vmatprep.subr.bf16.mxu0 0
        %2752 = vmatpush1.bf16.msra.mxu0 0
        %2753 = vmatprep.subr.bf16.mxu0 0
        %2754 = vmatpush1.bf16.msra.mxu0 0
        %2755 = vmatprep.subr.bf16.mxu0 0
        %2756 = vmatpush1.bf16.msra.mxu0 0
        %2757 = vmatprep.subr.bf16.mxu0 0
        %2758 = vmatpush1.bf16.msra.mxu0 0
        %2759 = vmatprep.subr.bf16.mxu0 0
        %2760 = vmatpush1.bf16.msra.mxu0 0
        %2761 = vmatprep.subr.bf16.mxu0 0
        %2762 = vmatpush1.bf16.msra.mxu0 0
        %2763 = vmatprep.subr.bf16.mxu0 0
        %2764 = vmatpush1.bf16.msra.mxu0 0
        %2765 = vmatprep.subr.bf16.mxu0 0
        %2766 = vmatpush1.bf16.msra.mxu0 0
        %2767 = vmatprep.mubr.bf16.mxu0 0
        %2768 = vmatmul.mubr.bf16.gmra.mrb[0].mxu0 %v2655
        %v2769 = vpop.f32.mrb[0].mxu0
        %v2770 = vadd.f32 0.0, %v2769
        %v2771 = vpop.f32.mrb[0].mxu0
        %v2772 = vpop.f32.mrb[0].mxu0
        %v2773 = vadd.f32 0.0, %v2772
        %v2774 = vpop.f32.mrb[0].mxu0
        %2775 = vmatprep.mubr.bf16.mxu0 0
        %2776 = vmatmul.mubr.bf16.gmra.mrb[0].mxu0 %v2656
        %v2777 = vpop.f32.mrb[0].mxu0
        %v2778 = vadd.f32 0.0, %v2777
        %v2779 = vpop.f32.mrb[0].mxu0
        %v2780 = vpop.f32.mrb[0].mxu0
        %v2781 = vadd.f32 0.0, %v2780
        %v2782 = vpop.f32.mrb[0].mxu0
        %2783 = vmatprep.mubr.bf16.mxu0 0
        %2784 = vmatmul.mubr.bf16.gmra.mrb[0].mxu0 %v2657
        %v2785 = vpop.f32.mrb[0].mxu0
        %v2786 = vadd.f32 0.0, %v2785
        %v2787 = vpop.f32.mrb[0].mxu0
        %v2788 = vpop.f32.mrb[0].mxu0
        %v2789 = vadd.f32 0.0, %v2788
        %v2790 = vpop.f32.mrb[0].mxu0
        %2791 = vmatprep.mubr.bf16.mxu0 0
        %2792 = vmatmul.mubr.bf16.gmra.mrb[0].mxu0 %v2658
        %v2793 = vpop.f32.mrb[0].mxu0
        %v2794 = vadd.f32 0.0, %v2793
        %v2795 = vpop.f32.mrb[0].mxu0
        %v2796 = vpop.f32.mrb[0].mxu0
        %v2797 = vadd.f32 0.0, %v2796
        %v2798 = vpop.f32.mrb[0].mxu0
        %2799 = vmatprep.mubr.bf16.mxu0 0
        %2800 = vmatmul.mubr.bf16.gmra.mrb[0].mxu0 %v2659
        %v2801 = vpop.f32.mrb[0].mxu0
        %v2802 = vadd.f32 0.0, %v2801
        %v2803 = vpop.f32.mrb[0].mxu0
        %v2804 = vpop.f32.mrb[0].mxu0
        %v2805 = vadd.f32 0.0, %v2804
        %v2806 = vpop.f32.mrb[0].mxu0
        %2807 = vmatprep.mubr.bf16.mxu0 0
        %2808 = vmatmul.mubr.bf16.gmra.mrb[0].mxu0 %v2660
        %v2809 = vpop.f32.mrb[0].mxu0
        %v2810 = vadd.f32 0.0, %v2809
        %v2811 = vpop.f32.mrb[0].mxu0
        %v2812 = vpop.f32.mrb[0].mxu0
        %v2813 = vadd.f32 0.0, %v2812
        %v2814 = vpop.f32.mrb[0].mxu0
        %2815 = vmatprep.mubr.bf16.mxu0 0
        %2816 = vmatmul.mubr.bf16.gmra.mrb[0].mxu0 %v2661
        %v2817 = vpop.f32.mrb[0].mxu0
        %v2818 = vadd.f32 0.0, %v2817
        %v2819 = vpop.f32.mrb[0].mxu0
        %v2820 = vpop.f32.mrb[0].mxu0
        %v2821 = vadd.f32 0.0, %v2820
        %v2822 = vpop.f32.mrb[0].mxu0
        %2823 = vmatprep.mubr.bf16.mxu0 0
        %2824 = vmatmul.mubr.bf16.gmra.mrb[0].mxu0 %v2662
        %v2825 = vpop.f32.mrb[0].mxu0
        %v2826 = vadd.f32 0.0, %v2825
        %v2827 = vpop.f32.mrb[0].mxu0
        %v2828 = vpop.f32.mrb[0].mxu0
        %v2829 = vadd.f32 0.0, %v2828
        %v2830 = vpop.f32.mrb[0].mxu0
        %2831 = vmatprep.mubr.bf16.mxu0 0
        %2832 = vmatmul.mubr.bf16.gmra.mrb[0].mxu0 %v2663
        %v2833 = vpop.f32.mrb[0].mxu0
        %v2834 = vadd.f32 0.0, %v2833
        %v2835 = vpop.f32.mrb[0].mxu0
        %v2836 = vpop.f32.mrb[0].mxu0
        %v2837 = vadd.f32 0.0, %v2836
        %v2838 = vpop.f32.mrb[0].mxu0
        %2839 = vmatprep.mubr.bf16.mxu0 0
        %2840 = vmatmul.mubr.bf16.gmra.mrb[0].mxu0 %v2664
        %v2841 = vpop.f32.mrb[0].mxu0
        %v2842 = vadd.f32 0.0, %v2841
        %v2843 = vpop.f32.mrb[0].mxu0
        %v2844 = vpop.f32.mrb[0].mxu0
        %v2845 = vadd.f32 0.0, %v2844
        %v2846 = vpop.f32.mrb[0].mxu0
        %2847 = vmatprep.mubr.bf16.mxu0 0
        %2848 = vmatmul.mubr.bf16.gmra.mrb[0].mxu0 %v2665
        %v2849 = vpop.f32.mrb[0].mxu0
        %v2850 = vadd.f32 0.0, %v2849
        %v2851 = vpop.f32.mrb[0].mxu0
        %v2852 = vpop.f32.mrb[0].mxu0
        %v2853 = vadd.f32 0.0, %v2852
        %v2854 = vpop.f32.mrb[0].mxu0
        %2855 = vmatprep.mubr.bf16.mxu0 0
        %2856 = vmatmul.mubr.bf16.gmra.mrb[0].mxu0 %v2666
        %v2857 = vpop.f32.mrb[0].mxu0
        %v2858 = vadd.f32 0.0, %v2857
        %v2859 = vpop.f32.mrb[0].mxu0
        %v2860 = vpop.f32.mrb[0].mxu0
        %v2861 = vadd.f32 0.0, %v2860
        %v2862 = vpop.f32.mrb[0].mxu0
        %2863 = vmatprep.mubr.bf16.mxu0 0
        %2864 = vmatmul.mubr.bf16.gmra.mrb[0].mxu0 %v2667
        %v2865 = vpop.f32.mrb[0].mxu0
        %v2866 = vadd.f32 0.0, %v2865
        %v2867 = vpop.f32.mrb[0].mxu0
        %v2868 = vpop.f32.mrb[0].mxu0
        %v2869 = vadd.f32 0.0, %v2868
        %v2870 = vpop.f32.mrb[0].mxu0
        %2871 = vmatprep.mubr.bf16.mxu0 0
        %2872 = vmatmul.mubr.bf16.gmra.mrb[0].mxu0 %v2668
        %v2873 = vpop.f32.mrb[0].mxu0
        %v2874 = vadd.f32 0.0, %v2873
        %v2875 = vpop.f32.mrb[0].mxu0
        %v2876 = vpop.f32.mrb[0].mxu0
        %v2877 = vadd.f32 0.0, %v2876
        %v2878 = vpop.f32.mrb[0].mxu0
        %2879 = vmatprep.mubr.bf16.mxu0 0
        %2880 = vmatmul.mubr.bf16.gmra.mrb[0].mxu0 %v2669
        %v2881 = vpop.f32.mrb[0].mxu0
        %v2882 = vadd.f32 0.0, %v2881
        %v2883 = vpop.f32.mrb[0].mxu0
        %v2884 = vpop.f32.mrb[0].mxu0
        %v2885 = vadd.f32 0.0, %v2884
        %v2886 = vpop.f32.mrb[0].mxu0
        %2887 = vmatprep.mubr.bf16.mxu0 0
        %2888 = vmatmul.mubr.bf16.gmra.mrb[0].mxu0 %v2670
        %v2889 = vpop.f32.mrb[0].mxu0
        %v2890 = vadd.f32 0.0, %v2889
        %v2891 = vpop.f32.mrb[0].mxu0
        %v2892 = vpop.f32.mrb[0].mxu0
        %v2893 = vadd.f32 0.0, %v2892
        %v2894 = vpop.f32.mrb[0].mxu0
        %2895 = vdwg.mxu0
        %v2896 = vadd.f32 %v2142, %v2770
        %v2897 = vadd.f32 %v2143, %v2773
        %v2898 = vadd.f32 %v2144, %v2778
        %v2899 = vadd.f32 %v2145, %v2781
        %v2900 = vadd.f32 %v2146, %v2786
        %v2901 = vadd.f32 %v2147, %v2789
        %v2902 = vadd.f32 %v2148, %v2794
        %v2903 = vadd.f32 %v2149, %v2797
        %v2904 = vadd.f32 %v2150, %v2802
        %v2905 = vadd.f32 %v2151, %v2805
        %v2906 = vadd.f32 %v2152, %v2810
        %v2907 = vadd.f32 %v2153, %v2813
        %v2908 = vadd.f32 %v2154, %v2818
        %v2909 = vadd.f32 %v2155, %v2821
        %v2910 = vadd.f32 %v2156, %v2826
        %v2911 = vadd.f32 %v2157, %v2829
        %v2912 = vadd.f32 %v2158, %v2834
        %v2913 = vadd.f32 %v2159, %v2837
        %v2914 = vadd.f32 %v2160, %v2842
        %v2915 = vadd.f32 %v2161, %v2845
        %v2916 = vadd.f32 %v2162, %v2850
        %v2917 = vadd.f32 %v2163, %v2853
        %v2918 = vadd.f32 %v2164, %v2858
        %v2919 = vadd.f32 %v2165, %v2861
        %v2920 = vadd.f32 %v2166, %v2866
        %v2921 = vadd.f32 %v2167, %v2869
        %v2922 = vadd.f32 %v2168, %v2874
        %v2923 = vadd.f32 %v2169, %v2877
        %v2924 = vadd.f32 %v2170, %v2882
        %v2925 = vadd.f32 %v2171, %v2885
        %v2926 = vadd.f32 %v2172, %v2890
        %v2927 = vadd.f32 %v2173, %v2893
        %v2928 = vld [vmem:[%s1787] sm:$0xe]
        %v2929 = vld [vmem:[%s1787 + $0xc] sm:$0xe]
        %v2930 = vld [vmem:[%s1787 + $0x18] sm:$0xe]
        %v2931 = vld [vmem:[%s1787 + $0x24] sm:$0xe]
        %v2932 = vld [vmem:[%s1787 + $0x30] sm:$0xe]
        %v2933 = vld [vmem:[%s1787 + $0x3c] sm:$0xe]
        %v2934 = vld [vmem:[%s1787 + $0x48] sm:$0xe]
        %v2935 = vld [vmem:[%s1787 + $0x54] sm:$0xe]
        %v2936 = vld [vmem:[%s1787 + $0x60] sm:$0xe]
        %v2937 = vld [vmem:[%s1787 + $0x6c] sm:$0xe]
        %v2938 = vld [vmem:[%s1787 + $0x78] sm:$0xe]
        %v2939 = vld [vmem:[%s1787 + $0x84] sm:$0xe]
        %v2940 = vld [vmem:[%s1787 + $0x90] sm:$0xe]
        %v2941 = vld [vmem:[%s1787 + $0x9c] sm:$0xe]
        %v2942 = vld [vmem:[%s1787 + $0xa8] sm:$0xe]
        %v2943 = vld [vmem:[%s1787 + $0xb4] sm:$0xe]
        %v2992 = vrot.slane %v2928, 5
        %v2993 = vrot.slane %v2992, 4
        %v2994 = vrot.slane %v2175, 5
        %v2995 = vsel %vm1352, %v2993, %v2994
        %v2996 = vrot.slane %v2994, 4
        %v2997 = vrot.slane %v2176, 5
        %v2998 = vsel %vm1352, %v2996, %v2997
        %v2999 = vrot.slane %v2929, 5
        %v3000 = vrot.slane %v2999, 4
        %v3001 = vrot.slane %v2178, 5
        %v3002 = vsel %vm1352, %v3000, %v3001
        %v3003 = vrot.slane %v3001, 4
        %v3004 = vrot.slane %v2179, 5
        %v3005 = vsel %vm1352, %v3003, %v3004
        %v3006 = vrot.slane %v2930, 5
        %v3007 = vrot.slane %v3006, 4
        %v3008 = vrot.slane %v2181, 5
        %v3009 = vsel %vm1352, %v3007, %v3008
        %v3010 = vrot.slane %v3008, 4
        %v3011 = vrot.slane %v2182, 5
        %v3012 = vsel %vm1352, %v3010, %v3011
        %v3013 = vrot.slane %v2931, 5
        %v3014 = vrot.slane %v3013, 4
        %v3015 = vrot.slane %v2184, 5
        %v3016 = vsel %vm1352, %v3014, %v3015
        %v3017 = vrot.slane %v3015, 4
        %v3018 = vrot.slane %v2185, 5
        %v3019 = vsel %vm1352, %v3017, %v3018
        %v3020 = vrot.slane %v2932, 5
        %v3021 = vrot.slane %v3020, 4
        %v3022 = vrot.slane %v2187, 5
        %v3023 = vsel %vm1352, %v3021, %v3022
        %v3024 = vrot.slane %v3022, 4
        %v3025 = vrot.slane %v2188, 5
        %v3026 = vsel %vm1352, %v3024, %v3025
        %v3027 = vrot.slane %v2933, 5
        %v3028 = vrot.slane %v3027, 4
        %v3029 = vrot.slane %v2190, 5
        %v3030 = vsel %vm1352, %v3028, %v3029
        %v3031 = vrot.slane %v3029, 4
        %v3032 = vrot.slane %v2191, 5
        %v3033 = vsel %vm1352, %v3031, %v3032
        %v3034 = vrot.slane %v2934, 5
        %v3035 = vrot.slane %v3034, 4
        %v3036 = vrot.slane %v2193, 5
        %v3037 = vsel %vm1352, %v3035, %v3036
        %v3038 = vrot.slane %v3036, 4
        %v3039 = vrot.slane %v2194, 5
        %v3040 = vsel %vm1352, %v3038, %v3039
        %v3041 = vrot.slane %v2935, 5
        %v3042 = vrot.slane %v3041, 4
        %v3043 = vrot.slane %v2196, 5
        %v3044 = vsel %vm1352, %v3042, %v3043
        %v3045 = vrot.slane %v3043, 4
        %v3046 = vrot.slane %v2197, 5
        %v3047 = vsel %vm1352, %v3045, %v3046
        %v3048 = vrot.slane %v2936, 5
        %v3049 = vrot.slane %v3048, 4
        %v3050 = vrot.slane %v2199, 5
        %v3051 = vsel %vm1352, %v3049, %v3050
        %v3052 = vrot.slane %v3050, 4
        %v3053 = vrot.slane %v2200, 5
        %v3054 = vsel %vm1352, %v3052, %v3053
        %v3055 = vrot.slane %v2937, 5
        %v3056 = vrot.slane %v3055, 4
        %v3057 = vrot.slane %v2202, 5
        %v3058 = vsel %vm1352, %v3056, %v3057
        %v3059 = vrot.slane %v3057, 4
        %v3060 = vrot.slane %v2203, 5
        %v3061 = vsel %vm1352, %v3059, %v3060
        %v3062 = vrot.slane %v2938, 5
        %v3063 = vrot.slane %v3062, 4
        %v3064 = vrot.slane %v2205, 5
        %v3065 = vsel %vm1352, %v3063, %v3064
        %v3066 = vrot.slane %v3064, 4
        %v3067 = vrot.slane %v2206, 5
        %v3068 = vsel %vm1352, %v3066, %v3067
        %v3069 = vrot.slane %v2939, 5
        %v3070 = vrot.slane %v3069, 4
        %v3071 = vrot.slane %v2208, 5
        %v3072 = vsel %vm1352, %v3070, %v3071
        %v3073 = vrot.slane %v3071, 4
        %v3074 = vrot.slane %v2209, 5
        %v3075 = vsel %vm1352, %v3073, %v3074
        %v3076 = vrot.slane %v2940, 5
        %v3077 = vrot.slane %v3076, 4
        %v3078 = vrot.slane %v2211, 5
        %v3079 = vsel %vm1352, %v3077, %v3078
        %v3080 = vrot.slane %v3078, 4
        %v3081 = vrot.slane %v2212, 5
        %v3082 = vsel %vm1352, %v3080, %v3081
        %v3083 = vrot.slane %v2941, 5
        %v3084 = vrot.slane %v3083, 4
        %v3085 = vrot.slane %v2214, 5
        %v3086 = vsel %vm1352, %v3084, %v3085
        %v3087 = vrot.slane %v3085, 4
        %v3088 = vrot.slane %v2215, 5
        %v3089 = vsel %vm1352, %v3087, %v3088
        %v3090 = vrot.slane %v2942, 5
        %v3091 = vrot.slane %v3090, 4
        %v3092 = vrot.slane %v2217, 5
        %v3093 = vsel %vm1352, %v3091, %v3092
        %v3094 = vrot.slane %v3092, 4
        %v3095 = vrot.slane %v2218, 5
        %v3096 = vsel %vm1352, %v3094, %v3095
        %v3097 = vrot.slane %v2943, 5
        %v3098 = vrot.slane %v3097, 4
        %v3099 = vrot.slane %v2220, 5
        %v3100 = vsel %vm1352, %v3098, %v3099
        %v3101 = vrot.slane %v3099, 4
        %v3102 = vrot.slane %v2221, 5
        %v3103 = vsel %vm1352, %v3101, %v3102
        %s3104 = scalar_lea.vmem %s248, 320
        %v3105 = vld [vmem:[%s3104] sm:$0xf]
        %v3106 = vld [vmem:[%s3104 + $0x4] sm:$0xf]
        %v3107 = vld [vmem:[%s3104 + $0x8] sm:$0xf]
        %v3108 = vld [vmem:[%s3104 + $0xc] sm:$0xf]
        %v3109 = vld [vmem:[%s3104 + $0x10] sm:$0xf]
        %v3110 = vld [vmem:[%s3104 + $0x14] sm:$0xf]
        %v3111 = vld [vmem:[%s3104 + $0x18] sm:$0xf]
        %v3112 = vld [vmem:[%s3104 + $0x1c] sm:$0xf]
        %v3113 = vld [vmem:[%s3104 + $0x20] sm:$0xf]
        %v3114 = vld [vmem:[%s3104 + $0x24] sm:$0xf]
        %v3115 = vld [vmem:[%s3104 + $0x28] sm:$0xf]
        %v3116 = vld [vmem:[%s3104 + $0x2c] sm:$0xf]
        %v3117 = vld [vmem:[%s3104 + $0x30] sm:$0xf]
        %v3118 = vld [vmem:[%s3104 + $0x34] sm:$0xf]
        %v3119 = vld [vmem:[%s3104 + $0x38] sm:$0xf]
        %v3120 = vld [vmem:[%s3104 + $0x3c] sm:$0xf]
        %v3121 = vunpack.c.l.b16 %v2995
        %v3122 = vunpack.c.l.b16 %v2998
        %v3123 = vunpack.c.l.b16 %v3002
        %v3124 = vunpack.c.l.b16 %v3005
        %v3125 = vunpack.c.l.b16 %v3009
        %v3126 = vunpack.c.l.b16 %v3012
        %v3127 = vunpack.c.l.b16 %v3016
        %v3128 = vunpack.c.l.b16 %v3019
        %v3129 = vunpack.c.l.b16 %v3023
        %v3130 = vunpack.c.l.b16 %v3026
        %v3131 = vunpack.c.l.b16 %v3030
        %v3132 = vunpack.c.l.b16 %v3033
        %v3133 = vunpack.c.l.b16 %v3037
        %v3134 = vunpack.c.l.b16 %v3040
        %v3135 = vunpack.c.l.b16 %v3044
        %v3136 = vunpack.c.l.b16 %v3047
        %v3137 = vunpack.c.l.b16 %v3051
        %v3138 = vunpack.c.l.b16 %v3054
        %v3139 = vunpack.c.l.b16 %v3058
        %v3140 = vunpack.c.l.b16 %v3061
        %v3141 = vunpack.c.l.b16 %v3065
        %v3142 = vunpack.c.l.b16 %v3068
        %v3143 = vunpack.c.l.b16 %v3072
        %v3144 = vunpack.c.l.b16 %v3075
        %v3145 = vunpack.c.l.b16 %v3079
        %v3146 = vunpack.c.l.b16 %v3082
        %v3147 = vunpack.c.l.b16 %v3086
        %v3148 = vunpack.c.l.b16 %v3089
        %v3149 = vunpack.c.l.b16 %v3093
        %v3150 = vunpack.c.l.b16 %v3096
        %v3151 = vunpack.c.l.b16 %v3100
        %v3152 = vunpack.c.l.b16 %v3103
        %v3153 = vpack.c.b16 %v3122, %v3121
        %v3154 = vpack.c.b16 %v3124, %v3123
        %v3155 = vpack.c.b16 %v3126, %v3125
        %v3156 = vpack.c.b16 %v3128, %v3127
        %v3157 = vpack.c.b16 %v3130, %v3129
        %v3158 = vpack.c.b16 %v3132, %v3131
        %v3159 = vpack.c.b16 %v3134, %v3133
        %v3160 = vpack.c.b16 %v3136, %v3135
        %v3161 = vpack.c.b16 %v3138, %v3137
        %v3162 = vpack.c.b16 %v3140, %v3139
        %v3163 = vpack.c.b16 %v3142, %v3141
        %v3164 = vpack.c.b16 %v3144, %v3143
        %v3165 = vpack.c.b16 %v3146, %v3145
        %v3166 = vpack.c.b16 %v3148, %v3147
        %v3167 = vpack.c.b16 %v3150, %v3149
        %v3168 = vpack.c.b16 %v3152, %v3151
        %v3201 = vunpack.c.l.b16 %v3105
        %v3202 = vunpack.c.l.b16 %v3106
        %v3203 = vunpack.c.l.b16 %v3107
        %v3204 = vunpack.c.l.b16 %v3108
        %v3205 = vunpack.c.l.b16 %v3109
        %v3206 = vunpack.c.l.b16 %v3110
        %v3207 = vunpack.c.l.b16 %v3111
        %v3208 = vunpack.c.l.b16 %v3112
        %v3209 = vunpack.c.l.b16 %v3113
        %v3210 = vunpack.c.l.b16 %v3114
        %v3211 = vunpack.c.l.b16 %v3115
        %v3212 = vunpack.c.l.b16 %v3116
        %v3213 = vunpack.c.l.b16 %v3117
        %v3214 = vunpack.c.l.b16 %v3118
        %v3215 = vunpack.c.l.b16 %v3119
        %v3216 = vunpack.c.l.b16 %v3120
        %v3217 = vpack.c.b16 %v3202, %v3201
        %v3218 = vpack.c.b16 %v3204, %v3203
        %v3219 = vpack.c.b16 %v3206, %v3205
        %v3220 = vpack.c.b16 %v3208, %v3207
        %v3221 = vpack.c.b16 %v3210, %v3209
        %v3222 = vpack.c.b16 %v3212, %v3211
        %v3223 = vpack.c.b16 %v3214, %v3213
        %v3224 = vpack.c.b16 %v3216, %v3215
        %3233 = vmatprep.subr.bf16.mxu0 0
        %3234 = vmatpush1.bf16.msra.mxu0 %v3217
        %3235 = vmatprep.subr.bf16.mxu0 0
        %3236 = vmatpush1.bf16.msra.mxu0 %v3218
        %3237 = vmatprep.subr.bf16.mxu0 0
        %3238 = vmatpush1.bf16.msra.mxu0 %v3219
        %3239 = vmatprep.subr.bf16.mxu0 0
        %3240 = vmatpush1.bf16.msra.mxu0 %v3220
        %3241 = vmatprep.subr.bf16.mxu0 0
        %3242 = vmatpush1.bf16.msra.mxu0 %v3221
        %3243 = vmatprep.subr.bf16.mxu0 0
        %3244 = vmatpush1.bf16.msra.mxu0 %v3222
        %3245 = vmatprep.subr.bf16.mxu0 0
        %3246 = vmatpush1.bf16.msra.mxu0 %v3223
        %3247 = vmatprep.subr.bf16.mxu0 0
        %3248 = vmatpush1.bf16.msra.mxu0 %v3224
        %3249 = vmatprep.subr.bf16.mxu0 0
        %3250 = vmatpush1.bf16.msra.mxu0 0
        %3251 = vmatprep.subr.bf16.mxu0 0
        %3252 = vmatpush1.bf16.msra.mxu0 0
        %3253 = vmatprep.subr.bf16.mxu0 0
        %3254 = vmatpush1.bf16.msra.mxu0 0
        %3255 = vmatprep.subr.bf16.mxu0 0
        %3256 = vmatpush1.bf16.msra.mxu0 0
        %3257 = vmatprep.subr.bf16.mxu0 0
        %3258 = vmatpush1.bf16.msra.mxu0 0
        %3259 = vmatprep.subr.bf16.mxu0 0
        %3260 = vmatpush1.bf16.msra.mxu0 0
        %3261 = vmatprep.subr.bf16.mxu0 0
        %3262 = vmatpush1.bf16.msra.mxu0 0
        %3263 = vmatprep.subr.bf16.mxu0 0
        %3264 = vmatpush1.bf16.msra.mxu0 0
        %3265 = vmatprep.mubr.bf16.mxu0 0
        %3266 = vmatmul.mubr.bf16.gmra.mrb[0].mxu0 %v3153
        %v3267 = vpop.f32.mrb[0].mxu0
        %v3268 = vadd.f32 0.0, %v3267
        %v3269 = vpop.f32.mrb[0].mxu0
        %v3270 = vpop.f32.mrb[0].mxu0
        %v3271 = vadd.f32 0.0, %v3270
        %v3272 = vpop.f32.mrb[0].mxu0
        %3273 = vmatprep.mubr.bf16.mxu0 0
        %3274 = vmatmul.mubr.bf16.gmra.mrb[0].mxu0 %v3154
        %v3275 = vpop.f32.mrb[0].mxu0
        %v3276 = vadd.f32 0.0, %v3275
        %v3277 = vpop.f32.mrb[0].mxu0
        %v3278 = vpop.f32.mrb[0].mxu0
        %v3279 = vadd.f32 0.0, %v3278
        %v3280 = vpop.f32.mrb[0].mxu0
        %3281 = vmatprep.mubr.bf16.mxu0 0
        %3282 = vmatmul.mubr.bf16.gmra.mrb[0].mxu0 %v3155
        %v3283 = vpop.f32.mrb[0].mxu0
        %v3284 = vadd.f32 0.0, %v3283
        %v3285 = vpop.f32.mrb[0].mxu0
        %v3286 = vpop.f32.mrb[0].mxu0
        %v3287 = vadd.f32 0.0, %v3286
        %v3288 = vpop.f32.mrb[0].mxu0
        %3289 = vmatprep.mubr.bf16.mxu0 0
        %3290 = vmatmul.mubr.bf16.gmra.mrb[0].mxu0 %v3156
        %v3291 = vpop.f32.mrb[0].mxu0
        %v3292 = vadd.f32 0.0, %v3291
        %v3293 = vpop.f32.mrb[0].mxu0
        %v3294 = vpop.f32.mrb[0].mxu0
        %v3295 = vadd.f32 0.0, %v3294
        %v3296 = vpop.f32.mrb[0].mxu0
        %3297 = vmatprep.mubr.bf16.mxu0 0
        %3298 = vmatmul.mubr.bf16.gmra.mrb[0].mxu0 %v3157
        %v3299 = vpop.f32.mrb[0].mxu0
        %v3300 = vadd.f32 0.0, %v3299
        %v3301 = vpop.f32.mrb[0].mxu0
        %v3302 = vpop.f32.mrb[0].mxu0
        %v3303 = vadd.f32 0.0, %v3302
        %v3304 = vpop.f32.mrb[0].mxu0
        %3305 = vmatprep.mubr.bf16.mxu0 0
        %3306 = vmatmul.mubr.bf16.gmra.mrb[0].mxu0 %v3158
        %v3307 = vpop.f32.mrb[0].mxu0
        %v3308 = vadd.f32 0.0, %v3307
        %v3309 = vpop.f32.mrb[0].mxu0
        %v3310 = vpop.f32.mrb[0].mxu0
        %v3311 = vadd.f32 0.0, %v3310
        %v3312 = vpop.f32.mrb[0].mxu0
        %3313 = vmatprep.mubr.bf16.mxu0 0
        %3314 = vmatmul.mubr.bf16.gmra.mrb[0].mxu0 %v3159
        %v3315 = vpop.f32.mrb[0].mxu0
        %v3316 = vadd.f32 0.0, %v3315
        %v3317 = vpop.f32.mrb[0].mxu0
        %v3318 = vpop.f32.mrb[0].mxu0
        %v3319 = vadd.f32 0.0, %v3318
        %v3320 = vpop.f32.mrb[0].mxu0
        %3321 = vmatprep.mubr.bf16.mxu0 0
        %3322 = vmatmul.mubr.bf16.gmra.mrb[0].mxu0 %v3160
        %v3323 = vpop.f32.mrb[0].mxu0
        %v3324 = vadd.f32 0.0, %v3323
        %v3325 = vpop.f32.mrb[0].mxu0
        %v3326 = vpop.f32.mrb[0].mxu0
        %v3327 = vadd.f32 0.0, %v3326
        %v3328 = vpop.f32.mrb[0].mxu0
        %3329 = vmatprep.mubr.bf16.mxu0 0
        %3330 = vmatmul.mubr.bf16.gmra.mrb[0].mxu0 %v3161
        %v3331 = vpop.f32.mrb[0].mxu0
        %v3332 = vadd.f32 0.0, %v3331
        %v3333 = vpop.f32.mrb[0].mxu0
        %v3334 = vpop.f32.mrb[0].mxu0
        %v3335 = vadd.f32 0.0, %v3334
        %v3336 = vpop.f32.mrb[0].mxu0
        %3337 = vmatprep.mubr.bf16.mxu0 0
        %3338 = vmatmul.mubr.bf16.gmra.mrb[0].mxu0 %v3162
        %v3339 = vpop.f32.mrb[0].mxu0
        %v3340 = vadd.f32 0.0, %v3339
        %v3341 = vpop.f32.mrb[0].mxu0
        %v3342 = vpop.f32.mrb[0].mxu0
        %v3343 = vadd.f32 0.0, %v3342
        %v3344 = vpop.f32.mrb[0].mxu0
        %3345 = vmatprep.mubr.bf16.mxu0 0
        %3346 = vmatmul.mubr.bf16.gmra.mrb[0].mxu0 %v3163
        %v3347 = vpop.f32.mrb[0].mxu0
        %v3348 = vadd.f32 0.0, %v3347
        %v3349 = vpop.f32.mrb[0].mxu0
        %v3350 = vpop.f32.mrb[0].mxu0
        %v3351 = vadd.f32 0.0, %v3350
        %v3352 = vpop.f32.mrb[0].mxu0
        %3353 = vmatprep.mubr.bf16.mxu0 0
        %3354 = vmatmul.mubr.bf16.gmra.mrb[0].mxu0 %v3164
        %v3355 = vpop.f32.mrb[0].mxu0
        %v3356 = vadd.f32 0.0, %v3355
        %v3357 = vpop.f32.mrb[0].mxu0
        %v3358 = vpop.f32.mrb[0].mxu0
        %v3359 = vadd.f32 0.0, %v3358
        %v3360 = vpop.f32.mrb[0].mxu0
        %3361 = vmatprep.mubr.bf16.mxu0 0
        %3362 = vmatmul.mubr.bf16.gmra.mrb[0].mxu0 %v3165
        %v3363 = vpop.f32.mrb[0].mxu0
        %v3364 = vadd.f32 0.0, %v3363
        %v3365 = vpop.f32.mrb[0].mxu0
        %v3366 = vpop.f32.mrb[0].mxu0
        %v3367 = vadd.f32 0.0, %v3366
        %v3368 = vpop.f32.mrb[0].mxu0
        %3369 = vmatprep.mubr.bf16.mxu0 0
        %3370 = vmatmul.mubr.bf16.gmra.mrb[0].mxu0 %v3166
        %v3371 = vpop.f32.mrb[0].mxu0
        %v3372 = vadd.f32 0.0, %v3371
        %v3373 = vpop.f32.mrb[0].mxu0
        %v3374 = vpop.f32.mrb[0].mxu0
        %v3375 = vadd.f32 0.0, %v3374
        %v3376 = vpop.f32.mrb[0].mxu0
        %3377 = vmatprep.mubr.bf16.mxu0 0
        %3378 = vmatmul.mubr.bf16.gmra.mrb[0].mxu0 %v3167
        %v3379 = vpop.f32.mrb[0].mxu0
        %v3380 = vadd.f32 0.0, %v3379
        %v3381 = vpop.f32.mrb[0].mxu0
        %v3382 = vpop.f32.mrb[0].mxu0
        %v3383 = vadd.f32 0.0, %v3382
        %v3384 = vpop.f32.mrb[0].mxu0
        %3385 = vmatprep.mubr.bf16.mxu0 0
        %3386 = vmatmul.mubr.bf16.gmra.mrb[0].mxu0 %v3168
        %v3387 = vpop.f32.mrb[0].mxu0
        %v3388 = vadd.f32 0.0, %v3387
        %v3389 = vpop.f32.mrb[0].mxu0
        %v3390 = vpop.f32.mrb[0].mxu0
        %v3391 = vadd.f32 0.0, %v3390
        %v3392 = vpop.f32.mrb[0].mxu0
        %3393 = vdwg.mxu0
        %v3394 = vadd.f32 %v2896, %v3268
        %v3395 = vadd.f32 %v2897, %v3271
        %v3396 = vadd.f32 %v2898, %v3276
        %v3397 = vadd.f32 %v2899, %v3279
        %v3398 = vadd.f32 %v2900, %v3284
        %v3399 = vadd.f32 %v2901, %v3287
        %v3400 = vadd.f32 %v2902, %v3292
        %v3401 = vadd.f32 %v2903, %v3295
        %v3402 = vadd.f32 %v2904, %v3300
        %v3403 = vadd.f32 %v2905, %v3303
        %v3404 = vadd.f32 %v2906, %v3308
        %v3405 = vadd.f32 %v2907, %v3311
        %v3406 = vadd.f32 %v2908, %v3316
        %v3407 = vadd.f32 %v2909, %v3319
        %v3408 = vadd.f32 %v2910, %v3324
        %v3409 = vadd.f32 %v2911, %v3327
        %v3410 = vadd.f32 %v2912, %v3332
        %v3411 = vadd.f32 %v2913, %v3335
        %v3412 = vadd.f32 %v2914, %v3340
        %v3413 = vadd.f32 %v2915, %v3343
        %v3414 = vadd.f32 %v2916, %v3348
        %v3415 = vadd.f32 %v2917, %v3351
        %v3416 = vadd.f32 %v2918, %v3356
        %v3417 = vadd.f32 %v2919, %v3359
        %v3418 = vadd.f32 %v2920, %v3364
        %v3419 = vadd.f32 %v2921, %v3367
        %v3420 = vadd.f32 %v2922, %v3372
        %v3421 = vadd.f32 %v2923, %v3375
        %v3422 = vadd.f32 %v2924, %v3380
        %v3423 = vadd.f32 %v2925, %v3383
        %v3424 = vadd.f32 %v2926, %v3388
        %v3425 = vadd.f32 %v2927, %v3391
        %s3426 = scalar_lea.vmem %s244, 24
        %v3427 = vld [vmem:[%s3426] sm:$0xf]
        %v3428 = vld [vmem:[%s3426 + $0x4] sm:$0xf]
        %v3429 = vld [vmem:[%s3426 + $0xc] sm:$0xf]
        %v3430 = vld [vmem:[%s3426 + $0x10] sm:$0xf]
        %v3431 = vld [vmem:[%s3426 + $0x18] sm:$0xf]
        %v3432 = vld [vmem:[%s3426 + $0x1c] sm:$0xf]
        %v3433 = vld [vmem:[%s3426 + $0x24] sm:$0xf]
        %v3434 = vld [vmem:[%s3426 + $0x28] sm:$0xf]
        %v3435 = vld [vmem:[%s3426 + $0x30] sm:$0xf]
        %v3436 = vld [vmem:[%s3426 + $0x34] sm:$0xf]
        %v3437 = vld [vmem:[%s3426 + $0x3c] sm:$0xf]
        %v3438 = vld [vmem:[%s3426 + $0x40] sm:$0xf]
        %v3439 = vld [vmem:[%s3426 + $0x48] sm:$0xf]
        %v3440 = vld [vmem:[%s3426 + $0x4c] sm:$0xf]
        %v3441 = vld [vmem:[%s3426 + $0x54] sm:$0xf]
        %v3442 = vld [vmem:[%s3426 + $0x58] sm:$0xf]
        %v3443 = vld [vmem:[%s3426 + $0x60] sm:$0xf]
        %v3444 = vld [vmem:[%s3426 + $0x64] sm:$0xf]
        %v3445 = vld [vmem:[%s3426 + $0x6c] sm:$0xf]
        %v3446 = vld [vmem:[%s3426 + $0x70] sm:$0xf]
        %v3447 = vld [vmem:[%s3426 + $0x78] sm:$0xf]
        %v3448 = vld [vmem:[%s3426 + $0x7c] sm:$0xf]
        %v3449 = vld [vmem:[%s3426 + $0x84] sm:$0xf]
        %v3450 = vld [vmem:[%s3426 + $0x88] sm:$0xf]
        %v3451 = vld [vmem:[%s3426 + $0x90] sm:$0xf]
        %v3452 = vld [vmem:[%s3426 + $0x94] sm:$0xf]
        %v3453 = vld [vmem:[%s3426 + $0x9c] sm:$0xf]
        %v3454 = vld [vmem:[%s3426 + $0xa0] sm:$0xf]
        %v3455 = vld [vmem:[%s3426 + $0xa8] sm:$0xf]
        %v3456 = vld [vmem:[%s3426 + $0xac] sm:$0xf]
        %v3457 = vld [vmem:[%s3426 + $0xb4] sm:$0xf]
        %v3458 = vld [vmem:[%s3426 + $0xb8] sm:$0xf]
        %s3459 = scalar_lea.vmem %s248, 384
        %v3460 = vld [vmem:[%s3459] sm:$0xf]
        %v3461 = vld [vmem:[%s3459 + $0x4] sm:$0xf]
        %v3462 = vld [vmem:[%s3459 + $0x8] sm:$0xf]
        %v3463 = vld [vmem:[%s3459 + $0xc] sm:$0xf]
        %v3464 = vld [vmem:[%s3459 + $0x10] sm:$0xf]
        %v3465 = vld [vmem:[%s3459 + $0x14] sm:$0xf]
        %v3466 = vld [vmem:[%s3459 + $0x18] sm:$0xf]
        %v3467 = vld [vmem:[%s3459 + $0x1c] sm:$0xf]
        %v3468 = vld [vmem:[%s3459 + $0x20] sm:$0xf]
        %v3469 = vld [vmem:[%s3459 + $0x24] sm:$0xf]
        %v3470 = vld [vmem:[%s3459 + $0x28] sm:$0xf]
        %v3471 = vld [vmem:[%s3459 + $0x2c] sm:$0xf]
        %v3472 = vld [vmem:[%s3459 + $0x30] sm:$0xf]
        %v3473 = vld [vmem:[%s3459 + $0x34] sm:$0xf]
        %v3474 = vld [vmem:[%s3459 + $0x38] sm:$0xf]
        %v3475 = vld [vmem:[%s3459 + $0x3c] sm:$0xf]
        %v3508 = vunpack.c.l.b16 %v3427
        %v3509 = vunpack.c.l.b16 %v3428
        %v3510 = vunpack.c.l.b16 %v3429
        %v3511 = vunpack.c.l.b16 %v3430
        %v3512 = vunpack.c.l.b16 %v3431
        %v3513 = vunpack.c.l.b16 %v3432
        %v3514 = vunpack.c.l.b16 %v3433
        %v3515 = vunpack.c.l.b16 %v3434
        %v3516 = vunpack.c.l.b16 %v3435
        %v3517 = vunpack.c.l.b16 %v3436
        %v3518 = vunpack.c.l.b16 %v3437
        %v3519 = vunpack.c.l.b16 %v3438
        %v3520 = vunpack.c.l.b16 %v3439
        %v3521 = vunpack.c.l.b16 %v3440
        %v3522 = vunpack.c.l.b16 %v3441
        %v3523 = vunpack.c.l.b16 %v3442
        %v3524 = vunpack.c.l.b16 %v3443
        %v3525 = vunpack.c.l.b16 %v3444
        %v3526 = vunpack.c.l.b16 %v3445
        %v3527 = vunpack.c.l.b16 %v3446
        %v3528 = vunpack.c.l.b16 %v3447
        %v3529 = vunpack.c.l.b16 %v3448
        %v3530 = vunpack.c.l.b16 %v3449
        %v3531 = vunpack.c.l.b16 %v3450
        %v3532 = vunpack.c.l.b16 %v3451
        %v3533 = vunpack.c.l.b16 %v3452
        %v3534 = vunpack.c.l.b16 %v3453
        %v3535 = vunpack.c.l.b16 %v3454
        %v3536 = vunpack.c.l.b16 %v3455
        %v3537 = vunpack.c.l.b16 %v3456
        %v3538 = vunpack.c.l.b16 %v3457
        %v3539 = vunpack.c.l.b16 %v3458
        %v3540 = vpack.c.b16 %v3509, %v3508
        %v3541 = vpack.c.b16 %v3511, %v3510
        %v3542 = vpack.c.b16 %v3513, %v3512
        %v3543 = vpack.c.b16 %v3515, %v3514
        %v3544 = vpack.c.b16 %v3517, %v3516
        %v3545 = vpack.c.b16 %v3519, %v3518
        %v3546 = vpack.c.b16 %v3521, %v3520
        %v3547 = vpack.c.b16 %v3523, %v3522
        %v3548 = vpack.c.b16 %v3525, %v3524
        %v3549 = vpack.c.b16 %v3527, %v3526
        %v3550 = vpack.c.b16 %v3529, %v3528
        %v3551 = vpack.c.b16 %v3531, %v3530
        %v3552 = vpack.c.b16 %v3533, %v3532
        %v3553 = vpack.c.b16 %v3535, %v3534
        %v3554 = vpack.c.b16 %v3537, %v3536
        %v3555 = vpack.c.b16 %v3539, %v3538
        %v3588 = vunpack.c.l.b16 %v3460
        %v3589 = vunpack.c.l.b16 %v3461
        %v3590 = vunpack.c.l.b16 %v3462
        %v3591 = vunpack.c.l.b16 %v3463
        %v3592 = vunpack.c.l.b16 %v3464
        %v3593 = vunpack.c.l.b16 %v3465
        %v3594 = vunpack.c.l.b16 %v3466
        %v3595 = vunpack.c.l.b16 %v3467
        %v3596 = vunpack.c.l.b16 %v3468
        %v3597 = vunpack.c.l.b16 %v3469
        %v3598 = vunpack.c.l.b16 %v3470
        %v3599 = vunpack.c.l.b16 %v3471
        %v3600 = vunpack.c.l.b16 %v3472
        %v3601 = vunpack.c.l.b16 %v3473
        %v3602 = vunpack.c.l.b16 %v3474
        %v3603 = vunpack.c.l.b16 %v3475
        %v3604 = vpack.c.b16 %v3589, %v3588
        %v3605 = vpack.c.b16 %v3591, %v3590
        %v3606 = vpack.c.b16 %v3593, %v3592
        %v3607 = vpack.c.b16 %v3595, %v3594
        %v3608 = vpack.c.b16 %v3597, %v3596
        %v3609 = vpack.c.b16 %v3599, %v3598
        %v3610 = vpack.c.b16 %v3601, %v3600
        %v3611 = vpack.c.b16 %v3603, %v3602
        %3620 = vmatprep.subr.bf16.mxu0 0
        %3621 = vmatpush1.bf16.msra.mxu0 %v3604
        %3622 = vmatprep.subr.bf16.mxu0 0
        %3623 = vmatpush1.bf16.msra.mxu0 %v3605
        %3624 = vmatprep.subr.bf16.mxu0 0
        %3625 = vmatpush1.bf16.msra.mxu0 %v3606
        %3626 = vmatprep.subr.bf16.mxu0 0
        %3627 = vmatpush1.bf16.msra.mxu0 %v3607
        %3628 = vmatprep.subr.bf16.mxu0 0
        %3629 = vmatpush1.bf16.msra.mxu0 %v3608
        %3630 = vmatprep.subr.bf16.mxu0 0
        %3631 = vmatpush1.bf16.msra.mxu0 %v3609
        %3632 = vmatprep.subr.bf16.mxu0 0
        %3633 = vmatpush1.bf16.msra.mxu0 %v3610
        %3634 = vmatprep.subr.bf16.mxu0 0
        %3635 = vmatpush1.bf16.msra.mxu0 %v3611
        %3636 = vmatprep.subr.bf16.mxu0 0
        %3637 = vmatpush1.bf16.msra.mxu0 0
        %3638 = vmatprep.subr.bf16.mxu0 0
        %3639 = vmatpush1.bf16.msra.mxu0 0
        %3640 = vmatprep.subr.bf16.mxu0 0
        %3641 = vmatpush1.bf16.msra.mxu0 0
        %3642 = vmatprep.subr.bf16.mxu0 0
        %3643 = vmatpush1.bf16.msra.mxu0 0
        %3644 = vmatprep.subr.bf16.mxu0 0
        %3645 = vmatpush1.bf16.msra.mxu0 0
        %3646 = vmatprep.subr.bf16.mxu0 0
        %3647 = vmatpush1.bf16.msra.mxu0 0
        %3648 = vmatprep.subr.bf16.mxu0 0
        %3649 = vmatpush1.bf16.msra.mxu0 0
        %3650 = vmatprep.subr.bf16.mxu0 0
        %3651 = vmatpush1.bf16.msra.mxu0 0
        %3652 = vmatprep.mubr.bf16.mxu0 0
        %3653 = vmatmul.mubr.bf16.gmra.mrb[0].mxu0 %v3540
        %v3654 = vpop.f32.mrb[0].mxu0
        %v3655 = vadd.f32 0.0, %v3654
        %v3656 = vpop.f32.mrb[0].mxu0
        %v3657 = vpop.f32.mrb[0].mxu0
        %v3658 = vadd.f32 0.0, %v3657
        %v3659 = vpop.f32.mrb[0].mxu0
        %3660 = vmatprep.mubr.bf16.mxu0 0
        %3661 = vmatmul.mubr.bf16.gmra.mrb[0].mxu0 %v3541
        %v3662 = vpop.f32.mrb[0].mxu0
        %v3663 = vadd.f32 0.0, %v3662
        %v3664 = vpop.f32.mrb[0].mxu0
        %v3665 = vpop.f32.mrb[0].mxu0
        %v3666 = vadd.f32 0.0, %v3665
        %v3667 = vpop.f32.mrb[0].mxu0
        %3668 = vmatprep.mubr.bf16.mxu0 0
        %3669 = vmatmul.mubr.bf16.gmra.mrb[0].mxu0 %v3542
        %v3670 = vpop.f32.mrb[0].mxu0
        %v3671 = vadd.f32 0.0, %v3670
        %v3672 = vpop.f32.mrb[0].mxu0
        %v3673 = vpop.f32.mrb[0].mxu0
        %v3674 = vadd.f32 0.0, %v3673
        %v3675 = vpop.f32.mrb[0].mxu0
        %3676 = vmatprep.mubr.bf16.mxu0 0
        %3677 = vmatmul.mubr.bf16.gmra.mrb[0].mxu0 %v3543
        %v3678 = vpop.f32.mrb[0].mxu0
        %v3679 = vadd.f32 0.0, %v3678
        %v3680 = vpop.f32.mrb[0].mxu0
        %v3681 = vpop.f32.mrb[0].mxu0
        %v3682 = vadd.f32 0.0, %v3681
        %v3683 = vpop.f32.mrb[0].mxu0
        %3684 = vmatprep.mubr.bf16.mxu0 0
        %3685 = vmatmul.mubr.bf16.gmra.mrb[0].mxu0 %v3544
        %v3686 = vpop.f32.mrb[0].mxu0
        %v3687 = vadd.f32 0.0, %v3686
        %v3688 = vpop.f32.mrb[0].mxu0
        %v3689 = vpop.f32.mrb[0].mxu0
        %v3690 = vadd.f32 0.0, %v3689
        %v3691 = vpop.f32.mrb[0].mxu0
        %3692 = vmatprep.mubr.bf16.mxu0 0
        %3693 = vmatmul.mubr.bf16.gmra.mrb[0].mxu0 %v3545
        %v3694 = vpop.f32.mrb[0].mxu0
        %v3695 = vadd.f32 0.0, %v3694
        %v3696 = vpop.f32.mrb[0].mxu0
        %v3697 = vpop.f32.mrb[0].mxu0
        %v3698 = vadd.f32 0.0, %v3697
        %v3699 = vpop.f32.mrb[0].mxu0
        %3700 = vmatprep.mubr.bf16.mxu0 0
        %3701 = vmatmul.mubr.bf16.gmra.mrb[0].mxu0 %v3546
        %v3702 = vpop.f32.mrb[0].mxu0
        %v3703 = vadd.f32 0.0, %v3702
        %v3704 = vpop.f32.mrb[0].mxu0
        %v3705 = vpop.f32.mrb[0].mxu0
        %v3706 = vadd.f32 0.0, %v3705
        %v3707 = vpop.f32.mrb[0].mxu0
        %3708 = vmatprep.mubr.bf16.mxu0 0
        %3709 = vmatmul.mubr.bf16.gmra.mrb[0].mxu0 %v3547
        %v3710 = vpop.f32.mrb[0].mxu0
        %v3711 = vadd.f32 0.0, %v3710
        %v3712 = vpop.f32.mrb[0].mxu0
        %v3713 = vpop.f32.mrb[0].mxu0
        %v3714 = vadd.f32 0.0, %v3713
        %v3715 = vpop.f32.mrb[0].mxu0
        %3716 = vmatprep.mubr.bf16.mxu0 0
        %3717 = vmatmul.mubr.bf16.gmra.mrb[0].mxu0 %v3548
        %v3718 = vpop.f32.mrb[0].mxu0
        %v3719 = vadd.f32 0.0, %v3718
        %v3720 = vpop.f32.mrb[0].mxu0
        %v3721 = vpop.f32.mrb[0].mxu0
        %v3722 = vadd.f32 0.0, %v3721
        %v3723 = vpop.f32.mrb[0].mxu0
        %3724 = vmatprep.mubr.bf16.mxu0 0
        %3725 = vmatmul.mubr.bf16.gmra.mrb[0].mxu0 %v3549
        %v3726 = vpop.f32.mrb[0].mxu0
        %v3727 = vadd.f32 0.0, %v3726
        %v3728 = vpop.f32.mrb[0].mxu0
        %v3729 = vpop.f32.mrb[0].mxu0
        %v3730 = vadd.f32 0.0, %v3729
        %v3731 = vpop.f32.mrb[0].mxu0
        %3732 = vmatprep.mubr.bf16.mxu0 0
        %3733 = vmatmul.mubr.bf16.gmra.mrb[0].mxu0 %v3550
        %v3734 = vpop.f32.mrb[0].mxu0
        %v3735 = vadd.f32 0.0, %v3734
        %v3736 = vpop.f32.mrb[0].mxu0
        %v3737 = vpop.f32.mrb[0].mxu0
        %v3738 = vadd.f32 0.0, %v3737
        %v3739 = vpop.f32.mrb[0].mxu0
        %3740 = vmatprep.mubr.bf16.mxu0 0
        %3741 = vmatmul.mubr.bf16.gmra.mrb[0].mxu0 %v3551
        %v3742 = vpop.f32.mrb[0].mxu0
        %v3743 = vadd.f32 0.0, %v3742
        %v3744 = vpop.f32.mrb[0].mxu0
        %v3745 = vpop.f32.mrb[0].mxu0
        %v3746 = vadd.f32 0.0, %v3745
        %v3747 = vpop.f32.mrb[0].mxu0
        %3748 = vmatprep.mubr.bf16.mxu0 0
        %3749 = vmatmul.mubr.bf16.gmra.mrb[0].mxu0 %v3552
        %v3750 = vpop.f32.mrb[0].mxu0
        %v3751 = vadd.f32 0.0, %v3750
        %v3752 = vpop.f32.mrb[0].mxu0
        %v3753 = vpop.f32.mrb[0].mxu0
        %v3754 = vadd.f32 0.0, %v3753
        %v3755 = vpop.f32.mrb[0].mxu0
        %3756 = vmatprep.mubr.bf16.mxu0 0
        %3757 = vmatmul.mubr.bf16.gmra.mrb[0].mxu0 %v3553
        %v3758 = vpop.f32.mrb[0].mxu0
        %v3759 = vadd.f32 0.0, %v3758
        %v3760 = vpop.f32.mrb[0].mxu0
        %v3761 = vpop.f32.mrb[0].mxu0
        %v3762 = vadd.f32 0.0, %v3761
        %v3763 = vpop.f32.mrb[0].mxu0
        %3764 = vmatprep.mubr.bf16.mxu0 0
        %3765 = vmatmul.mubr.bf16.gmra.mrb[0].mxu0 %v3554
        %v3766 = vpop.f32.mrb[0].mxu0
        %v3767 = vadd.f32 0.0, %v3766
        %v3768 = vpop.f32.mrb[0].mxu0
        %v3769 = vpop.f32.mrb[0].mxu0
        %v3770 = vadd.f32 0.0, %v3769
        %v3771 = vpop.f32.mrb[0].mxu0
        %3772 = vmatprep.mubr.bf16.mxu0 0
        %3773 = vmatmul.mubr.bf16.gmra.mrb[0].mxu0 %v3555
        %v3774 = vpop.f32.mrb[0].mxu0
        %v3775 = vadd.f32 0.0, %v3774
        %v3776 = vpop.f32.mrb[0].mxu0
        %v3777 = vpop.f32.mrb[0].mxu0
        %v3778 = vadd.f32 0.0, %v3777
        %v3779 = vpop.f32.mrb[0].mxu0
        %3780 = vdwg.mxu0
        %v3781 = vadd.f32 %v3394, %v3655
        %v3782 = vadd.f32 %v3395, %v3658
        %v3783 = vadd.f32 %v3396, %v3663
        %v3784 = vadd.f32 %v3397, %v3666
        %v3785 = vadd.f32 %v3398, %v3671
        %v3786 = vadd.f32 %v3399, %v3674
        %v3787 = vadd.f32 %v3400, %v3679
        %v3788 = vadd.f32 %v3401, %v3682
        %v3789 = vadd.f32 %v3402, %v3687
        %v3790 = vadd.f32 %v3403, %v3690
        %v3791 = vadd.f32 %v3404, %v3695
        %v3792 = vadd.f32 %v3405, %v3698
        %v3793 = vadd.f32 %v3406, %v3703
        %v3794 = vadd.f32 %v3407, %v3706
        %v3795 = vadd.f32 %v3408, %v3711
        %v3796 = vadd.f32 %v3409, %v3714
        %v3797 = vadd.f32 %v3410, %v3719
        %v3798 = vadd.f32 %v3411, %v3722
        %v3799 = vadd.f32 %v3412, %v3727
        %v3800 = vadd.f32 %v3413, %v3730
        %v3801 = vadd.f32 %v3414, %v3735
        %v3802 = vadd.f32 %v3415, %v3738
        %v3803 = vadd.f32 %v3416, %v3743
        %v3804 = vadd.f32 %v3417, %v3746
        %v3805 = vadd.f32 %v3418, %v3751
        %v3806 = vadd.f32 %v3419, %v3754
        %v3807 = vadd.f32 %v3420, %v3759
        %v3808 = vadd.f32 %v3421, %v3762
        %v3809 = vadd.f32 %v3422, %v3767
        %v3810 = vadd.f32 %v3423, %v3770
        %v3811 = vadd.f32 %v3424, %v3775
        %v3812 = vadd.f32 %v3425, %v3778
        %v3813 = vld [vmem:[%s3426] sm:$0xf]
        %v3814 = vld [vmem:[%s3426 + $0x4] sm:$0xf]
        %v3815 = vld [vmem:[%s3426 + $0x8] sm:$0x1]
        %v3816 = vld [vmem:[%s3426 + $0xc] sm:$0xf]
        %v3817 = vld [vmem:[%s3426 + $0x10] sm:$0xf]
        %v3818 = vld [vmem:[%s3426 + $0x14] sm:$0x1]
        %v3819 = vld [vmem:[%s3426 + $0x18] sm:$0xf]
        %v3820 = vld [vmem:[%s3426 + $0x1c] sm:$0xf]
        %v3821 = vld [vmem:[%s3426 + $0x20] sm:$0x1]
        %v3822 = vld [vmem:[%s3426 + $0x24] sm:$0xf]
        %v3823 = vld [vmem:[%s3426 + $0x28] sm:$0xf]
        %v3824 = vld [vmem:[%s3426 + $0x2c] sm:$0x1]
        %v3825 = vld [vmem:[%s3426 + $0x30] sm:$0xf]
        %v3826 = vld [vmem:[%s3426 + $0x34] sm:$0xf]
        %v3827 = vld [vmem:[%s3426 + $0x38] sm:$0x1]
        %v3828 = vld [vmem:[%s3426 + $0x3c] sm:$0xf]
        %v3829 = vld [vmem:[%s3426 + $0x40] sm:$0xf]
        %v3830 = vld [vmem:[%s3426 + $0x44] sm:$0x1]
        %v3831 = vld [vmem:[%s3426 + $0x48] sm:$0xf]
        %v3832 = vld [vmem:[%s3426 + $0x4c] sm:$0xf]
        %v3833 = vld [vmem:[%s3426 + $0x50] sm:$0x1]
        %v3834 = vld [vmem:[%s3426 + $0x54] sm:$0xf]
        %v3835 = vld [vmem:[%s3426 + $0x58] sm:$0xf]
        %v3836 = vld [vmem:[%s3426 + $0x5c] sm:$0x1]
        %v3837 = vld [vmem:[%s3426 + $0x60] sm:$0xf]
        %v3838 = vld [vmem:[%s3426 + $0x64] sm:$0xf]
        %v3839 = vld [vmem:[%s3426 + $0x68] sm:$0x1]
        %v3840 = vld [vmem:[%s3426 + $0x6c] sm:$0xf]
        %v3841 = vld [vmem:[%s3426 + $0x70] sm:$0xf]
        %v3842 = vld [vmem:[%s3426 + $0x74] sm:$0x1]
        %v3843 = vld [vmem:[%s3426 + $0x78] sm:$0xf]
        %v3844 = vld [vmem:[%s3426 + $0x7c] sm:$0xf]
        %v3845 = vld [vmem:[%s3426 + $0x80] sm:$0x1]
        %v3846 = vld [vmem:[%s3426 + $0x84] sm:$0xf]
        %v3847 = vld [vmem:[%s3426 + $0x88] sm:$0xf]
        %v3848 = vld [vmem:[%s3426 + $0x8c] sm:$0x1]
        %v3849 = vld [vmem:[%s3426 + $0x90] sm:$0xf]
        %v3850 = vld [vmem:[%s3426 + $0x94] sm:$0xf]
        %v3851 = vld [vmem:[%s3426 + $0x98] sm:$0x1]
        %v3852 = vld [vmem:[%s3426 + $0x9c] sm:$0xf]
        %v3853 = vld [vmem:[%s3426 + $0xa0] sm:$0xf]
        %v3854 = vld [vmem:[%s3426 + $0xa4] sm:$0x1]
        %v3855 = vld [vmem:[%s3426 + $0xa8] sm:$0xf]
        %v3856 = vld [vmem:[%s3426 + $0xac] sm:$0xf]
        %v3857 = vld [vmem:[%s3426 + $0xb0] sm:$0x1]
        %v3858 = vld [vmem:[%s3426 + $0xb4] sm:$0xf]
        %v3859 = vld [vmem:[%s3426 + $0xb8] sm:$0xf]
        %v3860 = vld [vmem:[%s3426 + $0xbc] sm:$0x1]
        %v3862 = vshrl.u32 %v3813, 16
        %v3864 = vrot.slane %v3862, 4
        %v3865 = vshll.u32 %v3813, 16
        %v3867 = vrot.slane %v3865, 5
        %v3868 = vor.u32 %v3864, %v3867
        %v3869 = vrot.slane %v3868, 4
        %v3871 = vshll.u32 %v3814, 16
        %v3873 = vrot.slane %v3871, 5
        %v3874 = vsel %vm322, %v3869, %v3873
        %v3875 = vshrl.u32 %v3814, 16
        %v3877 = vrot.slane %v3875, 4
        %v3878 = vor.u32 %v3877, %v3873
        %v3879 = vrot.slane %v3878, 4
        %v3881 = vshll.u32 %v3815, 16
        %v3883 = vrot.slane %v3881, 5
        %v3884 = vsel %vm322, %v3879, %v3883
        %v3886 = vshrl.u32 %v3816, 16
        %v3888 = vrot.slane %v3886, 4
        %v3889 = vshll.u32 %v3816, 16
        %v3891 = vrot.slane %v3889, 5
        %v3892 = vor.u32 %v3888, %v3891
        %v3893 = vrot.slane %v3892, 4
        %v3895 = vshll.u32 %v3817, 16
        %v3897 = vrot.slane %v3895, 5
        %v3898 = vsel %vm322, %v3893, %v3897
        %v3899 = vshrl.u32 %v3817, 16
        %v3901 = vrot.slane %v3899, 4
        %v3902 = vor.u32 %v3901, %v3897
        %v3903 = vrot.slane %v3902, 4
        %v3905 = vshll.u32 %v3818, 16
        %v3907 = vrot.slane %v3905, 5
        %v3908 = vsel %vm322, %v3903, %v3907
        %v3910 = vshrl.u32 %v3819, 16
        %v3912 = vrot.slane %v3910, 4
        %v3913 = vshll.u32 %v3819, 16
        %v3915 = vrot.slane %v3913, 5
        %v3916 = vor.u32 %v3912, %v3915
        %v3917 = vrot.slane %v3916, 4
        %v3919 = vshll.u32 %v3820, 16
        %v3921 = vrot.slane %v3919, 5
        %v3922 = vsel %vm322, %v3917, %v3921
        %v3923 = vshrl.u32 %v3820, 16
        %v3925 = vrot.slane %v3923, 4
        %v3926 = vor.u32 %v3925, %v3921
        %v3927 = vrot.slane %v3926, 4
        %v3929 = vshll.u32 %v3821, 16
        %v3931 = vrot.slane %v3929, 5
        %v3932 = vsel %vm322, %v3927, %v3931
        %v3934 = vshrl.u32 %v3822, 16
        %v3936 = vrot.slane %v3934, 4
        %v3937 = vshll.u32 %v3822, 16
        %v3939 = vrot.slane %v3937, 5
        %v3940 = vor.u32 %v3936, %v3939
        %v3941 = vrot.slane %v3940, 4
        %v3943 = vshll.u32 %v3823, 16
        %v3945 = vrot.slane %v3943, 5
        %v3946 = vsel %vm322, %v3941, %v3945
        %v3947 = vshrl.u32 %v3823, 16
        %v3949 = vrot.slane %v3947, 4
        %v3950 = vor.u32 %v3949, %v3945
        %v3951 = vrot.slane %v3950, 4
        %v3953 = vshll.u32 %v3824, 16
        %v3955 = vrot.slane %v3953, 5
        %v3956 = vsel %vm322, %v3951, %v3955
        %v3958 = vshrl.u32 %v3825, 16
        %v3960 = vrot.slane %v3958, 4
        %v3961 = vshll.u32 %v3825, 16
        %v3963 = vrot.slane %v3961, 5
        %v3964 = vor.u32 %v3960, %v3963
        %v3965 = vrot.slane %v3964, 4
        %v3967 = vshll.u32 %v3826, 16
        %v3969 = vrot.slane %v3967, 5
        %v3970 = vsel %vm322, %v3965, %v3969
        %v3971 = vshrl.u32 %v3826, 16
        %v3973 = vrot.slane %v3971, 4
        %v3974 = vor.u32 %v3973, %v3969
        %v3975 = vrot.slane %v3974, 4
        %v3977 = vshll.u32 %v3827, 16
        %v3979 = vrot.slane %v3977, 5
        %v3980 = vsel %vm322, %v3975, %v3979
        %v3982 = vshrl.u32 %v3828, 16
        %v3984 = vrot.slane %v3982, 4
        %v3985 = vshll.u32 %v3828, 16
        %v3987 = vrot.slane %v3985, 5
        %v3988 = vor.u32 %v3984, %v3987
        %v3989 = vrot.slane %v3988, 4
        %v3991 = vshll.u32 %v3829, 16
        %v3993 = vrot.slane %v3991, 5
        %v3994 = vsel %vm322, %v3989, %v3993
        %v3995 = vshrl.u32 %v3829, 16
        %v3997 = vrot.slane %v3995, 4
        %v3998 = vor.u32 %v3997, %v3993
        %v3999 = vrot.slane %v3998, 4
        %v4001 = vshll.u32 %v3830, 16
        %v4003 = vrot.slane %v4001, 5
        %v4004 = vsel %vm322, %v3999, %v4003
        %v4006 = vshrl.u32 %v3831, 16
        %v4008 = vrot.slane %v4006, 4
        %v4009 = vshll.u32 %v3831, 16
        %v4011 = vrot.slane %v4009, 5
        %v4012 = vor.u32 %v4008, %v4011
        %v4013 = vrot.slane %v4012, 4
        %v4015 = vshll.u32 %v3832, 16
        %v4017 = vrot.slane %v4015, 5
        %v4018 = vsel %vm322, %v4013, %v4017
        %v4019 = vshrl.u32 %v3832, 16
        %v4021 = vrot.slane %v4019, 4
        %v4022 = vor.u32 %v4021, %v4017
        %v4023 = vrot.slane %v4022, 4
        %v4025 = vshll.u32 %v3833, 16
        %v4027 = vrot.slane %v4025, 5
        %v4028 = vsel %vm322, %v4023, %v4027
        %v4030 = vshrl.u32 %v3834, 16
        %v4032 = vrot.slane %v4030, 4
        %v4033 = vshll.u32 %v3834, 16
        %v4035 = vrot.slane %v4033, 5
        %v4036 = vor.u32 %v4032, %v4035
        %v4037 = vrot.slane %v4036, 4
        %v4039 = vshll.u32 %v3835, 16
        %v4041 = vrot.slane %v4039, 5
        %v4042 = vsel %vm322, %v4037, %v4041
        %v4043 = vshrl.u32 %v3835, 16
        %v4045 = vrot.slane %v4043, 4
        %v4046 = vor.u32 %v4045, %v4041
        %v4047 = vrot.slane %v4046, 4
        %v4049 = vshll.u32 %v3836, 16
        %v4051 = vrot.slane %v4049, 5
        %v4052 = vsel %vm322, %v4047, %v4051
        %v4054 = vshrl.u32 %v3837, 16
        %v4056 = vrot.slane %v4054, 4
        %v4057 = vshll.u32 %v3837, 16
        %v4059 = vrot.slane %v4057, 5
        %v4060 = vor.u32 %v4056, %v4059
        %v4061 = vrot.slane %v4060, 4
        %v4063 = vshll.u32 %v3838, 16
        %v4065 = vrot.slane %v4063, 5
        %v4066 = vsel %vm322, %v4061, %v4065
        %v4067 = vshrl.u32 %v3838, 16
        %v4069 = vrot.slane %v4067, 4
        %v4070 = vor.u32 %v4069, %v4065
        %v4071 = vrot.slane %v4070, 4
        %v4073 = vshll.u32 %v3839, 16
        %v4075 = vrot.slane %v4073, 5
        %v4076 = vsel %vm322, %v4071, %v4075
        %v4078 = vshrl.u32 %v3840, 16
        %v4080 = vrot.slane %v4078, 4
        %v4081 = vshll.u32 %v3840, 16
        %v4083 = vrot.slane %v4081, 5
        %v4084 = vor.u32 %v4080, %v4083
        %v4085 = vrot.slane %v4084, 4
        %v4087 = vshll.u32 %v3841, 16
        %v4089 = vrot.slane %v4087, 5
        %v4090 = vsel %vm322, %v4085, %v4089
        %v4091 = vshrl.u32 %v3841, 16
        %v4093 = vrot.slane %v4091, 4
        %v4094 = vor.u32 %v4093, %v4089
        %v4095 = vrot.slane %v4094, 4
        %v4097 = vshll.u32 %v3842, 16
        %v4099 = vrot.slane %v4097, 5
        %v4100 = vsel %vm322, %v4095, %v4099
        %v4102 = vshrl.u32 %v3843, 16
        %v4104 = vrot.slane %v4102, 4
        %v4105 = vshll.u32 %v3843, 16
        %v4107 = vrot.slane %v4105, 5
        %v4108 = vor.u32 %v4104, %v4107
        %v4109 = vrot.slane %v4108, 4
        %v4111 = vshll.u32 %v3844, 16
        %v4113 = vrot.slane %v4111, 5
        %v4114 = vsel %vm322, %v4109, %v4113
        %v4115 = vshrl.u32 %v3844, 16
        %v4117 = vrot.slane %v4115, 4
        %v4118 = vor.u32 %v4117, %v4113
        %v4119 = vrot.slane %v4118, 4
        %v4121 = vshll.u32 %v3845, 16
        %v4123 = vrot.slane %v4121, 5
        %v4124 = vsel %vm322, %v4119, %v4123
        %v4126 = vshrl.u32 %v3846, 16
        %v4128 = vrot.slane %v4126, 4
        %v4129 = vshll.u32 %v3846, 16
        %v4131 = vrot.slane %v4129, 5
        %v4132 = vor.u32 %v4128, %v4131
        %v4133 = vrot.slane %v4132, 4
        %v4135 = vshll.u32 %v3847, 16
        %v4137 = vrot.slane %v4135, 5
        %v4138 = vsel %vm322, %v4133, %v4137
        %v4139 = vshrl.u32 %v3847, 16
        %v4141 = vrot.slane %v4139, 4
        %v4142 = vor.u32 %v4141, %v4137
        %v4143 = vrot.slane %v4142, 4
        %v4145 = vshll.u32 %v3848, 16
        %v4147 = vrot.slane %v4145, 5
        %v4148 = vsel %vm322, %v4143, %v4147
        %v4150 = vshrl.u32 %v3849, 16
        %v4152 = vrot.slane %v4150, 4
        %v4153 = vshll.u32 %v3849, 16
        %v4155 = vrot.slane %v4153, 5
        %v4156 = vor.u32 %v4152, %v4155
        %v4157 = vrot.slane %v4156, 4
        %v4159 = vshll.u32 %v3850, 16
        %v4161 = vrot.slane %v4159, 5
        %v4162 = vsel %vm322, %v4157, %v4161
        %v4163 = vshrl.u32 %v3850, 16
        %v4165 = vrot.slane %v4163, 4
        %v4166 = vor.u32 %v4165, %v4161
        %v4167 = vrot.slane %v4166, 4
        %v4169 = vshll.u32 %v3851, 16
        %v4171 = vrot.slane %v4169, 5
        %v4172 = vsel %vm322, %v4167, %v4171
        %v4174 = vshrl.u32 %v3852, 16
        %v4176 = vrot.slane %v4174, 4
        %v4177 = vshll.u32 %v3852, 16
        %v4179 = vrot.slane %v4177, 5
        %v4180 = vor.u32 %v4176, %v4179
        %v4181 = vrot.slane %v4180, 4
        %v4183 = vshll.u32 %v3853, 16
        %v4185 = vrot.slane %v4183, 5
        %v4186 = vsel %vm322, %v4181, %v4185
        %v4187 = vshrl.u32 %v3853, 16
        %v4189 = vrot.slane %v4187, 4
        %v4190 = vor.u32 %v4189, %v4185
        %v4191 = vrot.slane %v4190, 4
        %v4193 = vshll.u32 %v3854, 16
        %v4195 = vrot.slane %v4193, 5
        %v4196 = vsel %vm322, %v4191, %v4195
        %v4198 = vshrl.u32 %v3855, 16
        %v4200 = vrot.slane %v4198, 4
        %v4201 = vshll.u32 %v3855, 16
        %v4203 = vrot.slane %v4201, 5
        %v4204 = vor.u32 %v4200, %v4203
        %v4205 = vrot.slane %v4204, 4
        %v4207 = vshll.u32 %v3856, 16
        %v4209 = vrot.slane %v4207, 5
        %v4210 = vsel %vm322, %v4205, %v4209
        %v4211 = vshrl.u32 %v3856, 16
        %v4213 = vrot.slane %v4211, 4
        %v4214 = vor.u32 %v4213, %v4209
        %v4215 = vrot.slane %v4214, 4
        %v4217 = vshll.u32 %v3857, 16
        %v4219 = vrot.slane %v4217, 5
        %v4220 = vsel %vm322, %v4215, %v4219
        %v4222 = vshrl.u32 %v3858, 16
        %v4224 = vrot.slane %v4222, 4
        %v4225 = vshll.u32 %v3858, 16
        %v4227 = vrot.slane %v4225, 5
        %v4228 = vor.u32 %v4224, %v4227
        %v4229 = vrot.slane %v4228, 4
        %v4231 = vshll.u32 %v3859, 16
        %v4233 = vrot.slane %v4231, 5
        %v4234 = vsel %vm322, %v4229, %v4233
        %v4235 = vshrl.u32 %v3859, 16
        %v4237 = vrot.slane %v4235, 4
        %v4238 = vor.u32 %v4237, %v4233
        %v4239 = vrot.slane %v4238, 4
        %v4241 = vshll.u32 %v3860, 16
        %v4243 = vrot.slane %v4241, 5
        %v4244 = vsel %vm322, %v4239, %v4243
        %s4245 = scalar_lea.vmem %s248, 448
        %v4246 = vld [vmem:[%s4245] sm:$0xf]
        %v4247 = vld [vmem:[%s4245 + $0x4] sm:$0xf]
        %v4248 = vld [vmem:[%s4245 + $0x8] sm:$0xf]
        %v4249 = vld [vmem:[%s4245 + $0xc] sm:$0xf]
        %v4250 = vld [vmem:[%s4245 + $0x10] sm:$0xf]
        %v4251 = vld [vmem:[%s4245 + $0x14] sm:$0xf]
        %v4252 = vld [vmem:[%s4245 + $0x18] sm:$0xf]
        %v4253 = vld [vmem:[%s4245 + $0x1c] sm:$0xf]
        %v4254 = vld [vmem:[%s4245 + $0x20] sm:$0xf]
        %v4255 = vld [vmem:[%s4245 + $0x24] sm:$0xf]
        %v4256 = vld [vmem:[%s4245 + $0x28] sm:$0xf]
        %v4257 = vld [vmem:[%s4245 + $0x2c] sm:$0xf]
        %v4258 = vld [vmem:[%s4245 + $0x30] sm:$0xf]
        %v4259 = vld [vmem:[%s4245 + $0x34] sm:$0xf]
        %v4260 = vld [vmem:[%s4245 + $0x38] sm:$0xf]
        %v4261 = vld [vmem:[%s4245 + $0x3c] sm:$0xf]
        %v4262 = vunpack.c.l.b16 %v3874
        %v4263 = vunpack.c.l.b16 %v3884
        %v4264 = vunpack.c.l.b16 %v3898
        %v4265 = vunpack.c.l.b16 %v3908
        %v4266 = vunpack.c.l.b16 %v3922
        %v4267 = vunpack.c.l.b16 %v3932
        %v4268 = vunpack.c.l.b16 %v3946
        %v4269 = vunpack.c.l.b16 %v3956
        %v4270 = vunpack.c.l.b16 %v3970
        %v4271 = vunpack.c.l.b16 %v3980
        %v4272 = vunpack.c.l.b16 %v3994
        %v4273 = vunpack.c.l.b16 %v4004
        %v4274 = vunpack.c.l.b16 %v4018
        %v4275 = vunpack.c.l.b16 %v4028
        %v4276 = vunpack.c.l.b16 %v4042
        %v4277 = vunpack.c.l.b16 %v4052
        %v4278 = vunpack.c.l.b16 %v4066
        %v4279 = vunpack.c.l.b16 %v4076
        %v4280 = vunpack.c.l.b16 %v4090
        %v4281 = vunpack.c.l.b16 %v4100
        %v4282 = vunpack.c.l.b16 %v4114
        %v4283 = vunpack.c.l.b16 %v4124
        %v4284 = vunpack.c.l.b16 %v4138
        %v4285 = vunpack.c.l.b16 %v4148
        %v4286 = vunpack.c.l.b16 %v4162
        %v4287 = vunpack.c.l.b16 %v4172
        %v4288 = vunpack.c.l.b16 %v4186
        %v4289 = vunpack.c.l.b16 %v4196
        %v4290 = vunpack.c.l.b16 %v4210
        %v4291 = vunpack.c.l.b16 %v4220
        %v4292 = vunpack.c.l.b16 %v4234
        %v4293 = vunpack.c.l.b16 %v4244
        %v4294 = vpack.c.b16 %v4263, %v4262
        %v4295 = vpack.c.b16 %v4265, %v4264
        %v4296 = vpack.c.b16 %v4267, %v4266
        %v4297 = vpack.c.b16 %v4269, %v4268
        %v4298 = vpack.c.b16 %v4271, %v4270
        %v4299 = vpack.c.b16 %v4273, %v4272
        %v4300 = vpack.c.b16 %v4275, %v4274
        %v4301 = vpack.c.b16 %v4277, %v4276
        %v4302 = vpack.c.b16 %v4279, %v4278
        %v4303 = vpack.c.b16 %v4281, %v4280
        %v4304 = vpack.c.b16 %v4283, %v4282
        %v4305 = vpack.c.b16 %v4285, %v4284
        %v4306 = vpack.c.b16 %v4287, %v4286
        %v4307 = vpack.c.b16 %v4289, %v4288
        %v4308 = vpack.c.b16 %v4291, %v4290
        %v4309 = vpack.c.b16 %v4293, %v4292
        %v4342 = vunpack.c.l.b16 %v4246
        %v4343 = vunpack.c.l.b16 %v4247
        %v4344 = vunpack.c.l.b16 %v4248
        %v4345 = vunpack.c.l.b16 %v4249
        %v4346 = vunpack.c.l.b16 %v4250
        %v4347 = vunpack.c.l.b16 %v4251
        %v4348 = vunpack.c.l.b16 %v4252
        %v4349 = vunpack.c.l.b16 %v4253
        %v4350 = vunpack.c.l.b16 %v4254
        %v4351 = vunpack.c.l.b16 %v4255
        %v4352 = vunpack.c.l.b16 %v4256
        %v4353 = vunpack.c.l.b16 %v4257
        %v4354 = vunpack.c.l.b16 %v4258
        %v4355 = vunpack.c.l.b16 %v4259
        %v4356 = vunpack.c.l.b16 %v4260
        %v4357 = vunpack.c.l.b16 %v4261
        %v4358 = vpack.c.b16 %v4343, %v4342
        %v4359 = vpack.c.b16 %v4345, %v4344
        %v4360 = vpack.c.b16 %v4347, %v4346
        %v4361 = vpack.c.b16 %v4349, %v4348
        %v4362 = vpack.c.b16 %v4351, %v4350
        %v4363 = vpack.c.b16 %v4353, %v4352
        %v4364 = vpack.c.b16 %v4355, %v4354
        %v4365 = vpack.c.b16 %v4357, %v4356
        %4374 = vmatprep.subr.bf16.mxu0 0
        %4375 = vmatpush1.bf16.msra.mxu0 %v4358
        %4376 = vmatprep.subr.bf16.mxu0 0
        %4377 = vmatpush1.bf16.msra.mxu0 %v4359
        %4378 = vmatprep.subr.bf16.mxu0 0
        %4379 = vmatpush1.bf16.msra.mxu0 %v4360
        %4380 = vmatprep.subr.bf16.mxu0 0
        %4381 = vmatpush1.bf16.msra.mxu0 %v4361
        %4382 = vmatprep.subr.bf16.mxu0 0
        %4383 = vmatpush1.bf16.msra.mxu0 %v4362
        %4384 = vmatprep.subr.bf16.mxu0 0
        %4385 = vmatpush1.bf16.msra.mxu0 %v4363
        %4386 = vmatprep.subr.bf16.mxu0 0
        %4387 = vmatpush1.bf16.msra.mxu0 %v4364
        %4388 = vmatprep.subr.bf16.mxu0 0
        %4389 = vmatpush1.bf16.msra.mxu0 %v4365
        %4390 = vmatprep.subr.bf16.mxu0 0
        %4391 = vmatpush1.bf16.msra.mxu0 0
        %4392 = vmatprep.subr.bf16.mxu0 0
        %4393 = vmatpush1.bf16.msra.mxu0 0
        %4394 = vmatprep.subr.bf16.mxu0 0
        %4395 = vmatpush1.bf16.msra.mxu0 0
        %4396 = vmatprep.subr.bf16.mxu0 0
        %4397 = vmatpush1.bf16.msra.mxu0 0
        %4398 = vmatprep.subr.bf16.mxu0 0
        %4399 = vmatpush1.bf16.msra.mxu0 0
        %4400 = vmatprep.subr.bf16.mxu0 0
        %4401 = vmatpush1.bf16.msra.mxu0 0
        %4402 = vmatprep.subr.bf16.mxu0 0
        %4403 = vmatpush1.bf16.msra.mxu0 0
        %4404 = vmatprep.subr.bf16.mxu0 0
        %4405 = vmatpush1.bf16.msra.mxu0 0
        %4406 = vmatprep.mubr.bf16.mxu0 0
        %4407 = vmatmul.mubr.bf16.gmra.mrb[0].mxu0 %v4294
        %v4408 = vpop.f32.mrb[0].mxu0
        %v4409 = vadd.f32 0.0, %v4408
        %v4410 = vpop.f32.mrb[0].mxu0
        %v4411 = vpop.f32.mrb[0].mxu0
        %v4412 = vadd.f32 0.0, %v4411
        %v4413 = vpop.f32.mrb[0].mxu0
        %4414 = vmatprep.mubr.bf16.mxu0 0
        %4415 = vmatmul.mubr.bf16.gmra.mrb[0].mxu0 %v4295
        %v4416 = vpop.f32.mrb[0].mxu0
        %v4417 = vadd.f32 0.0, %v4416
        %v4418 = vpop.f32.mrb[0].mxu0
        %v4419 = vpop.f32.mrb[0].mxu0
        %v4420 = vadd.f32 0.0, %v4419
        %v4421 = vpop.f32.mrb[0].mxu0
        %4422 = vmatprep.mubr.bf16.mxu0 0
        %4423 = vmatmul.mubr.bf16.gmra.mrb[0].mxu0 %v4296
        %v4424 = vpop.f32.mrb[0].mxu0
        %v4425 = vadd.f32 0.0, %v4424
        %v4426 = vpop.f32.mrb[0].mxu0
        %v4427 = vpop.f32.mrb[0].mxu0
        %v4428 = vadd.f32 0.0, %v4427
        %v4429 = vpop.f32.mrb[0].mxu0
        %4430 = vmatprep.mubr.bf16.mxu0 0
        %4431 = vmatmul.mubr.bf16.gmra.mrb[0].mxu0 %v4297
        %v4432 = vpop.f32.mrb[0].mxu0
        %v4433 = vadd.f32 0.0, %v4432
        %v4434 = vpop.f32.mrb[0].mxu0
        %v4435 = vpop.f32.mrb[0].mxu0
        %v4436 = vadd.f32 0.0, %v4435
        %v4437 = vpop.f32.mrb[0].mxu0
        %4438 = vmatprep.mubr.bf16.mxu0 0
        %4439 = vmatmul.mubr.bf16.gmra.mrb[0].mxu0 %v4298
        %v4440 = vpop.f32.mrb[0].mxu0
        %v4441 = vadd.f32 0.0, %v4440
        %v4442 = vpop.f32.mrb[0].mxu0
        %v4443 = vpop.f32.mrb[0].mxu0
        %v4444 = vadd.f32 0.0, %v4443
        %v4445 = vpop.f32.mrb[0].mxu0
        %4446 = vmatprep.mubr.bf16.mxu0 0
        %4447 = vmatmul.mubr.bf16.gmra.mrb[0].mxu0 %v4299
        %v4448 = vpop.f32.mrb[0].mxu0
        %v4449 = vadd.f32 0.0, %v4448
        %v4450 = vpop.f32.mrb[0].mxu0
        %v4451 = vpop.f32.mrb[0].mxu0
        %v4452 = vadd.f32 0.0, %v4451
        %v4453 = vpop.f32.mrb[0].mxu0
        %4454 = vmatprep.mubr.bf16.mxu0 0
        %4455 = vmatmul.mubr.bf16.gmra.mrb[0].mxu0 %v4300
        %v4456 = vpop.f32.mrb[0].mxu0
        %v4457 = vadd.f32 0.0, %v4456
        %v4458 = vpop.f32.mrb[0].mxu0
        %v4459 = vpop.f32.mrb[0].mxu0
        %v4460 = vadd.f32 0.0, %v4459
        %v4461 = vpop.f32.mrb[0].mxu0
        %4462 = vmatprep.mubr.bf16.mxu0 0
        %4463 = vmatmul.mubr.bf16.gmra.mrb[0].mxu0 %v4301
        %v4464 = vpop.f32.mrb[0].mxu0
        %v4465 = vadd.f32 0.0, %v4464
        %v4466 = vpop.f32.mrb[0].mxu0
        %v4467 = vpop.f32.mrb[0].mxu0
        %v4468 = vadd.f32 0.0, %v4467
        %v4469 = vpop.f32.mrb[0].mxu0
        %4470 = vmatprep.mubr.bf16.mxu0 0
        %4471 = vmatmul.mubr.bf16.gmra.mrb[0].mxu0 %v4302
        %v4472 = vpop.f32.mrb[0].mxu0
        %v4473 = vadd.f32 0.0, %v4472
        %v4474 = vpop.f32.mrb[0].mxu0
        %v4475 = vpop.f32.mrb[0].mxu0
        %v4476 = vadd.f32 0.0, %v4475
        %v4477 = vpop.f32.mrb[0].mxu0
        %4478 = vmatprep.mubr.bf16.mxu0 0
        %4479 = vmatmul.mubr.bf16.gmra.mrb[0].mxu0 %v4303
        %v4480 = vpop.f32.mrb[0].mxu0
        %v4481 = vadd.f32 0.0, %v4480
        %v4482 = vpop.f32.mrb[0].mxu0
        %v4483 = vpop.f32.mrb[0].mxu0
        %v4484 = vadd.f32 0.0, %v4483
        %v4485 = vpop.f32.mrb[0].mxu0
        %4486 = vmatprep.mubr.bf16.mxu0 0
        %4487 = vmatmul.mubr.bf16.gmra.mrb[0].mxu0 %v4304
        %v4488 = vpop.f32.mrb[0].mxu0
        %v4489 = vadd.f32 0.0, %v4488
        %v4490 = vpop.f32.mrb[0].mxu0
        %v4491 = vpop.f32.mrb[0].mxu0
        %v4492 = vadd.f32 0.0, %v4491
        %v4493 = vpop.f32.mrb[0].mxu0
        %4494 = vmatprep.mubr.bf16.mxu0 0
        %4495 = vmatmul.mubr.bf16.gmra.mrb[0].mxu0 %v4305
        %v4496 = vpop.f32.mrb[0].mxu0
        %v4497 = vadd.f32 0.0, %v4496
        %v4498 = vpop.f32.mrb[0].mxu0
        %v4499 = vpop.f32.mrb[0].mxu0
        %v4500 = vadd.f32 0.0, %v4499
        %v4501 = vpop.f32.mrb[0].mxu0
        %4502 = vmatprep.mubr.bf16.mxu0 0
        %4503 = vmatmul.mubr.bf16.gmra.mrb[0].mxu0 %v4306
        %v4504 = vpop.f32.mrb[0].mxu0
        %v4505 = vadd.f32 0.0, %v4504
        %v4506 = vpop.f32.mrb[0].mxu0
        %v4507 = vpop.f32.mrb[0].mxu0
        %v4508 = vadd.f32 0.0, %v4507
        %v4509 = vpop.f32.mrb[0].mxu0
        %4510 = vmatprep.mubr.bf16.mxu0 0
        %4511 = vmatmul.mubr.bf16.gmra.mrb[0].mxu0 %v4307
        %v4512 = vpop.f32.mrb[0].mxu0
        %v4513 = vadd.f32 0.0, %v4512
        %v4514 = vpop.f32.mrb[0].mxu0
        %v4515 = vpop.f32.mrb[0].mxu0
        %v4516 = vadd.f32 0.0, %v4515
        %v4517 = vpop.f32.mrb[0].mxu0
        %4518 = vmatprep.mubr.bf16.mxu0 0
        %4519 = vmatmul.mubr.bf16.gmra.mrb[0].mxu0 %v4308
        %v4520 = vpop.f32.mrb[0].mxu0
        %v4521 = vadd.f32 0.0, %v4520
        %v4522 = vpop.f32.mrb[0].mxu0
        %v4523 = vpop.f32.mrb[0].mxu0
        %v4524 = vadd.f32 0.0, %v4523
        %v4525 = vpop.f32.mrb[0].mxu0
        %4526 = vmatprep.mubr.bf16.mxu0 0
        %4527 = vmatmul.mubr.bf16.gmra.mrb[0].mxu0 %v4309
        %v4528 = vpop.f32.mrb[0].mxu0
        %v4529 = vadd.f32 0.0, %v4528
        %v4530 = vpop.f32.mrb[0].mxu0
        %v4531 = vpop.f32.mrb[0].mxu0
        %v4532 = vadd.f32 0.0, %v4531
        %v4533 = vpop.f32.mrb[0].mxu0
        %4534 = vdwg.mxu0
        %v4535 = vadd.f32 %v3781, %v4409
        %v4536 = vadd.f32 %v3782, %v4412
        %v4537 = vadd.f32 %v3783, %v4417
        %v4538 = vadd.f32 %v3784, %v4420
        %v4539 = vadd.f32 %v3785, %v4425
        %v4540 = vadd.f32 %v3786, %v4428
        %v4541 = vadd.f32 %v3787, %v4433
        %v4542 = vadd.f32 %v3788, %v4436
        %v4543 = vadd.f32 %v3789, %v4441
        %v4544 = vadd.f32 %v3790, %v4444
        %v4545 = vadd.f32 %v3791, %v4449
        %v4546 = vadd.f32 %v3792, %v4452
        %v4547 = vadd.f32 %v3793, %v4457
        %v4548 = vadd.f32 %v3794, %v4460
        %v4549 = vadd.f32 %v3795, %v4465
        %v4550 = vadd.f32 %v3796, %v4468
        %v4551 = vadd.f32 %v3797, %v4473
        %v4552 = vadd.f32 %v3798, %v4476
        %v4553 = vadd.f32 %v3799, %v4481
        %v4554 = vadd.f32 %v3800, %v4484
        %v4555 = vadd.f32 %v3801, %v4489
        %v4556 = vadd.f32 %v3802, %v4492
        %v4557 = vadd.f32 %v3803, %v4497
        %v4558 = vadd.f32 %v3804, %v4500
        %v4559 = vadd.f32 %v3805, %v4505
        %v4560 = vadd.f32 %v3806, %v4508
        %v4561 = vadd.f32 %v3807, %v4513
        %v4562 = vadd.f32 %v3808, %v4516
        %v4563 = vadd.f32 %v3809, %v4521
        %v4564 = vadd.f32 %v3810, %v4524
        %v4565 = vadd.f32 %v3811, %v4529
        %v4566 = vadd.f32 %v3812, %v4532
        %v4567 = vld [vmem:[%s3426] sm:$0xe]
        %v4568 = vld [vmem:[%s3426 + $0xc] sm:$0xe]
        %v4569 = vld [vmem:[%s3426 + $0x18] sm:$0xe]
        %v4570 = vld [vmem:[%s3426 + $0x24] sm:$0xe]
        %v4571 = vld [vmem:[%s3426 + $0x30] sm:$0xe]
        %v4572 = vld [vmem:[%s3426 + $0x3c] sm:$0xe]
        %v4573 = vld [vmem:[%s3426 + $0x48] sm:$0xe]
        %v4574 = vld [vmem:[%s3426 + $0x54] sm:$0xe]
        %v4575 = vld [vmem:[%s3426 + $0x60] sm:$0xe]
        %v4576 = vld [vmem:[%s3426 + $0x6c] sm:$0xe]
        %v4577 = vld [vmem:[%s3426 + $0x78] sm:$0xe]
        %v4578 = vld [vmem:[%s3426 + $0x84] sm:$0xe]
        %v4579 = vld [vmem:[%s3426 + $0x90] sm:$0xe]
        %v4580 = vld [vmem:[%s3426 + $0x9c] sm:$0xe]
        %v4581 = vld [vmem:[%s3426 + $0xa8] sm:$0xe]
        %v4582 = vld [vmem:[%s3426 + $0xb4] sm:$0xe]
        %v4631 = vrot.slane %v4567, 5
        %v4632 = vrot.slane %v4631, 4
        %v4633 = vrot.slane %v3814, 5
        %v4634 = vsel %vm1352, %v4632, %v4633
        %v4635 = vrot.slane %v4633, 4
        %v4636 = vrot.slane %v3815, 5
        %v4637 = vsel %vm1352, %v4635, %v4636
        %v4638 = vrot.slane %v4568, 5
        %v4639 = vrot.slane %v4638, 4
        %v4640 = vrot.slane %v3817, 5
        %v4641 = vsel %vm1352, %v4639, %v4640
        %v4642 = vrot.slane %v4640, 4
        %v4643 = vrot.slane %v3818, 5
        %v4644 = vsel %vm1352, %v4642, %v4643
        %v4645 = vrot.slane %v4569, 5
        %v4646 = vrot.slane %v4645, 4
        %v4647 = vrot.slane %v3820, 5
        %v4648 = vsel %vm1352, %v4646, %v4647
        %v4649 = vrot.slane %v4647, 4
        %v4650 = vrot.slane %v3821, 5
        %v4651 = vsel %vm1352, %v4649, %v4650
        %v4652 = vrot.slane %v4570, 5
        %v4653 = vrot.slane %v4652, 4
        %v4654 = vrot.slane %v3823, 5
        %v4655 = vsel %vm1352, %v4653, %v4654
        %v4656 = vrot.slane %v4654, 4
        %v4657 = vrot.slane %v3824, 5
        %v4658 = vsel %vm1352, %v4656, %v4657
        %v4659 = vrot.slane %v4571, 5
        %v4660 = vrot.slane %v4659, 4
        %v4661 = vrot.slane %v3826, 5
        %v4662 = vsel %vm1352, %v4660, %v4661
        %v4663 = vrot.slane %v4661, 4
        %v4664 = vrot.slane %v3827, 5
        %v4665 = vsel %vm1352, %v4663, %v4664
        %v4666 = vrot.slane %v4572, 5
        %v4667 = vrot.slane %v4666, 4
        %v4668 = vrot.slane %v3829, 5
        %v4669 = vsel %vm1352, %v4667, %v4668
        %v4670 = vrot.slane %v4668, 4
        %v4671 = vrot.slane %v3830, 5
        %v4672 = vsel %vm1352, %v4670, %v4671
        %v4673 = vrot.slane %v4573, 5
        %v4674 = vrot.slane %v4673, 4
        %v4675 = vrot.slane %v3832, 5
        %v4676 = vsel %vm1352, %v4674, %v4675
        %v4677 = vrot.slane %v4675, 4
        %v4678 = vrot.slane %v3833, 5
        %v4679 = vsel %vm1352, %v4677, %v4678
        %v4680 = vrot.slane %v4574, 5
        %v4681 = vrot.slane %v4680, 4
        %v4682 = vrot.slane %v3835, 5
        %v4683 = vsel %vm1352, %v4681, %v4682
        %v4684 = vrot.slane %v4682, 4
        %v4685 = vrot.slane %v3836, 5
        %v4686 = vsel %vm1352, %v4684, %v4685
        %v4687 = vrot.slane %v4575, 5
        %v4688 = vrot.slane %v4687, 4
        %v4689 = vrot.slane %v3838, 5
        %v4690 = vsel %vm1352, %v4688, %v4689
        %v4691 = vrot.slane %v4689, 4
        %v4692 = vrot.slane %v3839, 5
        %v4693 = vsel %vm1352, %v4691, %v4692
        %v4694 = vrot.slane %v4576, 5
        %v4695 = vrot.slane %v4694, 4
        %v4696 = vrot.slane %v3841, 5
        %v4697 = vsel %vm1352, %v4695, %v4696
        %v4698 = vrot.slane %v4696, 4
        %v4699 = vrot.slane %v3842, 5
        %v4700 = vsel %vm1352, %v4698, %v4699
        %v4701 = vrot.slane %v4577, 5
        %v4702 = vrot.slane %v4701, 4
        %v4703 = vrot.slane %v3844, 5
        %v4704 = vsel %vm1352, %v4702, %v4703
        %v4705 = vrot.slane %v4703, 4
        %v4706 = vrot.slane %v3845, 5
        %v4707 = vsel %vm1352, %v4705, %v4706
        %v4708 = vrot.slane %v4578, 5
        %v4709 = vrot.slane %v4708, 4
        %v4710 = vrot.slane %v3847, 5
        %v4711 = vsel %vm1352, %v4709, %v4710
        %v4712 = vrot.slane %v4710, 4
        %v4713 = vrot.slane %v3848, 5
        %v4714 = vsel %vm1352, %v4712, %v4713
        %v4715 = vrot.slane %v4579, 5
        %v4716 = vrot.slane %v4715, 4
        %v4717 = vrot.slane %v3850, 5
        %v4718 = vsel %vm1352, %v4716, %v4717
        %v4719 = vrot.slane %v4717, 4
        %v4720 = vrot.slane %v3851, 5
        %v4721 = vsel %vm1352, %v4719, %v4720
        %v4722 = vrot.slane %v4580, 5
        %v4723 = vrot.slane %v4722, 4
        %v4724 = vrot.slane %v3853, 5
        %v4725 = vsel %vm1352, %v4723, %v4724
        %v4726 = vrot.slane %v4724, 4
        %v4727 = vrot.slane %v3854, 5
        %v4728 = vsel %vm1352, %v4726, %v4727
        %v4729 = vrot.slane %v4581, 5
        %v4730 = vrot.slane %v4729, 4
        %v4731 = vrot.slane %v3856, 5
        %v4732 = vsel %vm1352, %v4730, %v4731
        %v4733 = vrot.slane %v4731, 4
        %v4734 = vrot.slane %v3857, 5
        %v4735 = vsel %vm1352, %v4733, %v4734
        %v4736 = vrot.slane %v4582, 5
        %v4737 = vrot.slane %v4736, 4
        %v4738 = vrot.slane %v3859, 5
        %v4739 = vsel %vm1352, %v4737, %v4738
        %v4740 = vrot.slane %v4738, 4
        %v4741 = vrot.slane %v3860, 5
        %v4742 = vsel %vm1352, %v4740, %v4741
        %s4743 = scalar_lea.vmem %s248, 512
        %v4744 = vld [vmem:[%s4743] sm:$0xf]
        %v4745 = vld [vmem:[%s4743 + $0x4] sm:$0xf]
        %v4746 = vld [vmem:[%s4743 + $0x8] sm:$0xf]
        %v4747 = vld [vmem:[%s4743 + $0xc] sm:$0xf]
        %v4748 = vld [vmem:[%s4743 + $0x10] sm:$0xf]
        %v4749 = vld [vmem:[%s4743 + $0x14] sm:$0xf]
        %v4750 = vld [vmem:[%s4743 + $0x18] sm:$0xf]
        %v4751 = vld [vmem:[%s4743 + $0x1c] sm:$0xf]
        %v4752 = vld [vmem:[%s4743 + $0x20] sm:$0xf]
        %v4753 = vld [vmem:[%s4743 + $0x24] sm:$0xf]
        %v4754 = vld [vmem:[%s4743 + $0x28] sm:$0xf]
        %v4755 = vld [vmem:[%s4743 + $0x2c] sm:$0xf]
        %v4756 = vld [vmem:[%s4743 + $0x30] sm:$0xf]
        %v4757 = vld [vmem:[%s4743 + $0x34] sm:$0xf]
        %v4758 = vld [vmem:[%s4743 + $0x38] sm:$0xf]
        %v4759 = vld [vmem:[%s4743 + $0x3c] sm:$0xf]
        %v4760 = vunpack.c.l.b16 %v4634
        %v4761 = vunpack.c.l.b16 %v4637
        %v4762 = vunpack.c.l.b16 %v4641
        %v4763 = vunpack.c.l.b16 %v4644
        %v4764 = vunpack.c.l.b16 %v4648
        %v4765 = vunpack.c.l.b16 %v4651
        %v4766 = vunpack.c.l.b16 %v4655
        %v4767 = vunpack.c.l.b16 %v4658
        %v4768 = vunpack.c.l.b16 %v4662
        %v4769 = vunpack.c.l.b16 %v4665
        %v4770 = vunpack.c.l.b16 %v4669
        %v4771 = vunpack.c.l.b16 %v4672
        %v4772 = vunpack.c.l.b16 %v4676
        %v4773 = vunpack.c.l.b16 %v4679
        %v4774 = vunpack.c.l.b16 %v4683
        %v4775 = vunpack.c.l.b16 %v4686
        %v4776 = vunpack.c.l.b16 %v4690
        %v4777 = vunpack.c.l.b16 %v4693
        %v4778 = vunpack.c.l.b16 %v4697
        %v4779 = vunpack.c.l.b16 %v4700
        %v4780 = vunpack.c.l.b16 %v4704
        %v4781 = vunpack.c.l.b16 %v4707
        %v4782 = vunpack.c.l.b16 %v4711
        %v4783 = vunpack.c.l.b16 %v4714
        %v4784 = vunpack.c.l.b16 %v4718
        %v4785 = vunpack.c.l.b16 %v4721
        %v4786 = vunpack.c.l.b16 %v4725
        %v4787 = vunpack.c.l.b16 %v4728
        %v4788 = vunpack.c.l.b16 %v4732
        %v4789 = vunpack.c.l.b16 %v4735
        %v4790 = vunpack.c.l.b16 %v4739
        %v4791 = vunpack.c.l.b16 %v4742
        %v4792 = vpack.c.b16 %v4761, %v4760
        %v4793 = vpack.c.b16 %v4763, %v4762
        %v4794 = vpack.c.b16 %v4765, %v4764
        %v4795 = vpack.c.b16 %v4767, %v4766
        %v4796 = vpack.c.b16 %v4769, %v4768
        %v4797 = vpack.c.b16 %v4771, %v4770
        %v4798 = vpack.c.b16 %v4773, %v4772
        %v4799 = vpack.c.b16 %v4775, %v4774
        %v4800 = vpack.c.b16 %v4777, %v4776
        %v4801 = vpack.c.b16 %v4779, %v4778
        %v4802 = vpack.c.b16 %v4781, %v4780
        %v4803 = vpack.c.b16 %v4783, %v4782
        %v4804 = vpack.c.b16 %v4785, %v4784
        %v4805 = vpack.c.b16 %v4787, %v4786
        %v4806 = vpack.c.b16 %v4789, %v4788
        %v4807 = vpack.c.b16 %v4791, %v4790
        %v4840 = vunpack.c.l.b16 %v4744
        %v4841 = vunpack.c.l.b16 %v4745
        %v4842 = vunpack.c.l.b16 %v4746
        %v4843 = vunpack.c.l.b16 %v4747
        %v4844 = vunpack.c.l.b16 %v4748
        %v4845 = vunpack.c.l.b16 %v4749
        %v4846 = vunpack.c.l.b16 %v4750
        %v4847 = vunpack.c.l.b16 %v4751
        %v4848 = vunpack.c.l.b16 %v4752
        %v4849 = vunpack.c.l.b16 %v4753
        %v4850 = vunpack.c.l.b16 %v4754
        %v4851 = vunpack.c.l.b16 %v4755
        %v4852 = vunpack.c.l.b16 %v4756
        %v4853 = vunpack.c.l.b16 %v4757
        %v4854 = vunpack.c.l.b16 %v4758
        %v4855 = vunpack.c.l.b16 %v4759
        %v4856 = vpack.c.b16 %v4841, %v4840
        %v4857 = vpack.c.b16 %v4843, %v4842
        %v4858 = vpack.c.b16 %v4845, %v4844
        %v4859 = vpack.c.b16 %v4847, %v4846
        %v4860 = vpack.c.b16 %v4849, %v4848
        %v4861 = vpack.c.b16 %v4851, %v4850
        %v4862 = vpack.c.b16 %v4853, %v4852
        %v4863 = vpack.c.b16 %v4855, %v4854
        %4872 = vmatprep.subr.bf16.mxu0 0
        %4873 = vmatpush1.bf16.msra.mxu0 %v4856
        %4874 = vmatprep.subr.bf16.mxu0 0
        %4875 = vmatpush1.bf16.msra.mxu0 %v4857
        %4876 = vmatprep.subr.bf16.mxu0 0
        %4877 = vmatpush1.bf16.msra.mxu0 %v4858
        %4878 = vmatprep.subr.bf16.mxu0 0
        %4879 = vmatpush1.bf16.msra.mxu0 %v4859
        %4880 = vmatprep.subr.bf16.mxu0 0
        %4881 = vmatpush1.bf16.msra.mxu0 %v4860
        %4882 = vmatprep.subr.bf16.mxu0 0
        %4883 = vmatpush1.bf16.msra.mxu0 %v4861
        %4884 = vmatprep.subr.bf16.mxu0 0
        %4885 = vmatpush1.bf16.msra.mxu0 %v4862
        %4886 = vmatprep.subr.bf16.mxu0 0
        %4887 = vmatpush1.bf16.msra.mxu0 %v4863
        %4888 = vmatprep.subr.bf16.mxu0 0
        %4889 = vmatpush1.bf16.msra.mxu0 0
        %4890 = vmatprep.subr.bf16.mxu0 0
        %4891 = vmatpush1.bf16.msra.mxu0 0
        %4892 = vmatprep.subr.bf16.mxu0 0
        %4893 = vmatpush1.bf16.msra.mxu0 0
        %4894 = vmatprep.subr.bf16.mxu0 0
        %4895 = vmatpush1.bf16.msra.mxu0 0
        %4896 = vmatprep.subr.bf16.mxu0 0
        %4897 = vmatpush1.bf16.msra.mxu0 0
        %4898 = vmatprep.subr.bf16.mxu0 0
        %4899 = vmatpush1.bf16.msra.mxu0 0
        %4900 = vmatprep.subr.bf16.mxu0 0
        %4901 = vmatpush1.bf16.msra.mxu0 0
        %4902 = vmatprep.subr.bf16.mxu0 0
        %4903 = vmatpush1.bf16.msra.mxu0 0
        %4904 = vmatprep.mubr.bf16.mxu0 0
        %4905 = vmatmul.mubr.bf16.gmra.mrb[0].mxu0 %v4792
        %v4906 = vpop.f32.mrb[0].mxu0
        %v4907 = vadd.f32 0.0, %v4906
        %v4908 = vpop.f32.mrb[0].mxu0
        %v4909 = vpop.f32.mrb[0].mxu0
        %v4910 = vadd.f32 0.0, %v4909
        %v4911 = vpop.f32.mrb[0].mxu0
        %4912 = vmatprep.mubr.bf16.mxu0 0
        %4913 = vmatmul.mubr.bf16.gmra.mrb[0].mxu0 %v4793
        %v4914 = vpop.f32.mrb[0].mxu0
        %v4915 = vadd.f32 0.0, %v4914
        %v4916 = vpop.f32.mrb[0].mxu0
        %v4917 = vpop.f32.mrb[0].mxu0
        %v4918 = vadd.f32 0.0, %v4917
        %v4919 = vpop.f32.mrb[0].mxu0
        %4920 = vmatprep.mubr.bf16.mxu0 0
        %4921 = vmatmul.mubr.bf16.gmra.mrb[0].mxu0 %v4794
        %v4922 = vpop.f32.mrb[0].mxu0
        %v4923 = vadd.f32 0.0, %v4922
        %v4924 = vpop.f32.mrb[0].mxu0
        %v4925 = vpop.f32.mrb[0].mxu0
        %v4926 = vadd.f32 0.0, %v4925
        %v4927 = vpop.f32.mrb[0].mxu0
        %4928 = vmatprep.mubr.bf16.mxu0 0
        %4929 = vmatmul.mubr.bf16.gmra.mrb[0].mxu0 %v4795
        %v4930 = vpop.f32.mrb[0].mxu0
        %v4931 = vadd.f32 0.0, %v4930
        %v4932 = vpop.f32.mrb[0].mxu0
        %v4933 = vpop.f32.mrb[0].mxu0
        %v4934 = vadd.f32 0.0, %v4933
        %v4935 = vpop.f32.mrb[0].mxu0
        %4936 = vmatprep.mubr.bf16.mxu0 0
        %4937 = vmatmul.mubr.bf16.gmra.mrb[0].mxu0 %v4796
        %v4938 = vpop.f32.mrb[0].mxu0
        %v4939 = vadd.f32 0.0, %v4938
        %v4940 = vpop.f32.mrb[0].mxu0
        %v4941 = vpop.f32.mrb[0].mxu0
        %v4942 = vadd.f32 0.0, %v4941
        %v4943 = vpop.f32.mrb[0].mxu0
        %4944 = vmatprep.mubr.bf16.mxu0 0
        %4945 = vmatmul.mubr.bf16.gmra.mrb[0].mxu0 %v4797
        %v4946 = vpop.f32.mrb[0].mxu0
        %v4947 = vadd.f32 0.0, %v4946
        %v4948 = vpop.f32.mrb[0].mxu0
        %v4949 = vpop.f32.mrb[0].mxu0
        %v4950 = vadd.f32 0.0, %v4949
        %v4951 = vpop.f32.mrb[0].mxu0
        %4952 = vmatprep.mubr.bf16.mxu0 0
        %4953 = vmatmul.mubr.bf16.gmra.mrb[0].mxu0 %v4798
        %v4954 = vpop.f32.mrb[0].mxu0
        %v4955 = vadd.f32 0.0, %v4954
        %v4956 = vpop.f32.mrb[0].mxu0
        %v4957 = vpop.f32.mrb[0].mxu0
        %v4958 = vadd.f32 0.0, %v4957
        %v4959 = vpop.f32.mrb[0].mxu0
        %4960 = vmatprep.mubr.bf16.mxu0 0
        %4961 = vmatmul.mubr.bf16.gmra.mrb[0].mxu0 %v4799
        %v4962 = vpop.f32.mrb[0].mxu0
        %v4963 = vadd.f32 0.0, %v4962
        %v4964 = vpop.f32.mrb[0].mxu0
        %v4965 = vpop.f32.mrb[0].mxu0
        %v4966 = vadd.f32 0.0, %v4965
        %v4967 = vpop.f32.mrb[0].mxu0
        %4968 = vmatprep.mubr.bf16.mxu0 0
        %4969 = vmatmul.mubr.bf16.gmra.mrb[0].mxu0 %v4800
        %v4970 = vpop.f32.mrb[0].mxu0
        %v4971 = vadd.f32 0.0, %v4970
        %v4972 = vpop.f32.mrb[0].mxu0
        %v4973 = vpop.f32.mrb[0].mxu0
        %v4974 = vadd.f32 0.0, %v4973
        %v4975 = vpop.f32.mrb[0].mxu0
        %4976 = vmatprep.mubr.bf16.mxu0 0
        %4977 = vmatmul.mubr.bf16.gmra.mrb[0].mxu0 %v4801
        %v4978 = vpop.f32.mrb[0].mxu0
        %v4979 = vadd.f32 0.0, %v4978
        %v4980 = vpop.f32.mrb[0].mxu0
        %v4981 = vpop.f32.mrb[0].mxu0
        %v4982 = vadd.f32 0.0, %v4981
        %v4983 = vpop.f32.mrb[0].mxu0
        %4984 = vmatprep.mubr.bf16.mxu0 0
        %4985 = vmatmul.mubr.bf16.gmra.mrb[0].mxu0 %v4802
        %v4986 = vpop.f32.mrb[0].mxu0
        %v4987 = vadd.f32 0.0, %v4986
        %v4988 = vpop.f32.mrb[0].mxu0
        %v4989 = vpop.f32.mrb[0].mxu0
        %v4990 = vadd.f32 0.0, %v4989
        %v4991 = vpop.f32.mrb[0].mxu0
        %4992 = vmatprep.mubr.bf16.mxu0 0
        %4993 = vmatmul.mubr.bf16.gmra.mrb[0].mxu0 %v4803
        %v4994 = vpop.f32.mrb[0].mxu0
        %v4995 = vadd.f32 0.0, %v4994
        %v4996 = vpop.f32.mrb[0].mxu0
        %v4997 = vpop.f32.mrb[0].mxu0
        %v4998 = vadd.f32 0.0, %v4997
        %v4999 = vpop.f32.mrb[0].mxu0
        %5000 = vmatprep.mubr.bf16.mxu0 0
        %5001 = vmatmul.mubr.bf16.gmra.mrb[0].mxu0 %v4804
        %v5002 = vpop.f32.mrb[0].mxu0
        %v5003 = vadd.f32 0.0, %v5002
        %v5004 = vpop.f32.mrb[0].mxu0
        %v5005 = vpop.f32.mrb[0].mxu0
        %v5006 = vadd.f32 0.0, %v5005
        %v5007 = vpop.f32.mrb[0].mxu0
        %5008 = vmatprep.mubr.bf16.mxu0 0
        %5009 = vmatmul.mubr.bf16.gmra.mrb[0].mxu0 %v4805
        %v5010 = vpop.f32.mrb[0].mxu0
        %v5011 = vadd.f32 0.0, %v5010
        %v5012 = vpop.f32.mrb[0].mxu0
        %v5013 = vpop.f32.mrb[0].mxu0
        %v5014 = vadd.f32 0.0, %v5013
        %v5015 = vpop.f32.mrb[0].mxu0
        %5016 = vmatprep.mubr.bf16.mxu0 0
        %5017 = vmatmul.mubr.bf16.gmra.mrb[0].mxu0 %v4806
        %v5018 = vpop.f32.mrb[0].mxu0
        %v5019 = vadd.f32 0.0, %v5018
        %v5020 = vpop.f32.mrb[0].mxu0
        %v5021 = vpop.f32.mrb[0].mxu0
        %v5022 = vadd.f32 0.0, %v5021
        %v5023 = vpop.f32.mrb[0].mxu0
        %5024 = vmatprep.mubr.bf16.mxu0 0
        %5025 = vmatmul.mubr.bf16.gmra.mrb[0].mxu0 %v4807
        %v5026 = vpop.f32.mrb[0].mxu0
        %v5027 = vadd.f32 0.0, %v5026
        %v5028 = vpop.f32.mrb[0].mxu0
        %v5029 = vpop.f32.mrb[0].mxu0
        %v5030 = vadd.f32 0.0, %v5029
        %v5031 = vpop.f32.mrb[0].mxu0
        %5032 = vdwg.mxu0
        %v5033 = vadd.f32 %v4535, %v4907
        %v5034 = vadd.f32 %v4536, %v4910
        %v5035 = vadd.f32 %v4537, %v4915
        %v5036 = vadd.f32 %v4538, %v4918
        %v5037 = vadd.f32 %v4539, %v4923
        %v5038 = vadd.f32 %v4540, %v4926
        %v5039 = vadd.f32 %v4541, %v4931
        %v5040 = vadd.f32 %v4542, %v4934
        %v5041 = vadd.f32 %v4543, %v4939
        %v5042 = vadd.f32 %v4544, %v4942
        %v5043 = vadd.f32 %v4545, %v4947
        %v5044 = vadd.f32 %v4546, %v4950
        %v5045 = vadd.f32 %v4547, %v4955
        %v5046 = vadd.f32 %v4548, %v4958
        %v5047 = vadd.f32 %v4549, %v4963
        %v5048 = vadd.f32 %v4550, %v4966
        %v5049 = vadd.f32 %v4551, %v4971
        %v5050 = vadd.f32 %v4552, %v4974
        %v5051 = vadd.f32 %v4553, %v4979
        %v5052 = vadd.f32 %v4554, %v4982
        %v5053 = vadd.f32 %v4555, %v4987
        %v5054 = vadd.f32 %v4556, %v4990
        %v5055 = vadd.f32 %v4557, %v4995
        %v5056 = vadd.f32 %v4558, %v4998
        %v5057 = vadd.f32 %v4559, %v5003
        %v5058 = vadd.f32 %v4560, %v5006
        %v5059 = vadd.f32 %v4561, %v5011
        %v5060 = vadd.f32 %v4562, %v5014
        %v5061 = vadd.f32 %v4563, %v5019
        %v5062 = vadd.f32 %v4564, %v5022
        %v5063 = vadd.f32 %v4565, %v5027
        %v5064 = vadd.f32 %v4566, %v5030
        %v5065 = vld [vmem:[%s251] sm:$0x1]
        %v5067 = vlaneseq
        %v5068 = vshrl.u32 %v5067, 7
        %v5069 = vsub.s32 0, %v5068
        %v5070 = vrot.slane %v5065, %v5069
        %v5072 = vmul.f32 %v5033, %v5070
        %v5073 = vmul.f32 %v5034, %v5070
        %v5074 = vmul.f32 %v5035, %v5070
        %v5075 = vmul.f32 %v5036, %v5070
        %v5076 = vmul.f32 %v5037, %v5070
        %v5077 = vmul.f32 %v5038, %v5070
        %v5078 = vmul.f32 %v5039, %v5070
        %v5079 = vmul.f32 %v5040, %v5070
        %v5080 = vmul.f32 %v5041, %v5070
        %v5081 = vmul.f32 %v5042, %v5070
        %v5082 = vmul.f32 %v5043, %v5070
        %v5083 = vmul.f32 %v5044, %v5070
        %v5084 = vmul.f32 %v5045, %v5070
        %v5085 = vmul.f32 %v5046, %v5070
        %v5086 = vmul.f32 %v5047, %v5070
        %v5087 = vmul.f32 %v5048, %v5070
        %v5088 = vmul.f32 %v5049, %v5070
        %v5089 = vmul.f32 %v5050, %v5070
        %v5090 = vmul.f32 %v5051, %v5070
        %v5091 = vmul.f32 %v5052, %v5070
        %v5092 = vmul.f32 %v5053, %v5070
        %v5093 = vmul.f32 %v5054, %v5070
        %v5094 = vmul.f32 %v5055, %v5070
        %v5095 = vmul.f32 %v5056, %v5070
        %v5096 = vmul.f32 %v5057, %v5070
        %v5097 = vmul.f32 %v5058, %v5070
        %v5098 = vmul.f32 %v5059, %v5070
        %v5099 = vmul.f32 %v5060, %v5070
        %v5100 = vmul.f32 %v5061, %v5070
        %v5101 = vmul.f32 %v5062, %v5070
        %v5102 = vmul.f32 %v5063, %v5070
        %v5103 = vmul.f32 %v5064, %v5070
        %v5104 = vld [vmem:[%s254] sm:$0x1]
        %v5106 = vlaneseq
        %v5107 = vshrl.u32 %v5106, 7
        %v5108 = vsub.s32 0, %v5107
        %v5109 = vrot.slane %v5104, %v5108
        %v5111 = vadd.f32 %v5072, %v5109
        %v5112 = vadd.f32 %v5073, %v5109
        %v5113 = vadd.f32 %v5074, %v5109
        %v5114 = vadd.f32 %v5075, %v5109
        %v5115 = vadd.f32 %v5076, %v5109
        %v5116 = vadd.f32 %v5077, %v5109
        %v5117 = vadd.f32 %v5078, %v5109
        %v5118 = vadd.f32 %v5079, %v5109
        %v5119 = vadd.f32 %v5080, %v5109
        %v5120 = vadd.f32 %v5081, %v5109
        %v5121 = vadd.f32 %v5082, %v5109
        %v5122 = vadd.f32 %v5083, %v5109
        %v5123 = vadd.f32 %v5084, %v5109
        %v5124 = vadd.f32 %v5085, %v5109
        %v5125 = vadd.f32 %v5086, %v5109
        %v5126 = vadd.f32 %v5087, %v5109
        %v5127 = vadd.f32 %v5088, %v5109
        %v5128 = vadd.f32 %v5089, %v5109
        %v5129 = vadd.f32 %v5090, %v5109
        %v5130 = vadd.f32 %v5091, %v5109
        %v5131 = vadd.f32 %v5092, %v5109
        %v5132 = vadd.f32 %v5093, %v5109
        %v5133 = vadd.f32 %v5094, %v5109
        %v5134 = vadd.f32 %v5095, %v5109
        %v5135 = vadd.f32 %v5096, %v5109
        %v5136 = vadd.f32 %v5097, %v5109
        %v5137 = vadd.f32 %v5098, %v5109
        %v5138 = vadd.f32 %v5099, %v5109
        %v5139 = vadd.f32 %v5100, %v5109
        %v5140 = vadd.f32 %v5101, %v5109
        %v5141 = vadd.f32 %v5102, %v5109
        %v5142 = vadd.f32 %v5103, %v5109
        %v5143 = vmax.f32 %v5111, 0.0
        %v5144 = vmax.f32 %v5112, 0.0
        %v5145 = vmax.f32 %v5113, 0.0
        %v5146 = vmax.f32 %v5114, 0.0
        %v5147 = vmax.f32 %v5115, 0.0
        %v5148 = vmax.f32 %v5116, 0.0
        %v5149 = vmax.f32 %v5117, 0.0
        %v5150 = vmax.f32 %v5118, 0.0
        %v5151 = vmax.f32 %v5119, 0.0
        %v5152 = vmax.f32 %v5120, 0.0
        %v5153 = vmax.f32 %v5121, 0.0
        %v5154 = vmax.f32 %v5122, 0.0
        %v5155 = vmax.f32 %v5123, 0.0
        %v5156 = vmax.f32 %v5124, 0.0
        %v5157 = vmax.f32 %v5125, 0.0
        %v5158 = vmax.f32 %v5126, 0.0
        %v5159 = vmax.f32 %v5127, 0.0
        %v5160 = vmax.f32 %v5128, 0.0
        %v5161 = vmax.f32 %v5129, 0.0
        %v5162 = vmax.f32 %v5130, 0.0
        %v5163 = vmax.f32 %v5131, 0.0
        %v5164 = vmax.f32 %v5132, 0.0
        %v5165 = vmax.f32 %v5133, 0.0
        %v5166 = vmax.f32 %v5134, 0.0
        %v5167 = vmax.f32 %v5135, 0.0
        %v5168 = vmax.f32 %v5136, 0.0
        %v5169 = vmax.f32 %v5137, 0.0
        %v5170 = vmax.f32 %v5138, 0.0
        %v5171 = vmax.f32 %v5139, 0.0
        %v5172 = vmax.f32 %v5140, 0.0
        %v5173 = vmax.f32 %v5141, 0.0
        %v5174 = vmax.f32 %v5142, 0.0
        %5175 = vst [vmem:[%s239] sm:$0xff] %v5143
        %5176 = vst [vmem:[%s239 + $0x8] sm:$0xff] %v5144
        %5177 = vst [vmem:[%s239 + $0x10] sm:$0xff] %v5145
        %5178 = vst [vmem:[%s239 + $0x18] sm:$0xff] %v5146
        %5179 = vst [vmem:[%s239 + $0x20] sm:$0xff] %v5147
        %5180 = vst [vmem:[%s239 + $0x28] sm:$0xff] %v5148
        %5181 = vst [vmem:[%s239 + $0x30] sm:$0xff] %v5149
        %5182 = vst [vmem:[%s239 + $0x38] sm:$0xff] %v5150
        %5183 = vst [vmem:[%s239 + $0x40] sm:$0xff] %v5151
        %5184 = vst [vmem:[%s239 + $0x48] sm:$0xff] %v5152
        %5185 = vst [vmem:[%s239 + $0x50] sm:$0xff] %v5153
        %5186 = vst [vmem:[%s239 + $0x58] sm:$0xff] %v5154
        %5187 = vst [vmem:[%s239 + $0x60] sm:$0xff] %v5155
        %5188 = vst [vmem:[%s239 + $0x68] sm:$0xff] %v5156
        %5189 = vst [vmem:[%s239 + $0x70] sm:$0xff] %v5157
        %5190 = vst [vmem:[%s239 + $0x78] sm:$0xff] %v5158
        %5191 = vst [vmem:[%s239 + $0x80] sm:$0xff] %v5159
        %5192 = vst [vmem:[%s239 + $0x88] sm:$0xff] %v5160
        %5193 = vst [vmem:[%s239 + $0x90] sm:$0xff] %v5161
        %5194 = vst [vmem:[%s239 + $0x98] sm:$0xff] %v5162
        %5195 = vst [vmem:[%s239 + $0xa0] sm:$0xff] %v5163
        %5196 = vst [vmem:[%s239 + $0xa8] sm:$0xff] %v5164
        %5197 = vst [vmem:[%s239 + $0xb0] sm:$0xff] %v5165
        %5198 = vst [vmem:[%s239 + $0xb8] sm:$0xff] %v5166
        %5199 = vst [vmem:[%s239 + $0xc0] sm:$0xff] %v5167
        %5200 = vst [vmem:[%s239 + $0xc8] sm:$0xff] %v5168
        %5201 = vst [vmem:[%s239 + $0xd0] sm:$0xff] %v5169
        %5202 = vst [vmem:[%s239 + $0xd8] sm:$0xff] %v5170
        %5203 = vst [vmem:[%s239 + $0xe0] sm:$0xff] %v5171
        %5204 = vst [vmem:[%s239 + $0xe8] sm:$0xff] %v5172
        %5205 = vst [vmem:[%s239 + $0xf0] sm:$0xff] %v5173
        %5206 = vst [vmem:[%s239 + $0xf8] sm:$0xff] %v5174
        %s5207 = sand.u32 %s144, 1
        %s5208 = scalar_lea.sflag [#allocation3], %s5207
        %s5209 = sand.u32 %s144, 1
        %s5210 = smul.addr %s5209, 256
        %s5211 = scalar_lea.vmem [#allocation2], %s5210
        // Predicated region
        $region37: #{tpu_custom_call.1} parent=35 // pred_check
          %p5212 = pneg %p154
        $region38: #{tpu_custom_call.1} parent=35 // pred_check_branch
          %5214 = sbr.rel (%p5212) target = $region40
        $region39: #{tpu_custom_call.1} parent=35 // pred_region
          %s5216 = ssub.s32 4096, 4096
          %5217 = vsyncadd %s5208, %s5216
          %s5218 = smul.addr %s22, 32
          %s5219 = sadd.s32 %s23, %s5218
          %s5220 = smul.addr %s5219, 128
          %s5221 = scalar_lea.hbm %s4, %s5220
          %s5222 = sshll.u32 %s5211, 4
          %s5223 = int_to_ptr.vmem [resolvable:$true] %s5222
          %5228 = dma.vmem_to_hbm [thread:$0]  %s5223, 4096, %s5221, %s5208, 128, 128, 8
        $region40: #{tpu_custom_call.1} parent=35 // pred_fallthru
          _
      $region36: #{tpu_custom_call.1} parent=5 // pred_fallthru
        _
      %p5229 = scmp.le.s32.totalorder 2, %s13
      // Predicated region
      $region41: #{tpu_custom_call.1} parent=5 // pred_check
        %p5230 = pneg %p5229
      $region42: #{tpu_custom_call.1} parent=5 // pred_check_branch
        %5232 = sbr.rel (%p5230) target = $region44
      $region43: #{tpu_custom_call.1} parent=5 // pred_region
        %s5233 = ssub.s32 %s13, 2
        // Predicated region
        $region45: #{tpu_custom_call.1} parent=43 // pred_check
          %p5234 = pneg %p160
        $region46: #{tpu_custom_call.1} parent=43 // pred_check_branch
          %5236 = sbr.rel (%p5234) target = $region48
        $region47: #{tpu_custom_call.1} parent=43 // pred_region
          %s5237 = sand.u32 %s145, 1
          %s5238 = scalar_lea.sflag [#allocation3], %s5237
          %s5239 = sand.u32 %s145, 1
          %s5240 = smul.addr %s5239, 256
          %s5241 = scalar_lea.vmem [#allocation2], %s5240
          %5242 = dma.done %s5238, 4096
        $region48: #{tpu_custom_call.1} parent=43 // pred_fallthru
          _
      $region44: #{tpu_custom_call.1} parent=5 // pred_fallthru
        _
    $region6: #{tpu_custom_call.1} parent=1 // loop_footer
      %s17 = sadd.s32 1, %s13
    $region7: #{tpu_custom_call.1} parent=1 // loop_footer_branch
      %12 = sbr.rel target = $region3
    $region8: #{tpu_custom_call.1} parent=1 // loop_exit
      _
    %5243 = vsyncpa [#allocation3], 1
    %s5244 = scalar_lea.sflag [#allocation3], 1
    %5245 = vsyncpa %s5244, 1

</llo_original>
